<compile_context>
chip_gen: v6e
topology: v6e:2x2x1
jax: 0.10.0
libtpu: 0.0.40
codegen_flags: <defaults>
</compile_context>

<pallas_src>
import jax
import jax.numpy as jnp
from jax.experimental import pallas as pl
from jax.experimental.pallas import tpu as pltpu

L = 22          # sequence length implied by nr_flat_features = 6 * 22
C1, C2 = 3, 6   # conv channel counts
K = 3           # conv kernel size (padding=1 -> 'same')
H = 100         # fc1 width


def net_kernel(x_ref, w1_ref, b1_ref, w2_ref, b2_ref,
               fw1_ref, fb1_ref, fw2_ref, fb2_ref,
               out_ref, h1p_ref, h2f_ref):
    tb = x_ref.shape[1]                       # lane (batch) tile

    xp = x_ref[...]                           # (L+2, tb) — pre-padded input
    w1v = w1_ref[...]                         # (K, C1, 1, 1)   (hoisted reads)
    w2v = w2_ref[...]                         # (K*C1, C2, 1, 1)

    # ---- conv1: Conv1d(1 -> 3, k=3, pad=1) + ReLU ---------------------------
    acc1 = jnp.zeros((C1, L, tb), jnp.float32)
    for k in range(K):
        acc1 = acc1 + w1v[k] * xp[k:k + L, :][None, :, :]
    h1 = jnp.maximum(acc1 + b1_ref[...], 0.0)            # (C1, L, tb)

    # ---- conv2: Conv1d(3 -> 6, k=3, pad=1) + ReLU ---------------------------
    # zero-pad h1 along L via a small scratch (only boundary rows are zeroed)
    h1p_ref[:, 0:1, :] = jnp.zeros((C1, 1, tb), jnp.float32)
    h1p_ref[:, L + 1:L + 2, :] = jnp.zeros((C1, 1, tb), jnp.float32)
    h1p_ref[:, 1:L + 1, :] = h1

    acc2 = jnp.zeros((C2, L, tb), jnp.float32)
    for k in range(K):
        for ic in range(C1):
            acc2 = acc2 + (w2v[k * C1 + ic]
                           * h1p_ref[ic:ic + 1, k:k + L, :])
    h2 = jnp.maximum(acc2 + b2_ref[...], 0.0)            # (C2, L, tb)

    # ---- flatten (channel-major, matches torch .view) to (C2*L, tb) ---------
    for c in range(C2):
        h2f_ref[c * L:(c + 1) * L, :] = h2[c]

    # ---- fc1: Linear(132 -> 100) + ReLU — one fused MXU matmul (K=132) ------
    h3 = jnp.dot(fw1_ref[...], h2f_ref[...],
                 preferred_element_type=jnp.float32)     # (H, tb)
    h3 = jnp.maximum(h3 + fb1_ref[...], 0.0)

    # ---- fc2: Linear(100 -> 1) + sigmoid — VPU mult + sublane reduce --------
    logits = jnp.sum(fw2_ref[...] * h3, axis=0, keepdims=True) + fb2_ref[...]
    out_ref[...] = jax.nn.sigmoid(logits)                # (1, tb) lane-dense


def net_forward(x, params, tb=512):
    """Pallas forward pass. x: (N, 1, 22) float32 -> (N, 1) float32."""
    w1, b1, w2, b2, fw1, fb1, fw2, fb2 = params
    n, cin, length = x.shape
    assert cin == 1 and length == L
    assert tb % 128 == 0 and tb >= 128

    # pad the batch up to a multiple of tb (handles any batch size)
    n_pad = ((n + tb - 1) // tb) * tb

    # --- layout plumbing only (no arithmetic) --------------------------------
    # batch-last input, pre-padded along L for the 'same' conv1:
    xT = jnp.pad(jnp.transpose(x[:, 0, :]), ((1, 1), (0, n_pad - n)))  # (L+2, n_pad)

    w1t = jnp.transpose(w1, (2, 0, 1))[..., None]                      # (K, C1, 1, 1)
    w2t = jnp.transpose(w2, (2, 1, 0)).reshape(K * C1, C2)[:, :, None, None]  # (K*C1, C2, 1, 1)
    b1r = b1.reshape(C1, 1, 1)
    b2r = b2.reshape(C2, 1, 1)
    fb1r = fb1.reshape(H, 1)
    fw2r = fw2.reshape(H, 1)
    fb2r = fb2.reshape(1, 1)

    def whole(a):  # whole-array block, same block every grid step (resident)
        nd = a.ndim
        return pl.BlockSpec(a.shape, lambda i, _nd=nd: (0,) * _nd)

    out = pl.pallas_call(
        net_kernel,
        out_shape=jax.ShapeDtypeStruct((1, n_pad), jnp.float32),
        grid=(n_pad // tb,),
        in_specs=[
            pl.BlockSpec((L + 2, tb), lambda i: (0, i)),   # x: batch-tiled, lane-dense
            whole(w1t), whole(b1r), whole(w2t), whole(b2r),
            whole(fw1), whole(fb1r), whole(fw2r), whole(fb2r),
        ],
        out_specs=pl.BlockSpec((1, tb), lambda i: (0, i)),  # lane-dense output slab
        scratch_shapes=[
            pltpu.VMEM((C1, L + 2, tb), jnp.float32),       # zero-padded conv2 input
            pltpu.VMEM((C2 * L, tb), jnp.float32),          # flattened fc1 operand
        ],
        compiler_params=pltpu.CompilerParams(
            dimension_semantics=("parallel",)),             # v7x: shard over both TCs
    )(xT, w1t, b1r, w2t, b2r, fw1, fb1r, fw2r, fb2r)

    return jnp.transpose(out[:, :n])   # (n, 1) — matches PyTorch output shape


def reference_forward(x, params):
    """Pure-JAX reference (no Pallas) for correctness checking."""
    w1, b1, w2, b2, fw1, fb1, fw2, fb2 = params
    dn = ('NCW', 'OIW', 'NCW')
    hp = jax.lax.Precision.HIGHEST
    o = jax.lax.conv_general_dilated(x, w1, (1,), [(1, 1)],
                                     dimension_numbers=dn, precision=hp)
    o = jnp.maximum(o + b1[None, :, None], 0.0)
    o = jax.lax.conv_general_dilated(o, w2, (1,), [(1, 1)],
                                     dimension_numbers=dn, precision=hp)
    o = jnp.maximum(o + b2[None, :, None], 0.0)
    o = o.reshape(o.shape[0], -1)                               # (n, 6*22)
    o = jnp.maximum(jnp.dot(o, fw1.T, precision=hp) + fb1, 0.0)
    return jax.nn.sigmoid(jnp.dot(o, fw2.T, precision=hp) + fb2)


if __name__ == "__main__":
    key = jax.random.PRNGKey(0)
    ks = jax.random.split(key, 9)

    def u(k, shape, fan_in):
        bound = 1.0 / (fan_in ** 0.5)
        return jax.random.uniform(k, shape, jnp.float32, -bound, bound)

    # Deterministic parameters with the shapes implied by Net.__init__
    params = (
        u(ks[0], (C1, 1, K), 1 * K),       # conv1.weight (3,1,3)
        u(ks[1], (C1,), 1 * K),            # conv1.bias   (3,)
        u(ks[2], (C2, C1, K), C1 * K),     # conv2.weight (6,3,3)
        u(ks[3], (C2,), C1 * K),           # conv2.bias   (6,)
        u(ks[4], (H, C2 * L), C2 * L),     # fc1.weight   (100,132)
        u(ks[5], (H,), C2 * L),            # fc1.bias     (100,)
        u(ks[6], (1, H), H),               # fc2.weight   (1,100)
        u(ks[7], (1,), H),                 # fc2.bias     (1,)
    )
    x = jax.random.normal(ks[8], (4, 1, L), jnp.float32)

    y = net_forward(x, params)             # batch is zero-padded up to tb inside
    y = jax.block_until_ready(y)

    y_ref = reference_forward(x, params)
    assert y.shape == (4, 1)
    assert jnp.allclose(y, y_ref, atol=5e-3, rtol=5e-3)
    print("KERNEL_OK")
</pallas_src>

<mosaic_0001>
module attributes {stable_mosaic.version = 11 : i64} {
  func.func @net_kernel(%arg0: i32, %arg1: memref<24x512xf32, #tpu.memory_space<vmem>>, %arg2: memref<3x3x1x1xf32, #tpu.memory_space<vmem>>, %arg3: memref<3x1x1xf32, #tpu.memory_space<vmem>>, %arg4: memref<9x6x1x1xf32, #tpu.memory_space<vmem>>, %arg5: memref<6x1x1xf32, #tpu.memory_space<vmem>>, %arg6: memref<100x132xf32, #tpu.memory_space<vmem>>, %arg7: memref<100x1xf32, #tpu.memory_space<vmem>>, %arg8: memref<100x1xf32, #tpu.memory_space<vmem>>, %arg9: memref<1x1xf32, #tpu.memory_space<vmem>>, %arg10: memref<1x512xf32, #tpu.memory_space<vmem>>, %arg11: memref<3x24x512xf32, #tpu.memory_space<vmem>>, %arg12: memref<132x512xf32, #tpu.memory_space<vmem>>) attributes {dimension_semantics = [#tpu.dimension_semantics<parallel>], iteration_bounds = array<i64: 1>, scalar_prefetch = 0 : i64, scratch_operands = 2 : i64, tpu.core_type = #tpu.core_type<tc>, window_params = [{transform_indices = @transform_0, window_bounds = array<i64: 24, 512>}, {pipeline_mode = #tpu.pipeline_mode<synchronous>, transform_indices = @transform_1, window_bounds = array<i64: 3, 3, 1, 1>}, {pipeline_mode = #tpu.pipeline_mode<synchronous>, transform_indices = @transform_2, window_bounds = array<i64: 3, 1, 1>}, {pipeline_mode = #tpu.pipeline_mode<synchronous>, transform_indices = @transform_3, window_bounds = array<i64: 9, 6, 1, 1>}, {pipeline_mode = #tpu.pipeline_mode<synchronous>, transform_indices = @transform_4, window_bounds = array<i64: 6, 1, 1>}, {pipeline_mode = #tpu.pipeline_mode<synchronous>, transform_indices = @transform_5, window_bounds = array<i64: 100, 132>}, {pipeline_mode = #tpu.pipeline_mode<synchronous>, transform_indices = @transform_6, window_bounds = array<i64: 100, 1>}, {pipeline_mode = #tpu.pipeline_mode<synchronous>, transform_indices = @transform_7, window_bounds = array<i64: 100, 1>}, {pipeline_mode = #tpu.pipeline_mode<synchronous>, transform_indices = @transform_8, window_bounds = array<i64: 1, 1>}, {transform_indices = @transform_9, window_bounds = array<i64: 1, 512>}]} {
    %c0 = arith.constant 0 : index
    %c0_0 = arith.constant 0 : index
    %0 = vector.load %arg1[%c0, %c0_0] : memref<24x512xf32, #tpu.memory_space<vmem>>, vector<24x512xf32>
    %c0_1 = arith.constant 0 : index
    %c0_2 = arith.constant 0 : index
    %c0_3 = arith.constant 0 : index
    %c0_4 = arith.constant 0 : index
    %1 = vector.load %arg2[%c0_1, %c0_2, %c0_3, %c0_4] : memref<3x3x1x1xf32, #tpu.memory_space<vmem>>, vector<3x3x1x1xf32>
    %c0_5 = arith.constant 0 : index
    %c0_6 = arith.constant 0 : index
    %c0_7 = arith.constant 0 : index
    %c0_8 = arith.constant 0 : index
    %2 = vector.load %arg4[%c0_5, %c0_6, %c0_7, %c0_8] : memref<9x6x1x1xf32, #tpu.memory_space<vmem>>, vector<9x6x1x1xf32>
    %cst = arith.constant 0.000000e+00 : f32
    %3 = vector.broadcast %cst : f32 to vector<3x22x512xf32>
    %4 = vector.extract_strided_slice %1 {offsets = [0, 0, 0, 0], sizes = [1, 3, 1, 1], strides = [1, 1, 1, 1]} : vector<3x3x1x1xf32> to vector<1x3x1x1xf32>
    %5 = vector.shape_cast %4 : vector<1x3x1x1xf32> to vector<3x1x1xf32>
    %6 = vector.extract_strided_slice %0 {offsets = [0, 0], sizes = [22, 512], strides = [1, 1]} : vector<24x512xf32> to vector<22x512xf32>
    %7 = vector.shape_cast %6 : vector<22x512xf32> to vector<1x22x512xf32>
    %8 = vector.broadcast %5 : vector<3x1x1xf32> to vector<3x22x512xf32>
    %9 = vector.broadcast %7 : vector<1x22x512xf32> to vector<3x22x512xf32>
    %10 = arith.mulf %8, %9 : vector<3x22x512xf32>
    %11 = arith.addf %3, %10 : vector<3x22x512xf32>
    %12 = vector.extract_strided_slice %1 {offsets = [1, 0, 0, 0], sizes = [1, 3, 1, 1], strides = [1, 1, 1, 1]} : vector<3x3x1x1xf32> to vector<1x3x1x1xf32>
    %13 = vector.shape_cast %12 : vector<1x3x1x1xf32> to vector<3x1x1xf32>
    %14 = vector.extract_strided_slice %0 {offsets = [1, 0], sizes = [22, 512], strides = [1, 1]} : vector<24x512xf32> to vector<22x512xf32>
    %15 = vector.shape_cast %14 : vector<22x512xf32> to vector<1x22x512xf32>
    %16 = vector.broadcast %13 : vector<3x1x1xf32> to vector<3x22x512xf32>
    %17 = vector.broadcast %15 : vector<1x22x512xf32> to vector<3x22x512xf32>
    %18 = arith.mulf %16, %17 : vector<3x22x512xf32>
    %19 = arith.addf %11, %18 : vector<3x22x512xf32>
    %20 = vector.extract_strided_slice %1 {offsets = [2, 0, 0, 0], sizes = [1, 3, 1, 1], strides = [1, 1, 1, 1]} : vector<3x3x1x1xf32> to vector<1x3x1x1xf32>
    %21 = vector.shape_cast %20 : vector<1x3x1x1xf32> to vector<3x1x1xf32>
    %22 = vector.extract_strided_slice %0 {offsets = [2, 0], sizes = [22, 512], strides = [1, 1]} : vector<24x512xf32> to vector<22x512xf32>
    %23 = vector.shape_cast %22 : vector<22x512xf32> to vector<1x22x512xf32>
    %24 = vector.broadcast %21 : vector<3x1x1xf32> to vector<3x22x512xf32>
    %25 = vector.broadcast %23 : vector<1x22x512xf32> to vector<3x22x512xf32>
    %26 = arith.mulf %24, %25 : vector<3x22x512xf32>
    %27 = arith.addf %19, %26 : vector<3x22x512xf32>
    %c0_9 = arith.constant 0 : index
    %c0_10 = arith.constant 0 : index
    %c0_11 = arith.constant 0 : index
    %28 = vector.load %arg3[%c0_9, %c0_10, %c0_11] : memref<3x1x1xf32, #tpu.memory_space<vmem>>, vector<3x1x1xf32>
    %29 = vector.broadcast %28 : vector<3x1x1xf32> to vector<3x22x512xf32>
    %30 = arith.addf %27, %29 : vector<3x22x512xf32>
    %cst_12 = arith.constant 0.000000e+00 : f32
    %31 = vector.broadcast %cst_12 : f32 to vector<3x22x512xf32>
    %32 = arith.maximumf %30, %31 : vector<3x22x512xf32>
    %cst_13 = arith.constant 0.000000e+00 : f32
    %33 = vector.broadcast %cst_13 : f32 to vector<3x1x512xf32>
    %c0_14 = arith.constant 0 : index
    %c0_15 = arith.constant 0 : index
    %c0_16 = arith.constant 0 : index
    %34 = vector.load %arg11[%c0_14, %c0_15, %c0_16] : memref<3x24x512xf32, #tpu.memory_space<vmem>>, vector<3x1x512xf32>
    tpu.vector_store %arg11[%c0_14, %c0_15, %c0_16], %33 {strides = array<i32>} : memref<3x24x512xf32, #tpu.memory_space<vmem>>, vector<3x1x512xf32>,
    %cst_17 = arith.constant 0.000000e+00 : f32
    %35 = vector.broadcast %cst_17 : f32 to vector<3x1x512xf32>
    %c0_18 = arith.constant 0 : index
    %c23 = arith.constant 23 : index
    %c0_19 = arith.constant 0 : index
    %36 = vector.load %arg11[%c0_18, %c23, %c0_19] : memref<3x24x512xf32, #tpu.memory_space<vmem>>, vector<3x1x512xf32>
    tpu.vector_store %arg11[%c0_18, %c23, %c0_19], %35 {strides = array<i32>} : memref<3x24x512xf32, #tpu.memory_space<vmem>>, vector<3x1x512xf32>,
    %c0_20 = arith.constant 0 : index
    %c1 = arith.constant 1 : index
    %c0_21 = arith.constant 0 : index
    %37 = vector.load %arg11[%c0_20, %c1, %c0_21] : memref<3x24x512xf32, #tpu.memory_space<vmem>>, vector<3x22x512xf32>
    tpu.vector_store %arg11[%c0_20, %c1, %c0_21], %32 {strides = array<i32>} : memref<3x24x512xf32, #tpu.memory_space<vmem>>, vector<3x22x512xf32>,
    %cst_22 = arith.constant 0.000000e+00 : f32
    %38 = vector.broadcast %cst_22 : f32 to vector<6x22x512xf32>
    %39 = vector.extract_strided_slice %2 {offsets = [0, 0, 0, 0], sizes = [1, 6, 1, 1], strides = [1, 1, 1, 1]} : vector<9x6x1x1xf32> to vector<1x6x1x1xf32>
    %40 = vector.shape_cast %39 : vector<1x6x1x1xf32> to vector<6x1x1xf32>
    %c0_23 = arith.constant 0 : index
    %c0_24 = arith.constant 0 : index
    %c0_25 = arith.constant 0 : index
    %41 = vector.load %arg11[%c0_23, %c0_24, %c0_25] : memref<3x24x512xf32, #tpu.memory_space<vmem>>, vector<1x22x512xf32>
    %42 = vector.broadcast %40 : vector<6x1x1xf32> to vector<6x22x512xf32>
    %43 = vector.broadcast %41 : vector<1x22x512xf32> to vector<6x22x512xf32>
    %44 = arith.mulf %42, %43 : vector<6x22x512xf32>
    %45 = arith.addf %38, %44 : vector<6x22x512xf32>
    %46 = vector.extract_strided_slice %2 {offsets = [1, 0, 0, 0], sizes = [1, 6, 1, 1], strides = [1, 1, 1, 1]} : vector<9x6x1x1xf32> to vector<1x6x1x1xf32>
    %47 = vector.shape_cast %46 : vector<1x6x1x1xf32> to vector<6x1x1xf32>
    %c1_26 = arith.constant 1 : index
    %c0_27 = arith.constant 0 : index
    %c0_28 = arith.constant 0 : index
    %48 = vector.load %arg11[%c1_26, %c0_27, %c0_28] : memref<3x24x512xf32, #tpu.memory_space<vmem>>, vector<1x22x512xf32>
    %49 = vector.broadcast %47 : vector<6x1x1xf32> to vector<6x22x512xf32>
    %50 = vector.broadcast %48 : vector<1x22x512xf32> to vector<6x22x512xf32>
    %51 = arith.mulf %49, %50 : vector<6x22x512xf32>
    %52 = arith.addf %45, %51 : vector<6x22x512xf32>
    %53 = vector.extract_strided_slice %2 {offsets = [2, 0, 0, 0], sizes = [1, 6, 1, 1], strides = [1, 1, 1, 1]} : vector<9x6x1x1xf32> to vector<1x6x1x1xf32>
    %54 = vector.shape_cast %53 : vector<1x6x1x1xf32> to vector<6x1x1xf32>
    %c2 = arith.constant 2 : index
    %c0_29 = arith.constant 0 : index
    %c0_30 = arith.constant 0 : index
    %55 = vector.load %arg11[%c2, %c0_29, %c0_30] : memref<3x24x512xf32, #tpu.memory_space<vmem>>, vector<1x22x512xf32>
    %56 = vector.broadcast %54 : vector<6x1x1xf32> to vector<6x22x512xf32>
    %57 = vector.broadcast %55 : vector<1x22x512xf32> to vector<6x22x512xf32>
    %58 = arith.mulf %56, %57 : vector<6x22x512xf32>
    %59 = arith.addf %52, %58 : vector<6x22x512xf32>
    %60 = vector.extract_strided_slice %2 {offsets = [3, 0, 0, 0], sizes = [1, 6, 1, 1], strides = [1, 1, 1, 1]} : vector<9x6x1x1xf32> to vector<1x6x1x1xf32>
    %61 = vector.shape_cast %60 : vector<1x6x1x1xf32> to vector<6x1x1xf32>
    %c0_31 = arith.constant 0 : index
    %c1_32 = arith.constant 1 : index
    %c0_33 = arith.constant 0 : index
    %62 = vector.load %arg11[%c0_31, %c1_32, %c0_33] : memref<3x24x512xf32, #tpu.memory_space<vmem>>, vector<1x22x512xf32>
    %63 = vector.broadcast %61 : vector<6x1x1xf32> to vector<6x22x512xf32>
    %64 = vector.broadcast %62 : vector<1x22x512xf32> to vector<6x22x512xf32>
    %65 = arith.mulf %63, %64 : vector<6x22x512xf32>
    %66 = arith.addf %59, %65 : vector<6x22x512xf32>
    %67 = vector.extract_strided_slice %2 {offsets = [4, 0, 0, 0], sizes = [1, 6, 1, 1], strides = [1, 1, 1, 1]} : vector<9x6x1x1xf32> to vector<1x6x1x1xf32>
    %68 = vector.shape_cast %67 : vector<1x6x1x1xf32> to vector<6x1x1xf32>
    %c1_34 = arith.constant 1 : index
    %c1_35 = arith.constant 1 : index
    %c0_36 = arith.constant 0 : index
    %69 = vector.load %arg11[%c1_34, %c1_35, %c0_36] : memref<3x24x512xf32, #tpu.memory_space<vmem>>, vector<1x22x512xf32>
    %70 = vector.broadcast %68 : vector<6x1x1xf32> to vector<6x22x512xf32>
    %71 = vector.broadcast %69 : vector<1x22x512xf32> to vector<6x22x512xf32>
    %72 = arith.mulf %70, %71 : vector<6x22x512xf32>
    %73 = arith.addf %66, %72 : vector<6x22x512xf32>
    %74 = vector.extract_strided_slice %2 {offsets = [5, 0, 0, 0], sizes = [1, 6, 1, 1], strides = [1, 1, 1, 1]} : vector<9x6x1x1xf32> to vector<1x6x1x1xf32>
    %75 = vector.shape_cast %74 : vector<1x6x1x1xf32> to vector<6x1x1xf32>
    %c2_37 = arith.constant 2 : index
    %c1_38 = arith.constant 1 : index
    %c0_39 = arith.constant 0 : index
    %76 = vector.load %arg11[%c2_37, %c1_38, %c0_39] : memref<3x24x512xf32, #tpu.memory_space<vmem>>, vector<1x22x512xf32>
    %77 = vector.broadcast %75 : vector<6x1x1xf32> to vector<6x22x512xf32>
    %78 = vector.broadcast %76 : vector<1x22x512xf32> to vector<6x22x512xf32>
    %79 = arith.mulf %77, %78 : vector<6x22x512xf32>
    %80 = arith.addf %73, %79 : vector<6x22x512xf32>
    %81 = vector.extract_strided_slice %2 {offsets = [6, 0, 0, 0], sizes = [1, 6, 1, 1], strides = [1, 1, 1, 1]} : vector<9x6x1x1xf32> to vector<1x6x1x1xf32>
    %82 = vector.shape_cast %81 : vector<1x6x1x1xf32> to vector<6x1x1xf32>
    %c0_40 = arith.constant 0 : index
    %c2_41 = arith.constant 2 : index
    %c0_42 = arith.constant 0 : index
    %83 = vector.load %arg11[%c0_40, %c2_41, %c0_42] : memref<3x24x512xf32, #tpu.memory_space<vmem>>, vector<1x22x512xf32>
    %84 = vector.broadcast %82 : vector<6x1x1xf32> to vector<6x22x512xf32>
    %85 = vector.broadcast %83 : vector<1x22x512xf32> to vector<6x22x512xf32>
    %86 = arith.mulf %84, %85 : vector<6x22x512xf32>
    %87 = arith.addf %80, %86 : vector<6x22x512xf32>
    %88 = vector.extract_strided_slice %2 {offsets = [7, 0, 0, 0], sizes = [1, 6, 1, 1], strides = [1, 1, 1, 1]} : vector<9x6x1x1xf32> to vector<1x6x1x1xf32>
    %89 = vector.shape_cast %88 : vector<1x6x1x1xf32> to vector<6x1x1xf32>
    %c1_43 = arith.constant 1 : index
    %c2_44 = arith.constant 2 : index
    %c0_45 = arith.constant 0 : index
    %90 = vector.load %arg11[%c1_43, %c2_44, %c0_45] : memref<3x24x512xf32, #tpu.memory_space<vmem>>, vector<1x22x512xf32>
    %91 = vector.broadcast %89 : vector<6x1x1xf32> to vector<6x22x512xf32>
    %92 = vector.broadcast %90 : vector<1x22x512xf32> to vector<6x22x512xf32>
    %93 = arith.mulf %91, %92 : vector<6x22x512xf32>
    %94 = arith.addf %87, %93 : vector<6x22x512xf32>
    %95 = vector.extract_strided_slice %2 {offsets = [8, 0, 0, 0], sizes = [1, 6, 1, 1], strides = [1, 1, 1, 1]} : vector<9x6x1x1xf32> to vector<1x6x1x1xf32>
    %96 = vector.shape_cast %95 : vector<1x6x1x1xf32> to vector<6x1x1xf32>
    %c2_46 = arith.constant 2 : index
    %c2_47 = arith.constant 2 : index
    %c0_48 = arith.constant 0 : index
    %97 = vector.load %arg11[%c2_46, %c2_47, %c0_48] : memref<3x24x512xf32, #tpu.memory_space<vmem>>, vector<1x22x512xf32>
    %98 = vector.broadcast %96 : vector<6x1x1xf32> to vector<6x22x512xf32>
    %99 = vector.broadcast %97 : vector<1x22x512xf32> to vector<6x22x512xf32>
    %100 = arith.mulf %98, %99 : vector<6x22x512xf32>
    %101 = arith.addf %94, %100 : vector<6x22x512xf32>
    %c0_49 = arith.constant 0 : index
    %c0_50 = arith.constant 0 : index
    %c0_51 = arith.constant 0 : index
    %102 = vector.load %arg5[%c0_49, %c0_50, %c0_51] : memref<6x1x1xf32, #tpu.memory_space<vmem>>, vector<6x1x1xf32>
    %103 = vector.broadcast %102 : vector<6x1x1xf32> to vector<6x22x512xf32>
    %104 = arith.addf %101, %103 : vector<6x22x512xf32>
    %cst_52 = arith.constant 0.000000e+00 : f32
    %105 = vector.broadcast %cst_52 : f32 to vector<6x22x512xf32>
    %106 = arith.maximumf %104, %105 : vector<6x22x512xf32>
    %107 = vector.extract_strided_slice %106 {offsets = [0, 0, 0], sizes = [1, 22, 512], strides = [1, 1, 1]} : vector<6x22x512xf32> to vector<1x22x512xf32>
    %108 = vector.shape_cast %107 : vector<1x22x512xf32> to vector<22x512xf32>
    %c0_53 = arith.constant 0 : index
    %c0_54 = arith.constant 0 : index
    %109 = vector.load %arg12[%c0_53, %c0_54] : memref<132x512xf32, #tpu.memory_space<vmem>>, vector<22x512xf32>
    tpu.vector_store %arg12[%c0_53, %c0_54], %108 {strides = array<i32>} : memref<132x512xf32, #tpu.memory_space<vmem>>, vector<22x512xf32>,
    %110 = vector.extract_strided_slice %106 {offsets = [1, 0, 0], sizes = [1, 22, 512], strides = [1, 1, 1]} : vector<6x22x512xf32> to vector<1x22x512xf32>
    %111 = vector.shape_cast %110 : vector<1x22x512xf32> to vector<22x512xf32>
    %c22 = arith.constant 22 : index
    %c0_55 = arith.constant 0 : index
    %112 = vector.load %arg12[%c22, %c0_55] : memref<132x512xf32, #tpu.memory_space<vmem>>, vector<22x512xf32>
    tpu.vector_store %arg12[%c22, %c0_55], %111 {strides = array<i32>} : memref<132x512xf32, #tpu.memory_space<vmem>>, vector<22x512xf32>,
    %113 = vector.extract_strided_slice %106 {offsets = [2, 0, 0], sizes = [1, 22, 512], strides = [1, 1, 1]} : vector<6x22x512xf32> to vector<1x22x512xf32>
    %114 = vector.shape_cast %113 : vector<1x22x512xf32> to vector<22x512xf32>
    %c44 = arith.constant 44 : index
    %c0_56 = arith.constant 0 : index
    %115 = vector.load %arg12[%c44, %c0_56] : memref<132x512xf32, #tpu.memory_space<vmem>>, vector<22x512xf32>
    tpu.vector_store %arg12[%c44, %c0_56], %114 {strides = array<i32>} : memref<132x512xf32, #tpu.memory_space<vmem>>, vector<22x512xf32>,
    %116 = vector.extract_strided_slice %106 {offsets = [3, 0, 0], sizes = [1, 22, 512], strides = [1, 1, 1]} : vector<6x22x512xf32> to vector<1x22x512xf32>
    %117 = vector.shape_cast %116 : vector<1x22x512xf32> to vector<22x512xf32>
    %c66 = arith.constant 66 : index
    %c0_57 = arith.constant 0 : index
    %118 = vector.load %arg12[%c66, %c0_57] : memref<132x512xf32, #tpu.memory_space<vmem>>, vector<22x512xf32>
    tpu.vector_store %arg12[%c66, %c0_57], %117 {strides = array<i32>} : memref<132x512xf32, #tpu.memory_space<vmem>>, vector<22x512xf32>,
    %119 = vector.extract_strided_slice %106 {offsets = [4, 0, 0], sizes = [1, 22, 512], strides = [1, 1, 1]} : vector<6x22x512xf32> to vector<1x22x512xf32>
    %120 = vector.shape_cast %119 : vector<1x22x512xf32> to vector<22x512xf32>
    %c88 = arith.constant 88 : index
    %c0_58 = arith.constant 0 : index
    %121 = vector.load %arg12[%c88, %c0_58] : memref<132x512xf32, #tpu.memory_space<vmem>>, vector<22x512xf32>
    tpu.vector_store %arg12[%c88, %c0_58], %120 {strides = array<i32>} : memref<132x512xf32, #tpu.memory_space<vmem>>, vector<22x512xf32>,
    %122 = vector.extract_strided_slice %106 {offsets = [5, 0, 0], sizes = [1, 22, 512], strides = [1, 1, 1]} : vector<6x22x512xf32> to vector<1x22x512xf32>
    %123 = vector.shape_cast %122 : vector<1x22x512xf32> to vector<22x512xf32>
    %c110 = arith.constant 110 : index
    %c0_59 = arith.constant 0 : index
    %124 = vector.load %arg12[%c110, %c0_59] : memref<132x512xf32, #tpu.memory_space<vmem>>, vector<22x512xf32>
    tpu.vector_store %arg12[%c110, %c0_59], %123 {strides = array<i32>} : memref<132x512xf32, #tpu.memory_space<vmem>>, vector<22x512xf32>,
    %c0_60 = arith.constant 0 : index
    %c0_61 = arith.constant 0 : index
    %125 = vector.load %arg6[%c0_60, %c0_61] : memref<100x132xf32, #tpu.memory_space<vmem>>, vector<100x132xf32>
    %c0_62 = arith.constant 0 : index
    %c0_63 = arith.constant 0 : index
    %126 = vector.load %arg12[%c0_62, %c0_63] : memref<132x512xf32, #tpu.memory_space<vmem>>, vector<132x512xf32>
    %cst_64 = arith.constant dense<0.000000e+00> : vector<100x512xf32>
    %127 = tpu.matmul %125, %126, %cst_64 {dimension_numbers = #tpu.dot_dimension_numbers<[1], [0], [0], [1], [0, 0, 1, 1], [], []>} : vector<100x132xf32>, vector<132x512xf32>, vector<100x512xf32> -> vector<100x512xf32>
    %c0_65 = arith.constant 0 : index
    %c0_66 = arith.constant 0 : index
    %128 = vector.load %arg7[%c0_65, %c0_66] : memref<100x1xf32, #tpu.memory_space<vmem>>, vector<100x1xf32>
    %129 = vector.broadcast %128 : vector<100x1xf32> to vector<100x512xf32>
    %130 = arith.addf %127, %129 : vector<100x512xf32>
    %cst_67 = arith.constant 0.000000e+00 : f32
    %131 = vector.broadcast %cst_67 : f32 to vector<100x512xf32>
    %132 = arith.maximumf %130, %131 : vector<100x512xf32>
    %c0_68 = arith.constant 0 : index
    %c0_69 = arith.constant 0 : index
    %133 = vector.load %arg8[%c0_68, %c0_69] : memref<100x1xf32, #tpu.memory_space<vmem>>, vector<100x1xf32>
    %134 = vector.broadcast %133 : vector<100x1xf32> to vector<100x512xf32>
    %135 = arith.mulf %134, %132 : vector<100x512xf32>
    %cst_70 = arith.constant dense<0.000000e+00> : vector<512xf32>
    %136 = vector.multi_reduction <add>, %135, %cst_70 [0] : vector<100x512xf32> to vector<512xf32>
    %137 = vector.shape_cast %136 : vector<512xf32> to vector<1x512xf32>
    %c0_71 = arith.constant 0 : index
    %c0_72 = arith.constant 0 : index
    %138 = vector.load %arg9[%c0_71, %c0_72] : memref<1x1xf32, #tpu.memory_space<vmem>>, vector<1x1xf32>
    %139 = vector.broadcast %138 : vector<1x1xf32> to vector<1x512xf32>
    %140 = arith.addf %137, %139 : vector<1x512xf32>
    %141 = arith.negf %140 : vector<1x512xf32>
    %142 = math.exp %141 : vector<1x512xf32>
    %cst_73 = arith.constant 1.000000e+00 : f32
    %143 = vector.broadcast %cst_73 : f32 to vector<1x512xf32>
    %144 = arith.addf %143, %142 : vector<1x512xf32>
    %145 = arith.divf %143, %144 : vector<1x512xf32>
    %c0_74 = arith.constant 0 : index
    %c0_75 = arith.constant 0 : index
    %146 = vector.load %arg10[%c0_74, %c0_75] : memref<1x512xf32, #tpu.memory_space<vmem>>, vector<1x512xf32>
    tpu.vector_store %arg10[%c0_74, %c0_75], %145 {strides = array<i32>} : memref<1x512xf32, #tpu.memory_space<vmem>>, vector<1x512xf32>,
    return
  }
  func.func @transform_0(%arg0: i32) -> (i32, i32) {
    %c0_i32 = arith.constant 0 : i32
    %c0_i32_0 = arith.constant 0 : i32
    return %c0_i32, %arg0 : i32, i32
  }
  func.func @transform_1(%arg0: i32) -> (i32, i32, i32, i32) {
    %c0_i32 = arith.constant 0 : i32
    %c0_i32_0 = arith.constant 0 : i32
    %c0_i32_1 = arith.constant 0 : i32
    %c0_i32_2 = arith.constant 0 : i32
    %c0_i32_3 = arith.constant 0 : i32
    return %c0_i32, %c0_i32_0, %c0_i32_1, %c0_i32_2 : i32, i32, i32, i32
  }
  func.func @transform_2(%arg0: i32) -> (i32, i32, i32) {
    %c0_i32 = arith.constant 0 : i32
    %c0_i32_0 = arith.constant 0 : i32
    %c0_i32_1 = arith.constant 0 : i32
    %c0_i32_2 = arith.constant 0 : i32
    return %c0_i32, %c0_i32_0, %c0_i32_1 : i32, i32, i32
  }
  func.func @transform_3(%arg0: i32) -> (i32, i32, i32, i32) {
    %c0_i32 = arith.constant 0 : i32
    %c0_i32_0 = arith.constant 0 : i32
    %c0_i32_1 = arith.constant 0 : i32
    %c0_i32_2 = arith.constant 0 : i32
    %c0_i32_3 = arith.constant 0 : i32
    return %c0_i32, %c0_i32_0, %c0_i32_1, %c0_i32_2 : i32, i32, i32, i32
  }
  func.func @transform_4(%arg0: i32) -> (i32, i32, i32) {
    %c0_i32 = arith.constant 0 : i32
    %c0_i32_0 = arith.constant 0 : i32
    %c0_i32_1 = arith.constant 0 : i32
    %c0_i32_2 = arith.constant 0 : i32
    return %c0_i32, %c0_i32_0, %c0_i32_1 : i32, i32, i32
  }
  func.func @transform_5(%arg0: i32) -> (i32, i32) {
    %c0_i32 = arith.constant 0 : i32
    %c0_i32_0 = arith.constant 0 : i32
    %c0_i32_1 = arith.constant 0 : i32
    return %c0_i32, %c0_i32_0 : i32, i32
  }
  func.func @transform_6(%arg0: i32) -> (i32, i32) {
    %c0_i32 = arith.constant 0 : i32
    %c0_i32_0 = arith.constant 0 : i32
    %c0_i32_1 = arith.constant 0 : i32
    return %c0_i32, %c0_i32_0 : i32, i32
  }
  func.func @transform_7(%arg0: i32) -> (i32, i32) {
    %c0_i32 = arith.constant 0 : i32
    %c0_i32_0 = arith.constant 0 : i32
    %c0_i32_1 = arith.constant 0 : i32
    return %c0_i32, %c0_i32_0 : i32, i32
  }
  func.func @transform_8(%arg0: i32) -> (i32, i32) {
    %c0_i32 = arith.constant 0 : i32
    %c0_i32_0 = arith.constant 0 : i32
    %c0_i32_1 = arith.constant 0 : i32
    return %c0_i32, %c0_i32_0 : i32, i32
  }
  func.func @transform_9(%arg0: i32) -> (i32, i32) {
    %c0_i32 = arith.constant 0 : i32
    %c0_i32_0 = arith.constant 0 : i32
    return %c0_i32, %arg0 : i32, i32
  }
}

</mosaic_0001>

<llo_original>
// kernel: tpu_custom_call.1
$region0: #{tpu_custom_call.1}
  #allocation0 [shape = 'u32[]', space=smem, size = 0x4, offset = 0x4, fixed_abs, tag = 'smem constant byte address 0x4 - core index']
  #allocation1 [shape = 'u32[144,128]{1,0:T(1,128)}', space=vmem, size = 0x12000, scoped, tag = 'internal scratch']
  #allocation2 [shape = 'f32[3,24,512]{2,1,0:T(8,128)}', space=vmem, size = 0x24000, scoped, tag = 'scratch operand']
  #allocation3 [shape = 'f32[132,512]{1,0:T(8,128)}', space=vmem, size = 0x44000, scoped, tag = 'scratch operand']
  #allocation4 [shape = 'f32[1,1]{1,0:T(1,128)S(1)}', space=vmem, size = 0x200, scoped, tag = 'scoped memory for tpu_custom_call.1']
  %s0 = inlined_call_operand.vmem [shape: f32[24,512], index: 0, kind: input, shape index: {}]
  %s1 = inlined_call_operand.vmem [shape: f32[3,3,1,1], index: 1, kind: input, shape index: {}]
  %s2 = inlined_call_operand.vmem [shape: f32[3,1,1], index: 2, kind: input, shape index: {}]
  %s3 = inlined_call_operand.vmem [shape: f32[9,6,1,1], index: 3, kind: input, shape index: {}]
  %s4 = inlined_call_operand.vmem [shape: f32[6,1,1], index: 4, kind: input, shape index: {}]
  %s5 = inlined_call_operand.vmem [shape: f32[100,132], index: 5, kind: input, shape index: {}]
  %s6 = inlined_call_operand.vmem [shape: f32[100,1], index: 6, kind: input, shape index: {}]
  %s7 = inlined_call_operand.vmem [shape: f32[100,1], index: 7, kind: input, shape index: {}]
  %s8 = inlined_call_operand.<no memory space> [shape: f32[1,1], index: 8, kind: input, shape index: {}]
  %s9 = inlined_call_operand.hbm [shape: f32[1,512], index: 9, kind: output, shape index: {}]
  %s10 = sld [smem:[#allocation0]]
  $region46: #{tpu_custom_call.1} parent=0
    _
  %s12 = ssub.s32 1, %s10
  %s13 = scalar_select 0, %s12, %s10
  %v14 = vstv %s8
  %15 = vst [vmem:[#allocation4] sm:$0x1] %v14
  $region1: #{tpu_custom_call.1} parent=0
    #allocation5 [shape = 'u8[2048]{0}', space=vmem, size = 0x800, scoped, tag = 'output window, operand 0, single buffered']
    #allocation6 [shape = 's32[1]{0}', space=sflag, size = 0x4, scoped, tag = 'scoped memory for tpu_custom_call.1']
    %16 = vsyncpa [#allocation6], 0
    // Predicated region
    $region2: #{tpu_custom_call.1} parent=1 // pred_check
      _
    $region3: #{tpu_custom_call.1} parent=1 // pred_check_branch
      %18 = sbr.rel (0) target = $region5
    $region4: #{tpu_custom_call.1} parent=1 // pred_region
      _
    $region5: #{tpu_custom_call.1} parent=1 // pred_fallthru
      _
    // Predicated region
    $region6: #{tpu_custom_call.1} parent=1 // pred_check
      _
    $region7: #{tpu_custom_call.1} parent=1 // pred_check_branch
      %20 = sbr.rel (0) target = $region9
    $region8: #{tpu_custom_call.1} parent=1 // pred_region
      _
    $region9: #{tpu_custom_call.1} parent=1 // pred_fallthru
      _
    // Predicated region
    $region10: #{tpu_custom_call.1} parent=1 // pred_check
      _
    $region11: #{tpu_custom_call.1} parent=1 // pred_check_branch
      %22 = sbr.rel (0) target = $region13
    $region12: #{tpu_custom_call.1} parent=1 // pred_region
      _
    $region13: #{tpu_custom_call.1} parent=1 // pred_fallthru
      _
    // Predicated region
    $region14: #{tpu_custom_call.1} parent=1 // pred_check
      _
    $region15: #{tpu_custom_call.1} parent=1 // pred_check_branch
      %24 = sbr.rel (0) target = $region17
    $region16: #{tpu_custom_call.1} parent=1 // pred_region
      _
    $region17: #{tpu_custom_call.1} parent=1 // pred_fallthru
      _
    // Predicated region
    $region18: #{tpu_custom_call.1} parent=1 // pred_check
      _
    $region19: #{tpu_custom_call.1} parent=1 // pred_check_branch
      %26 = sbr.rel (0) target = $region21
    $region20: #{tpu_custom_call.1} parent=1 // pred_region
      _
    $region21: #{tpu_custom_call.1} parent=1 // pred_fallthru
      _
    // Predicated region
    $region22: #{tpu_custom_call.1} parent=1 // pred_check
      _
    $region23: #{tpu_custom_call.1} parent=1 // pred_check_branch
      %28 = sbr.rel (0) target = $region25
    $region24: #{tpu_custom_call.1} parent=1 // pred_region
      _
    $region25: #{tpu_custom_call.1} parent=1 // pred_fallthru
      _
    // Predicated region
    $region26: #{tpu_custom_call.1} parent=1 // pred_check
      _
    $region27: #{tpu_custom_call.1} parent=1 // pred_check_branch
      %30 = sbr.rel (0) target = $region29
    $region28: #{tpu_custom_call.1} parent=1 // pred_region
      _
    $region29: #{tpu_custom_call.1} parent=1 // pred_fallthru
      _
    // Predicated region
    $region30: #{tpu_custom_call.1} parent=1 // pred_check
      _
    $region31: #{tpu_custom_call.1} parent=1 // pred_check_branch
      %32 = sbr.rel (0) target = $region33
    $region32: #{tpu_custom_call.1} parent=1 // pred_region
      _
    $region33: #{tpu_custom_call.1} parent=1 // pred_fallthru
      _
    // Predicated region
    $region34: #{tpu_custom_call.1} parent=1 // pred_check
      _
    $region35: #{tpu_custom_call.1} parent=1 // pred_check_branch
      %34 = sbr.rel (0) target = $region37
    $region36: #{tpu_custom_call.1} parent=1 // pred_region
      _
    $region37: #{tpu_custom_call.1} parent=1 // pred_fallthru
      _
    %v35 = vld [vmem:[%s0] sm:$0xff]
    %v36 = vld [vmem:[%s0 + $0x8] sm:$0xff]
    %v37 = vld [vmem:[%s0 + $0x10] sm:$0xff]
    %v38 = vld [vmem:[%s0 + $0x18] sm:$0xff]
    %v39 = vld [vmem:[%s0 + $0x20] sm:$0xff]
    %v40 = vld [vmem:[%s0 + $0x28] sm:$0xff]
    %v41 = vld [vmem:[%s0 + $0x30] sm:$0xff]
    %v42 = vld [vmem:[%s0 + $0x38] sm:$0xff]
    %v43 = vld [vmem:[%s0 + $0x40] sm:$0xff]
    %v44 = vld [vmem:[%s0 + $0x48] sm:$0xff]
    %v45 = vld [vmem:[%s0 + $0x50] sm:$0xff]
    %v46 = vld [vmem:[%s0 + $0x58] sm:$0xff]
    %v47 = vld [vmem:[%s1] sm:$0x1]
    %v48 = vld [vmem:[%s1 + $0x1] sm:$0x1]
    %v49 = vld [vmem:[%s1 + $0x2] sm:$0x1]
    %v50 = vld [vmem:[%s1 + $0x3] sm:$0x1]
    %v51 = vld [vmem:[%s1 + $0x4] sm:$0x1]
    %v52 = vld [vmem:[%s1 + $0x5] sm:$0x1]
    %v53 = vld [vmem:[%s1 + $0x6] sm:$0x1]
    %v54 = vld [vmem:[%s1 + $0x7] sm:$0x1]
    %v55 = vld [vmem:[%s1 + $0x8] sm:$0x1]
    %v56 = vld [vmem:[%s3] sm:$0x1]
    %v57 = vld [vmem:[%s3 + $0x1] sm:$0x1]
    %v58 = vld [vmem:[%s3 + $0x2] sm:$0x1]
    %v59 = vld [vmem:[%s3 + $0x3] sm:$0x1]
    %v60 = vld [vmem:[%s3 + $0x4] sm:$0x1]
    %v61 = vld [vmem:[%s3 + $0x5] sm:$0x1]
    %v62 = vld [vmem:[%s3 + $0x6] sm:$0x1]
    %v63 = vld [vmem:[%s3 + $0x7] sm:$0x1]
    %v64 = vld [vmem:[%s3 + $0x8] sm:$0x1]
    %v65 = vld [vmem:[%s3 + $0x9] sm:$0x1]
    %v66 = vld [vmem:[%s3 + $0xa] sm:$0x1]
    %v67 = vld [vmem:[%s3 + $0xb] sm:$0x1]
    %v68 = vld [vmem:[%s3 + $0xc] sm:$0x1]
    %v69 = vld [vmem:[%s3 + $0xd] sm:$0x1]
    %v70 = vld [vmem:[%s3 + $0xe] sm:$0x1]
    %v71 = vld [vmem:[%s3 + $0xf] sm:$0x1]
    %v72 = vld [vmem:[%s3 + $0x10] sm:$0x1]
    %v73 = vld [vmem:[%s3 + $0x11] sm:$0x1]
    %v74 = vld [vmem:[%s3 + $0x12] sm:$0x1]
    %v75 = vld [vmem:[%s3 + $0x13] sm:$0x1]
    %v76 = vld [vmem:[%s3 + $0x14] sm:$0x1]
    %v77 = vld [vmem:[%s3 + $0x15] sm:$0x1]
    %v78 = vld [vmem:[%s3 + $0x16] sm:$0x1]
    %v79 = vld [vmem:[%s3 + $0x17] sm:$0x1]
    %v80 = vld [vmem:[%s3 + $0x18] sm:$0x1]
    %v81 = vld [vmem:[%s3 + $0x19] sm:$0x1]
    %v82 = vld [vmem:[%s3 + $0x1a] sm:$0x1]
    %v83 = vld [vmem:[%s3 + $0x1b] sm:$0x1]
    %v84 = vld [vmem:[%s3 + $0x1c] sm:$0x1]
    %v85 = vld [vmem:[%s3 + $0x1d] sm:$0x1]
    %v86 = vld [vmem:[%s3 + $0x1e] sm:$0x1]
    %v87 = vld [vmem:[%s3 + $0x1f] sm:$0x1]
    %v88 = vld [vmem:[%s3 + $0x20] sm:$0x1]
    %v89 = vld [vmem:[%s3 + $0x21] sm:$0x1]
    %v90 = vld [vmem:[%s3 + $0x22] sm:$0x1]
    %v91 = vld [vmem:[%s3 + $0x23] sm:$0x1]
    %v92 = vld [vmem:[%s3 + $0x24] sm:$0x1]
    %v93 = vld [vmem:[%s3 + $0x25] sm:$0x1]
    %v94 = vld [vmem:[%s3 + $0x26] sm:$0x1]
    %v95 = vld [vmem:[%s3 + $0x27] sm:$0x1]
    %v96 = vld [vmem:[%s3 + $0x28] sm:$0x1]
    %v97 = vld [vmem:[%s3 + $0x29] sm:$0x1]
    %v98 = vld [vmem:[%s3 + $0x2a] sm:$0x1]
    %v99 = vld [vmem:[%s3 + $0x2b] sm:$0x1]
    %v100 = vld [vmem:[%s3 + $0x2c] sm:$0x1]
    %v101 = vld [vmem:[%s3 + $0x2d] sm:$0x1]
    %v102 = vld [vmem:[%s3 + $0x2e] sm:$0x1]
    %v103 = vld [vmem:[%s3 + $0x2f] sm:$0x1]
    %v104 = vld [vmem:[%s3 + $0x30] sm:$0x1]
    %v105 = vld [vmem:[%s3 + $0x31] sm:$0x1]
    %v106 = vld [vmem:[%s3 + $0x32] sm:$0x1]
    %v107 = vld [vmem:[%s3 + $0x33] sm:$0x1]
    %v108 = vld [vmem:[%s3 + $0x34] sm:$0x1]
    %v109 = vld [vmem:[%s3 + $0x35] sm:$0x1]
    %v113 = vlaneseq
    %v114 = vshrl.u32 %v113, 7
    %v115 = vsub.s32 0, %v114
    %v116 = vrot.slane %v47, %v115
    %v117 = vlaneseq
    %v118 = vshrl.u32 %v117, 7
    %v119 = vsub.s32 0, %v118
    %v120 = vrot.slane %v48, %v119
    %v121 = vlaneseq
    %v122 = vshrl.u32 %v121, 7
    %v123 = vsub.s32 0, %v122
    %v124 = vrot.slane %v49, %v123
    %125 = vset.pattern.permute.xlu0 0
    %126 = vperm.xlu0 %125, %v116
    %v127 = vpop.permute.xlu0 %126
    %129 = vset.pattern.permute.xlu0 0
    %130 = vperm.xlu0 %129, %v120
    %v131 = vpop.permute.xlu0 %130
    %133 = vset.pattern.permute.xlu0 0
    %134 = vperm.xlu0 %133, %v124
    %v135 = vpop.permute.xlu0 %134
    %v137 = vmul.f32 %v127, %v35
    %v138 = vmul.f32 %v127, %v36
    %v139 = vmul.f32 %v127, %v37
    %v140 = vmul.f32 %v127, %v38
    %v141 = vmul.f32 %v127, %v39
    %v142 = vmul.f32 %v127, %v40
    %v143 = vmul.f32 %v127, %v41
    %v144 = vmul.f32 %v127, %v42
    %v145 = vmul.f32 %v127, %v43
    %v146 = vmul.f32 %v127, %v44
    %v147 = vmul.f32 %v127, %v45
    %v148 = vmul.f32 %v127, %v46
    %v149 = vmul.f32 %v131, %v35
    %v150 = vmul.f32 %v131, %v36
    %v151 = vmul.f32 %v131, %v37
    %v152 = vmul.f32 %v131, %v38
    %v153 = vmul.f32 %v131, %v39
    %v154 = vmul.f32 %v131, %v40
    %v155 = vmul.f32 %v131, %v41
    %v156 = vmul.f32 %v131, %v42
    %v157 = vmul.f32 %v131, %v43
    %v158 = vmul.f32 %v131, %v44
    %v159 = vmul.f32 %v131, %v45
    %v160 = vmul.f32 %v131, %v46
    %v161 = vmul.f32 %v135, %v35
    %v162 = vmul.f32 %v135, %v36
    %v163 = vmul.f32 %v135, %v37
    %v164 = vmul.f32 %v135, %v38
    %v165 = vmul.f32 %v135, %v39
    %v166 = vmul.f32 %v135, %v40
    %v167 = vmul.f32 %v135, %v41
    %v168 = vmul.f32 %v135, %v42
    %v169 = vmul.f32 %v135, %v43
    %v170 = vmul.f32 %v135, %v44
    %v171 = vmul.f32 %v135, %v45
    %v172 = vmul.f32 %v135, %v46
    %v173 = vadd.f32 %v137, 0.0
    %v174 = vadd.f32 %v138, 0.0
    %v175 = vadd.f32 %v139, 0.0
    %v176 = vadd.f32 %v140, 0.0
    %v177 = vadd.f32 %v141, 0.0
    %v178 = vadd.f32 %v142, 0.0
    %v179 = vadd.f32 %v143, 0.0
    %v180 = vadd.f32 %v144, 0.0
    %v181 = vadd.f32 %v145, 0.0
    %v182 = vadd.f32 %v146, 0.0
    %v183 = vadd.f32 %v147, 0.0
    %v184 = vadd.f32 %v148, 0.0
    %v185 = vadd.f32 %v149, 0.0
    %v186 = vadd.f32 %v150, 0.0
    %v187 = vadd.f32 %v151, 0.0
    %v188 = vadd.f32 %v152, 0.0
    %v189 = vadd.f32 %v153, 0.0
    %v190 = vadd.f32 %v154, 0.0
    %v191 = vadd.f32 %v155, 0.0
    %v192 = vadd.f32 %v156, 0.0
    %v193 = vadd.f32 %v157, 0.0
    %v194 = vadd.f32 %v158, 0.0
    %v195 = vadd.f32 %v159, 0.0
    %v196 = vadd.f32 %v160, 0.0
    %v197 = vadd.f32 %v161, 0.0
    %v198 = vadd.f32 %v162, 0.0
    %v199 = vadd.f32 %v163, 0.0
    %v200 = vadd.f32 %v164, 0.0
    %v201 = vadd.f32 %v165, 0.0
    %v202 = vadd.f32 %v166, 0.0
    %v203 = vadd.f32 %v167, 0.0
    %v204 = vadd.f32 %v168, 0.0
    %v205 = vadd.f32 %v169, 0.0
    %v206 = vadd.f32 %v170, 0.0
    %v207 = vadd.f32 %v171, 0.0
    %v208 = vadd.f32 %v172, 0.0
    %v212 = vlaneseq
    %v213 = vshrl.u32 %v212, 7
    %v214 = vsub.s32 0, %v213
    %v215 = vrot.slane %v50, %v214
    %v216 = vlaneseq
    %v217 = vshrl.u32 %v216, 7
    %v218 = vsub.s32 0, %v217
    %v219 = vrot.slane %v51, %v218
    %v220 = vlaneseq
    %v221 = vshrl.u32 %v220, 7
    %v222 = vsub.s32 0, %v221
    %v223 = vrot.slane %v52, %v222
    %224 = vset.pattern.permute.xlu0 0
    %225 = vperm.xlu0 %224, %v215
    %v226 = vpop.permute.xlu0 %225
    %228 = vset.pattern.permute.xlu0 0
    %229 = vperm.xlu0 %228, %v219
    %v230 = vpop.permute.xlu0 %229
    %232 = vset.pattern.permute.xlu0 0
    %233 = vperm.xlu0 %232, %v223
    %v234 = vpop.permute.xlu0 %233
    %v236 = vmul.f32 %v226, %v35
    %v237 = vmul.f32 %v226, %v36
    %v238 = vmul.f32 %v226, %v37
    %v239 = vmul.f32 %v226, %v38
    %v240 = vmul.f32 %v226, %v39
    %v241 = vmul.f32 %v226, %v40
    %v242 = vmul.f32 %v226, %v41
    %v243 = vmul.f32 %v226, %v42
    %v244 = vmul.f32 %v226, %v43
    %v245 = vmul.f32 %v226, %v44
    %v246 = vmul.f32 %v226, %v45
    %v247 = vmul.f32 %v226, %v46
    %v248 = vmul.f32 %v230, %v35
    %v249 = vmul.f32 %v230, %v36
    %v250 = vmul.f32 %v230, %v37
    %v251 = vmul.f32 %v230, %v38
    %v252 = vmul.f32 %v230, %v39
    %v253 = vmul.f32 %v230, %v40
    %v254 = vmul.f32 %v230, %v41
    %v255 = vmul.f32 %v230, %v42
    %v256 = vmul.f32 %v230, %v43
    %v257 = vmul.f32 %v230, %v44
    %v258 = vmul.f32 %v230, %v45
    %v259 = vmul.f32 %v230, %v46
    %v260 = vmul.f32 %v234, %v35
    %v261 = vmul.f32 %v234, %v36
    %v262 = vmul.f32 %v234, %v37
    %v263 = vmul.f32 %v234, %v38
    %v264 = vmul.f32 %v234, %v39
    %v265 = vmul.f32 %v234, %v40
    %v266 = vmul.f32 %v234, %v41
    %v267 = vmul.f32 %v234, %v42
    %v268 = vmul.f32 %v234, %v43
    %v269 = vmul.f32 %v234, %v44
    %v270 = vmul.f32 %v234, %v45
    %v271 = vmul.f32 %v234, %v46
    %vm308 = vcmask 1046528
    %v309 = vrot.slane %v236, 1
    %v310 = vrot.slane %v240, 1
    %v311 = vsel %vm308, %v309, %v310
    %v312 = vrot.slane %v237, 1
    %v313 = vrot.slane %v241, 1
    %v314 = vsel %vm308, %v312, %v313
    %v315 = vrot.slane %v238, 1
    %v316 = vrot.slane %v242, 1
    %v317 = vsel %vm308, %v315, %v316
    %v318 = vrot.slane %v239, 1
    %v319 = vrot.slane %v243, 1
    %v320 = vsel %vm308, %v318, %v319
    %v321 = vrot.slane %v244, 1
    %v322 = vsel %vm308, %v310, %v321
    %v323 = vrot.slane %v245, 1
    %v324 = vsel %vm308, %v313, %v323
    %v325 = vrot.slane %v246, 1
    %v326 = vsel %vm308, %v316, %v325
    %v327 = vrot.slane %v247, 1
    %v328 = vsel %vm308, %v319, %v327
    %v329 = vrot.slane %v248, 1
    %v330 = vrot.slane %v252, 1
    %v331 = vsel %vm308, %v329, %v330
    %v332 = vrot.slane %v249, 1
    %v333 = vrot.slane %v253, 1
    %v334 = vsel %vm308, %v332, %v333
    %v335 = vrot.slane %v250, 1
    %v336 = vrot.slane %v254, 1
    %v337 = vsel %vm308, %v335, %v336
    %v338 = vrot.slane %v251, 1
    %v339 = vrot.slane %v255, 1
    %v340 = vsel %vm308, %v338, %v339
    %v341 = vrot.slane %v256, 1
    %v342 = vsel %vm308, %v330, %v341
    %v343 = vrot.slane %v257, 1
    %v344 = vsel %vm308, %v333, %v343
    %v345 = vrot.slane %v258, 1
    %v346 = vsel %vm308, %v336, %v345
    %v347 = vrot.slane %v259, 1
    %v348 = vsel %vm308, %v339, %v347
    %v349 = vrot.slane %v260, 1
    %v350 = vrot.slane %v264, 1
    %v351 = vsel %vm308, %v349, %v350
    %v352 = vrot.slane %v261, 1
    %v353 = vrot.slane %v265, 1
    %v354 = vsel %vm308, %v352, %v353
    %v355 = vrot.slane %v262, 1
    %v356 = vrot.slane %v266, 1
    %v357 = vsel %vm308, %v355, %v356
    %v358 = vrot.slane %v263, 1
    %v359 = vrot.slane %v267, 1
    %v360 = vsel %vm308, %v358, %v359
    %v361 = vrot.slane %v268, 1
    %v362 = vsel %vm308, %v350, %v361
    %v363 = vrot.slane %v269, 1
    %v364 = vsel %vm308, %v353, %v363
    %v365 = vrot.slane %v270, 1
    %v366 = vsel %vm308, %v356, %v365
    %v367 = vrot.slane %v271, 1
    %v368 = vsel %vm308, %v359, %v367
    %v405 = vadd.f32 %v173, %v311
    %v406 = vadd.f32 %v174, %v314
    %v407 = vadd.f32 %v175, %v317
    %v408 = vadd.f32 %v176, %v320
    %v409 = vadd.f32 %v177, %v322
    %v410 = vadd.f32 %v178, %v324
    %v411 = vadd.f32 %v179, %v326
    %v412 = vadd.f32 %v180, %v328
    %v413 = vadd.f32 %v181, %v321
    %v414 = vadd.f32 %v182, %v323
    %v415 = vadd.f32 %v183, %v325
    %v416 = vadd.f32 %v184, %v327
    %v417 = vadd.f32 %v185, %v331
    %v418 = vadd.f32 %v186, %v334
    %v419 = vadd.f32 %v187, %v337
    %v420 = vadd.f32 %v188, %v340
    %v421 = vadd.f32 %v189, %v342
    %v422 = vadd.f32 %v190, %v344
    %v423 = vadd.f32 %v191, %v346
    %v424 = vadd.f32 %v192, %v348
    %v425 = vadd.f32 %v193, %v341
    %v426 = vadd.f32 %v194, %v343
    %v427 = vadd.f32 %v195, %v345
    %v428 = vadd.f32 %v196, %v347
    %v429 = vadd.f32 %v197, %v351
    %v430 = vadd.f32 %v198, %v354
    %v431 = vadd.f32 %v199, %v357
    %v432 = vadd.f32 %v200, %v360
    %v433 = vadd.f32 %v201, %v362
    %v434 = vadd.f32 %v202, %v364
    %v435 = vadd.f32 %v203, %v366
    %v436 = vadd.f32 %v204, %v368
    %v437 = vadd.f32 %v205, %v361
    %v438 = vadd.f32 %v206, %v363
    %v439 = vadd.f32 %v207, %v365
    %v440 = vadd.f32 %v208, %v367
    %v444 = vlaneseq
    %v445 = vshrl.u32 %v444, 7
    %v446 = vsub.s32 0, %v445
    %v447 = vrot.slane %v53, %v446
    %v448 = vlaneseq
    %v449 = vshrl.u32 %v448, 7
    %v450 = vsub.s32 0, %v449
    %v451 = vrot.slane %v54, %v450
    %v452 = vlaneseq
    %v453 = vshrl.u32 %v452, 7
    %v454 = vsub.s32 0, %v453
    %v455 = vrot.slane %v55, %v454
    %456 = vset.pattern.permute.xlu0 0
    %457 = vperm.xlu0 %456, %v447
    %v458 = vpop.permute.xlu0 %457
    %460 = vset.pattern.permute.xlu0 0
    %461 = vperm.xlu0 %460, %v451
    %v462 = vpop.permute.xlu0 %461
    %464 = vset.pattern.permute.xlu0 0
    %465 = vperm.xlu0 %464, %v455
    %v466 = vpop.permute.xlu0 %465
    %v468 = vmul.f32 %v458, %v35
    %v469 = vmul.f32 %v458, %v36
    %v470 = vmul.f32 %v458, %v37
    %v471 = vmul.f32 %v458, %v38
    %v472 = vmul.f32 %v458, %v39
    %v473 = vmul.f32 %v458, %v40
    %v474 = vmul.f32 %v458, %v41
    %v475 = vmul.f32 %v458, %v42
    %v476 = vmul.f32 %v458, %v43
    %v477 = vmul.f32 %v458, %v44
    %v478 = vmul.f32 %v458, %v45
    %v479 = vmul.f32 %v458, %v46
    %v480 = vmul.f32 %v462, %v35
    %v481 = vmul.f32 %v462, %v36
    %v482 = vmul.f32 %v462, %v37
    %v483 = vmul.f32 %v462, %v38
    %v484 = vmul.f32 %v462, %v39
    %v485 = vmul.f32 %v462, %v40
    %v486 = vmul.f32 %v462, %v41
    %v487 = vmul.f32 %v462, %v42
    %v488 = vmul.f32 %v462, %v43
    %v489 = vmul.f32 %v462, %v44
    %v490 = vmul.f32 %v462, %v45
    %v491 = vmul.f32 %v462, %v46
    %v492 = vmul.f32 %v466, %v35
    %v493 = vmul.f32 %v466, %v36
    %v494 = vmul.f32 %v466, %v37
    %v495 = vmul.f32 %v466, %v38
    %v496 = vmul.f32 %v466, %v39
    %v497 = vmul.f32 %v466, %v40
    %v498 = vmul.f32 %v466, %v41
    %v499 = vmul.f32 %v466, %v42
    %v500 = vmul.f32 %v466, %v43
    %v501 = vmul.f32 %v466, %v44
    %v502 = vmul.f32 %v466, %v45
    %v503 = vmul.f32 %v466, %v46
    %vm540 = vcmask 1045504
    %v541 = vrot.slane %v468, 2
    %v542 = vrot.slane %v472, 2
    %v543 = vsel %vm540, %v541, %v542
    %v544 = vrot.slane %v469, 2
    %v545 = vrot.slane %v473, 2
    %v546 = vsel %vm540, %v544, %v545
    %v547 = vrot.slane %v470, 2
    %v548 = vrot.slane %v474, 2
    %v549 = vsel %vm540, %v547, %v548
    %v550 = vrot.slane %v471, 2
    %v551 = vrot.slane %v475, 2
    %v552 = vsel %vm540, %v550, %v551
    %v553 = vrot.slane %v476, 2
    %v554 = vsel %vm540, %v542, %v553
    %v555 = vrot.slane %v477, 2
    %v556 = vsel %vm540, %v545, %v555
    %v557 = vrot.slane %v478, 2
    %v558 = vsel %vm540, %v548, %v557
    %v559 = vrot.slane %v479, 2
    %v560 = vsel %vm540, %v551, %v559
    %v561 = vrot.slane %v480, 2
    %v562 = vrot.slane %v484, 2
    %v563 = vsel %vm540, %v561, %v562
    %v564 = vrot.slane %v481, 2
    %v565 = vrot.slane %v485, 2
    %v566 = vsel %vm540, %v564, %v565
    %v567 = vrot.slane %v482, 2
    %v568 = vrot.slane %v486, 2
    %v569 = vsel %vm540, %v567, %v568
    %v570 = vrot.slane %v483, 2
    %v571 = vrot.slane %v487, 2
    %v572 = vsel %vm540, %v570, %v571
    %v573 = vrot.slane %v488, 2
    %v574 = vsel %vm540, %v562, %v573
    %v575 = vrot.slane %v489, 2
    %v576 = vsel %vm540, %v565, %v575
    %v577 = vrot.slane %v490, 2
    %v578 = vsel %vm540, %v568, %v577
    %v579 = vrot.slane %v491, 2
    %v580 = vsel %vm540, %v571, %v579
    %v581 = vrot.slane %v492, 2
    %v582 = vrot.slane %v496, 2
    %v583 = vsel %vm540, %v581, %v582
    %v584 = vrot.slane %v493, 2
    %v585 = vrot.slane %v497, 2
    %v586 = vsel %vm540, %v584, %v585
    %v587 = vrot.slane %v494, 2
    %v588 = vrot.slane %v498, 2
    %v589 = vsel %vm540, %v587, %v588
    %v590 = vrot.slane %v495, 2
    %v591 = vrot.slane %v499, 2
    %v592 = vsel %vm540, %v590, %v591
    %v593 = vrot.slane %v500, 2
    %v594 = vsel %vm540, %v582, %v593
    %v595 = vrot.slane %v501, 2
    %v596 = vsel %vm540, %v585, %v595
    %v597 = vrot.slane %v502, 2
    %v598 = vsel %vm540, %v588, %v597
    %v599 = vrot.slane %v503, 2
    %v600 = vsel %vm540, %v591, %v599
    %v637 = vadd.f32 %v405, %v543
    %v638 = vadd.f32 %v406, %v546
    %v639 = vadd.f32 %v407, %v549
    %v640 = vadd.f32 %v408, %v552
    %v641 = vadd.f32 %v409, %v554
    %v642 = vadd.f32 %v410, %v556
    %v643 = vadd.f32 %v411, %v558
    %v644 = vadd.f32 %v412, %v560
    %v645 = vadd.f32 %v413, %v553
    %v646 = vadd.f32 %v414, %v555
    %v647 = vadd.f32 %v415, %v557
    %v648 = vadd.f32 %v416, %v559
    %v649 = vadd.f32 %v417, %v563
    %v650 = vadd.f32 %v418, %v566
    %v651 = vadd.f32 %v419, %v569
    %v652 = vadd.f32 %v420, %v572
    %v653 = vadd.f32 %v421, %v574
    %v654 = vadd.f32 %v422, %v576
    %v655 = vadd.f32 %v423, %v578
    %v656 = vadd.f32 %v424, %v580
    %v657 = vadd.f32 %v425, %v573
    %v658 = vadd.f32 %v426, %v575
    %v659 = vadd.f32 %v427, %v577
    %v660 = vadd.f32 %v428, %v579
    %v661 = vadd.f32 %v429, %v583
    %v662 = vadd.f32 %v430, %v586
    %v663 = vadd.f32 %v431, %v589
    %v664 = vadd.f32 %v432, %v592
    %v665 = vadd.f32 %v433, %v594
    %v666 = vadd.f32 %v434, %v596
    %v667 = vadd.f32 %v435, %v598
    %v668 = vadd.f32 %v436, %v600
    %v669 = vadd.f32 %v437, %v593
    %v670 = vadd.f32 %v438, %v595
    %v671 = vadd.f32 %v439, %v597
    %v672 = vadd.f32 %v440, %v599
    %v673 = vld [vmem:[%s2] sm:$0x1]
    %v674 = vld [vmem:[%s2 + $0x1] sm:$0x1]
    %v675 = vld [vmem:[%s2 + $0x2] sm:$0x1]
    %v679 = vlaneseq
    %v680 = vshrl.u32 %v679, 7
    %v681 = vsub.s32 0, %v680
    %v682 = vrot.slane %v673, %v681
    %v683 = vlaneseq
    %v684 = vshrl.u32 %v683, 7
    %v685 = vsub.s32 0, %v684
    %v686 = vrot.slane %v674, %v685
    %v687 = vlaneseq
    %v688 = vshrl.u32 %v687, 7
    %v689 = vsub.s32 0, %v688
    %v690 = vrot.slane %v675, %v689
    %691 = vset.pattern.permute.xlu0 0
    %692 = vperm.xlu0 %691, %v682
    %v693 = vpop.permute.xlu0 %692
    %695 = vset.pattern.permute.xlu0 0
    %696 = vperm.xlu0 %695, %v686
    %v697 = vpop.permute.xlu0 %696
    %699 = vset.pattern.permute.xlu0 0
    %700 = vperm.xlu0 %699, %v690
    %v701 = vpop.permute.xlu0 %700
    %v703 = vadd.f32 %v637, %v693
    %v704 = vadd.f32 %v638, %v693
    %v705 = vadd.f32 %v639, %v693
    %v706 = vadd.f32 %v640, %v693
    %v707 = vadd.f32 %v641, %v693
    %v708 = vadd.f32 %v642, %v693
    %v709 = vadd.f32 %v643, %v693
    %v710 = vadd.f32 %v644, %v693
    %v711 = vadd.f32 %v645, %v693
    %v712 = vadd.f32 %v646, %v693
    %v713 = vadd.f32 %v647, %v693
    %v714 = vadd.f32 %v648, %v693
    %v715 = vadd.f32 %v649, %v697
    %v716 = vadd.f32 %v650, %v697
    %v717 = vadd.f32 %v651, %v697
    %v718 = vadd.f32 %v652, %v697
    %v719 = vadd.f32 %v653, %v697
    %v720 = vadd.f32 %v654, %v697
    %v721 = vadd.f32 %v655, %v697
    %v722 = vadd.f32 %v656, %v697
    %v723 = vadd.f32 %v657, %v697
    %v724 = vadd.f32 %v658, %v697
    %v725 = vadd.f32 %v659, %v697
    %v726 = vadd.f32 %v660, %v697
    %v727 = vadd.f32 %v661, %v701
    %v728 = vadd.f32 %v662, %v701
    %v729 = vadd.f32 %v663, %v701
    %v730 = vadd.f32 %v664, %v701
    %v731 = vadd.f32 %v665, %v701
    %v732 = vadd.f32 %v666, %v701
    %v733 = vadd.f32 %v667, %v701
    %v734 = vadd.f32 %v668, %v701
    %v735 = vadd.f32 %v669, %v701
    %v736 = vadd.f32 %v670, %v701
    %v737 = vadd.f32 %v671, %v701
    %v738 = vadd.f32 %v672, %v701
    %v739 = vmax.f32 %v703, 0.0
    %v740 = vmax.f32 %v704, 0.0
    %v741 = vmax.f32 %v705, 0.0
    %v742 = vmax.f32 %v706, 0.0
    %v743 = vmax.f32 %v707, 0.0
    %v744 = vmax.f32 %v708, 0.0
    %v745 = vmax.f32 %v709, 0.0
    %v746 = vmax.f32 %v710, 0.0
    %v747 = vmax.f32 %v711, 0.0
    %v748 = vmax.f32 %v712, 0.0
    %v749 = vmax.f32 %v713, 0.0
    %v750 = vmax.f32 %v714, 0.0
    %v751 = vmax.f32 %v715, 0.0
    %v752 = vmax.f32 %v716, 0.0
    %v753 = vmax.f32 %v717, 0.0
    %v754 = vmax.f32 %v718, 0.0
    %v755 = vmax.f32 %v719, 0.0
    %v756 = vmax.f32 %v720, 0.0
    %v757 = vmax.f32 %v721, 0.0
    %v758 = vmax.f32 %v722, 0.0
    %v759 = vmax.f32 %v723, 0.0
    %v760 = vmax.f32 %v724, 0.0
    %v761 = vmax.f32 %v725, 0.0
    %v762 = vmax.f32 %v726, 0.0
    %v763 = vmax.f32 %v727, 0.0
    %v764 = vmax.f32 %v728, 0.0
    %v765 = vmax.f32 %v729, 0.0
    %v766 = vmax.f32 %v730, 0.0
    %v767 = vmax.f32 %v731, 0.0
    %v768 = vmax.f32 %v732, 0.0
    %v769 = vmax.f32 %v733, 0.0
    %v770 = vmax.f32 %v734, 0.0
    %v771 = vmax.f32 %v735, 0.0
    %v772 = vmax.f32 %v736, 0.0
    %v773 = vmax.f32 %v737, 0.0
    %v774 = vmax.f32 %v738, 0.0
    %v775 = vlaneseq
    %vm776 = vcmp.ge.s32.totalorder %v775, 0
    %vm777 = vcmp.lt.s32.totalorder %v775, 512
    %vm778 = vmand %vm776, %vm777
    %779 = vst.msk [vmem:[#allocation2] ss:$8 sm:$0xf] %vm778, 0.0
    %780 = vst.msk [vmem:[#allocation2] ss:$8 sm:$0x0] %vm778, 0.0
    %s781 = scalar_lea.vmem [#allocation2], 96
    %782 = vst.msk [vmem:[%s781] ss:$8 sm:$0xf] %vm778, 0.0
    %783 = vst.msk [vmem:[%s781] ss:$8 sm:$0x0] %vm778, 0.0
    %s784 = scalar_lea.vmem [#allocation2], 192
    %785 = vst.msk [vmem:[%s784] ss:$8 sm:$0xf] %vm778, 0.0
    %786 = vst.msk [vmem:[%s784] ss:$8 sm:$0x0] %vm778, 0.0
    %s787 = scalar_lea.vmem [#allocation2], 71
    %788 = vst.msk [vmem:[%s787] ss:$8 sm:$0xf] %vm778, 0.0
    %789 = vst.msk [vmem:[%s787] ss:$8 sm:$0x0] %vm778, 0.0
    %s790 = scalar_lea.vmem [#allocation2], 167
    %791 = vst.msk [vmem:[%s790] ss:$8 sm:$0xf] %vm778, 0.0
    %792 = vst.msk [vmem:[%s790] ss:$8 sm:$0x0] %vm778, 0.0
    %s793 = scalar_lea.vmem [#allocation2], 263
    %794 = vst.msk [vmem:[%s793] ss:$8 sm:$0xf] %vm778, 0.0
    %795 = vst.msk [vmem:[%s793] ss:$8 sm:$0x0] %vm778, 0.0
    %vm832 = vcmask 1040384
    %v833 = vrot.slane %v739, 7
    %v834 = vrot.slane %v740, 7
    %v835 = vrot.slane %v741, 7
    %v836 = vrot.slane %v742, 7
    %v837 = vrot.slane %v743, 7
    %v838 = vsel %vm832, %v833, %v837
    %v839 = vrot.slane %v744, 7
    %v840 = vsel %vm832, %v834, %v839
    %v841 = vrot.slane %v745, 7
    %v842 = vsel %vm832, %v835, %v841
    %v843 = vrot.slane %v746, 7
    %v844 = vsel %vm832, %v836, %v843
    %v845 = vrot.slane %v747, 7
    %v846 = vsel %vm832, %v837, %v845
    %v847 = vrot.slane %v748, 7
    %v848 = vsel %vm832, %v839, %v847
    %v849 = vrot.slane %v749, 7
    %v850 = vsel %vm832, %v841, %v849
    %v851 = vrot.slane %v750, 7
    %v852 = vsel %vm832, %v843, %v851
    %v853 = vrot.slane %v751, 7
    %v854 = vrot.slane %v752, 7
    %v855 = vrot.slane %v753, 7
    %v856 = vrot.slane %v754, 7
    %v857 = vrot.slane %v755, 7
    %v858 = vsel %vm832, %v853, %v857
    %v859 = vrot.slane %v756, 7
    %v860 = vsel %vm832, %v854, %v859
    %v861 = vrot.slane %v757, 7
    %v862 = vsel %vm832, %v855, %v861
    %v863 = vrot.slane %v758, 7
    %v864 = vsel %vm832, %v856, %v863
    %v865 = vrot.slane %v759, 7
    %v866 = vsel %vm832, %v857, %v865
    %v867 = vrot.slane %v760, 7
    %v868 = vsel %vm832, %v859, %v867
    %v869 = vrot.slane %v761, 7
    %v870 = vsel %vm832, %v861, %v869
    %v871 = vrot.slane %v762, 7
    %v872 = vsel %vm832, %v863, %v871
    %v873 = vrot.slane %v763, 7
    %v874 = vrot.slane %v764, 7
    %v875 = vrot.slane %v765, 7
    %v876 = vrot.slane %v766, 7
    %v877 = vrot.slane %v767, 7
    %v878 = vsel %vm832, %v873, %v877
    %v879 = vrot.slane %v768, 7
    %v880 = vsel %vm832, %v874, %v879
    %v881 = vrot.slane %v769, 7
    %v882 = vsel %vm832, %v875, %v881
    %v883 = vrot.slane %v770, 7
    %v884 = vsel %vm832, %v876, %v883
    %v885 = vrot.slane %v771, 7
    %v886 = vsel %vm832, %v877, %v885
    %v887 = vrot.slane %v772, 7
    %v888 = vsel %vm832, %v879, %v887
    %v889 = vrot.slane %v773, 7
    %v890 = vsel %vm832, %v881, %v889
    %v891 = vrot.slane %v774, 7
    %v892 = vsel %vm832, %v883, %v891
    %929 = vst [vmem:[#allocation2] sm:$0xfe] %v833
    %930 = vst [vmem:[#allocation2 + $0x8] sm:$0xfe] %v834
    %931 = vst [vmem:[#allocation2 + $0x10] sm:$0xfe] %v835
    %932 = vst [vmem:[#allocation2 + $0x18] sm:$0xfe] %v836
    %933 = vst [vmem:[#allocation2 + $0x20] sm:$0xff] %v838
    %934 = vst [vmem:[#allocation2 + $0x28] sm:$0xff] %v840
    %935 = vst [vmem:[#allocation2 + $0x30] sm:$0xff] %v842
    %936 = vst [vmem:[#allocation2 + $0x38] sm:$0xff] %v844
    %937 = vst [vmem:[#allocation2 + $0x40] sm:$0x7f] %v846
    %938 = vst [vmem:[#allocation2 + $0x48] sm:$0x7f] %v848
    %939 = vst [vmem:[#allocation2 + $0x50] sm:$0x7f] %v850
    %940 = vst [vmem:[#allocation2 + $0x58] sm:$0x7f] %v852
    %941 = vst [vmem:[#allocation2 + $0x60] sm:$0xfe] %v853
    %942 = vst [vmem:[#allocation2 + $0x68] sm:$0xfe] %v854
    %943 = vst [vmem:[#allocation2 + $0x70] sm:$0xfe] %v855
    %944 = vst [vmem:[#allocation2 + $0x78] sm:$0xfe] %v856
    %945 = vst [vmem:[#allocation2 + $0x80] sm:$0xff] %v858
    %946 = vst [vmem:[#allocation2 + $0x88] sm:$0xff] %v860
    %947 = vst [vmem:[#allocation2 + $0x90] sm:$0xff] %v862
    %948 = vst [vmem:[#allocation2 + $0x98] sm:$0xff] %v864
    %949 = vst [vmem:[#allocation2 + $0xa0] sm:$0x7f] %v866
    %950 = vst [vmem:[#allocation2 + $0xa8] sm:$0x7f] %v868
    %951 = vst [vmem:[#allocation2 + $0xb0] sm:$0x7f] %v870
    %952 = vst [vmem:[#allocation2 + $0xb8] sm:$0x7f] %v872
    %953 = vst [vmem:[#allocation2 + $0xc0] sm:$0xfe] %v873
    %954 = vst [vmem:[#allocation2 + $0xc8] sm:$0xfe] %v874
    %955 = vst [vmem:[#allocation2 + $0xd0] sm:$0xfe] %v875
    %956 = vst [vmem:[#allocation2 + $0xd8] sm:$0xfe] %v876
    %957 = vst [vmem:[#allocation2 + $0xe0] sm:$0xff] %v878
    %958 = vst [vmem:[#allocation2 + $0xe8] sm:$0xff] %v880
    %959 = vst [vmem:[#allocation2 + $0xf0] sm:$0xff] %v882
    %960 = vst [vmem:[#allocation2 + $0xf8] sm:$0xff] %v884
    %961 = vst [vmem:[#allocation2 + $0x100] sm:$0x7f] %v886
    %962 = vst [vmem:[#allocation2 + $0x108] sm:$0x7f] %v888
    %963 = vst [vmem:[#allocation2 + $0x110] sm:$0x7f] %v890
    %964 = vst [vmem:[#allocation2 + $0x118] sm:$0x7f] %v892
    %v965 = vld [vmem:[#allocation2] sm:$0xff]
    %v966 = vld [vmem:[#allocation2 + $0x8] sm:$0xff]
    %v967 = vld [vmem:[#allocation2 + $0x10] sm:$0xff]
    %v968 = vld [vmem:[#allocation2 + $0x18] sm:$0xff]
    %v969 = vld [vmem:[#allocation2 + $0x20] sm:$0xff]
    %v970 = vld [vmem:[#allocation2 + $0x28] sm:$0xff]
    %v971 = vld [vmem:[#allocation2 + $0x30] sm:$0xff]
    %v972 = vld [vmem:[#allocation2 + $0x38] sm:$0xff]
    %v973 = vld [vmem:[#allocation2 + $0x40] sm:$0x3f]
    %v974 = vld [vmem:[#allocation2 + $0x48] sm:$0x3f]
    %v975 = vld [vmem:[#allocation2 + $0x50] sm:$0x3f]
    %v976 = vld [vmem:[#allocation2 + $0x58] sm:$0x3f]
    %v983 = vlaneseq
    %v984 = vshrl.u32 %v983, 7
    %v985 = vsub.s32 0, %v984
    %v986 = vrot.slane %v56, %v985
    %v987 = vlaneseq
    %v988 = vshrl.u32 %v987, 7
    %v989 = vsub.s32 0, %v988
    %v990 = vrot.slane %v57, %v989
    %v991 = vlaneseq
    %v992 = vshrl.u32 %v991, 7
    %v993 = vsub.s32 0, %v992
    %v994 = vrot.slane %v58, %v993
    %v995 = vlaneseq
    %v996 = vshrl.u32 %v995, 7
    %v997 = vsub.s32 0, %v996
    %v998 = vrot.slane %v59, %v997
    %v999 = vlaneseq
    %v1000 = vshrl.u32 %v999, 7
    %v1001 = vsub.s32 0, %v1000
    %v1002 = vrot.slane %v60, %v1001
    %v1003 = vlaneseq
    %v1004 = vshrl.u32 %v1003, 7
    %v1005 = vsub.s32 0, %v1004
    %v1006 = vrot.slane %v61, %v1005
    %1007 = vset.pattern.permute.xlu0 0
    %1008 = vperm.xlu0 %1007, %v986
    %v1009 = vpop.permute.xlu0 %1008
    %1011 = vset.pattern.permute.xlu0 0
    %1012 = vperm.xlu0 %1011, %v990
    %v1013 = vpop.permute.xlu0 %1012
    %1015 = vset.pattern.permute.xlu0 0
    %1016 = vperm.xlu0 %1015, %v994
    %v1017 = vpop.permute.xlu0 %1016
    %1019 = vset.pattern.permute.xlu0 0
    %1020 = vperm.xlu0 %1019, %v998
    %v1021 = vpop.permute.xlu0 %1020
    %1023 = vset.pattern.permute.xlu0 0
    %1024 = vperm.xlu0 %1023, %v1002
    %v1025 = vpop.permute.xlu0 %1024
    %1027 = vset.pattern.permute.xlu0 0
    %1028 = vperm.xlu0 %1027, %v1006
    %v1029 = vpop.permute.xlu0 %1028
    %v1031 = vmul.f32 %v1009, %v965
    %v1032 = vmul.f32 %v1009, %v966
    %v1033 = vmul.f32 %v1009, %v967
    %v1034 = vmul.f32 %v1009, %v968
    %v1035 = vmul.f32 %v1009, %v969
    %v1036 = vmul.f32 %v1009, %v970
    %v1037 = vmul.f32 %v1009, %v971
    %v1038 = vmul.f32 %v1009, %v972
    %v1039 = vmul.f32 %v1009, %v973
    %v1040 = vmul.f32 %v1009, %v974
    %v1041 = vmul.f32 %v1009, %v975
    %v1042 = vmul.f32 %v1009, %v976
    %v1043 = vmul.f32 %v1013, %v965
    %v1044 = vmul.f32 %v1013, %v966
    %v1045 = vmul.f32 %v1013, %v967
    %v1046 = vmul.f32 %v1013, %v968
    %v1047 = vmul.f32 %v1013, %v969
    %v1048 = vmul.f32 %v1013, %v970
    %v1049 = vmul.f32 %v1013, %v971
    %v1050 = vmul.f32 %v1013, %v972
    %v1051 = vmul.f32 %v1013, %v973
    %v1052 = vmul.f32 %v1013, %v974
    %v1053 = vmul.f32 %v1013, %v975
    %v1054 = vmul.f32 %v1013, %v976
    %v1055 = vmul.f32 %v1017, %v965
    %v1056 = vmul.f32 %v1017, %v966
    %v1057 = vmul.f32 %v1017, %v967
    %v1058 = vmul.f32 %v1017, %v968
    %v1059 = vmul.f32 %v1017, %v969
    %v1060 = vmul.f32 %v1017, %v970
    %v1061 = vmul.f32 %v1017, %v971
    %v1062 = vmul.f32 %v1017, %v972
    %v1063 = vmul.f32 %v1017, %v973
    %v1064 = vmul.f32 %v1017, %v974
    %v1065 = vmul.f32 %v1017, %v975
    %v1066 = vmul.f32 %v1017, %v976
    %v1067 = vmul.f32 %v1021, %v965
    %v1068 = vmul.f32 %v1021, %v966
    %v1069 = vmul.f32 %v1021, %v967
    %v1070 = vmul.f32 %v1021, %v968
    %v1071 = vmul.f32 %v1021, %v969
    %v1072 = vmul.f32 %v1021, %v970
    %v1073 = vmul.f32 %v1021, %v971
    %v1074 = vmul.f32 %v1021, %v972
    %v1075 = vmul.f32 %v1021, %v973
    %v1076 = vmul.f32 %v1021, %v974
    %v1077 = vmul.f32 %v1021, %v975
    %v1078 = vmul.f32 %v1021, %v976
    %v1079 = vmul.f32 %v1025, %v965
    %v1080 = vmul.f32 %v1025, %v966
    %v1081 = vmul.f32 %v1025, %v967
    %v1082 = vmul.f32 %v1025, %v968
    %v1083 = vmul.f32 %v1025, %v969
    %v1084 = vmul.f32 %v1025, %v970
    %v1085 = vmul.f32 %v1025, %v971
    %v1086 = vmul.f32 %v1025, %v972
    %v1087 = vmul.f32 %v1025, %v973
    %v1088 = vmul.f32 %v1025, %v974
    %v1089 = vmul.f32 %v1025, %v975
    %v1090 = vmul.f32 %v1025, %v976
    %v1091 = vmul.f32 %v1029, %v965
    %v1092 = vmul.f32 %v1029, %v966
    %v1093 = vmul.f32 %v1029, %v967
    %v1094 = vmul.f32 %v1029, %v968
    %v1095 = vmul.f32 %v1029, %v969
    %v1096 = vmul.f32 %v1029, %v970
    %v1097 = vmul.f32 %v1029, %v971
    %v1098 = vmul.f32 %v1029, %v972
    %v1099 = vmul.f32 %v1029, %v973
    %v1100 = vmul.f32 %v1029, %v974
    %v1101 = vmul.f32 %v1029, %v975
    %v1102 = vmul.f32 %v1029, %v976
    %v1103 = vadd.f32 %v1031, 0.0
    %v1104 = vadd.f32 %v1032, 0.0
    %v1105 = vadd.f32 %v1033, 0.0
    %v1106 = vadd.f32 %v1034, 0.0
    %v1107 = vadd.f32 %v1035, 0.0
    %v1108 = vadd.f32 %v1036, 0.0
    %v1109 = vadd.f32 %v1037, 0.0
    %v1110 = vadd.f32 %v1038, 0.0
    %v1111 = vadd.f32 %v1039, 0.0
    %v1112 = vadd.f32 %v1040, 0.0
    %v1113 = vadd.f32 %v1041, 0.0
    %v1114 = vadd.f32 %v1042, 0.0
    %v1115 = vadd.f32 %v1043, 0.0
    %v1116 = vadd.f32 %v1044, 0.0
    %v1117 = vadd.f32 %v1045, 0.0
    %v1118 = vadd.f32 %v1046, 0.0
    %v1119 = vadd.f32 %v1047, 0.0
    %v1120 = vadd.f32 %v1048, 0.0
    %v1121 = vadd.f32 %v1049, 0.0
    %v1122 = vadd.f32 %v1050, 0.0
    %v1123 = vadd.f32 %v1051, 0.0
    %v1124 = vadd.f32 %v1052, 0.0
    %v1125 = vadd.f32 %v1053, 0.0
    %v1126 = vadd.f32 %v1054, 0.0
    %v1127 = vadd.f32 %v1055, 0.0
    %v1128 = vadd.f32 %v1056, 0.0
    %v1129 = vadd.f32 %v1057, 0.0
    %v1130 = vadd.f32 %v1058, 0.0
    %v1131 = vadd.f32 %v1059, 0.0
    %v1132 = vadd.f32 %v1060, 0.0
    %v1133 = vadd.f32 %v1061, 0.0
    %v1134 = vadd.f32 %v1062, 0.0
    %v1135 = vadd.f32 %v1063, 0.0
    %v1136 = vadd.f32 %v1064, 0.0
    %v1137 = vadd.f32 %v1065, 0.0
    %v1138 = vadd.f32 %v1066, 0.0
    %v1139 = vadd.f32 %v1067, 0.0
    %v1140 = vadd.f32 %v1068, 0.0
    %v1141 = vadd.f32 %v1069, 0.0
    %v1142 = vadd.f32 %v1070, 0.0
    %v1143 = vadd.f32 %v1071, 0.0
    %v1144 = vadd.f32 %v1072, 0.0
    %v1145 = vadd.f32 %v1073, 0.0
    %v1146 = vadd.f32 %v1074, 0.0
    %v1147 = vadd.f32 %v1075, 0.0
    %v1148 = vadd.f32 %v1076, 0.0
    %v1149 = vadd.f32 %v1077, 0.0
    %v1150 = vadd.f32 %v1078, 0.0
    %v1151 = vadd.f32 %v1079, 0.0
    %v1152 = vadd.f32 %v1080, 0.0
    %v1153 = vadd.f32 %v1081, 0.0
    %v1154 = vadd.f32 %v1082, 0.0
    %v1155 = vadd.f32 %v1083, 0.0
    %v1156 = vadd.f32 %v1084, 0.0
    %v1157 = vadd.f32 %v1085, 0.0
    %v1158 = vadd.f32 %v1086, 0.0
    %v1159 = vadd.f32 %v1087, 0.0
    %v1160 = vadd.f32 %v1088, 0.0
    %v1161 = vadd.f32 %v1089, 0.0
    %v1162 = vadd.f32 %v1090, 0.0
    %v1163 = vadd.f32 %v1091, 0.0
    %v1164 = vadd.f32 %v1092, 0.0
    %v1165 = vadd.f32 %v1093, 0.0
    %v1166 = vadd.f32 %v1094, 0.0
    %v1167 = vadd.f32 %v1095, 0.0
    %v1168 = vadd.f32 %v1096, 0.0
    %v1169 = vadd.f32 %v1097, 0.0
    %v1170 = vadd.f32 %v1098, 0.0
    %v1171 = vadd.f32 %v1099, 0.0
    %v1172 = vadd.f32 %v1100, 0.0
    %v1173 = vadd.f32 %v1101, 0.0
    %v1174 = vadd.f32 %v1102, 0.0
    %s1175 = scalar_lea.vmem [#allocation2], 96
    %v1176 = vld [vmem:[%s1175] sm:$0xff]
    %v1177 = vld [vmem:[%s1175 + $0x8] sm:$0xff]
    %v1178 = vld [vmem:[%s1175 + $0x10] sm:$0xff]
    %v1179 = vld [vmem:[%s1175 + $0x18] sm:$0xff]
    %v1180 = vld [vmem:[%s1175 + $0x20] sm:$0xff]
    %v1181 = vld [vmem:[%s1175 + $0x28] sm:$0xff]
    %v1182 = vld [vmem:[%s1175 + $0x30] sm:$0xff]
    %v1183 = vld [vmem:[%s1175 + $0x38] sm:$0xff]
    %v1184 = vld [vmem:[%s1175 + $0x40] sm:$0x3f]
    %v1185 = vld [vmem:[%s1175 + $0x48] sm:$0x3f]
    %v1186 = vld [vmem:[%s1175 + $0x50] sm:$0x3f]
    %v1187 = vld [vmem:[%s1175 + $0x58] sm:$0x3f]
    %v1194 = vlaneseq
    %v1195 = vshrl.u32 %v1194, 7
    %v1196 = vsub.s32 0, %v1195
    %v1197 = vrot.slane %v62, %v1196
    %v1198 = vlaneseq
    %v1199 = vshrl.u32 %v1198, 7
    %v1200 = vsub.s32 0, %v1199
    %v1201 = vrot.slane %v63, %v1200
    %v1202 = vlaneseq
    %v1203 = vshrl.u32 %v1202, 7
    %v1204 = vsub.s32 0, %v1203
    %v1205 = vrot.slane %v64, %v1204
    %v1206 = vlaneseq
    %v1207 = vshrl.u32 %v1206, 7
    %v1208 = vsub.s32 0, %v1207
    %v1209 = vrot.slane %v65, %v1208
    %v1210 = vlaneseq
    %v1211 = vshrl.u32 %v1210, 7
    %v1212 = vsub.s32 0, %v1211
    %v1213 = vrot.slane %v66, %v1212
    %v1214 = vlaneseq
    %v1215 = vshrl.u32 %v1214, 7
    %v1216 = vsub.s32 0, %v1215
    %v1217 = vrot.slane %v67, %v1216
    %1218 = vset.pattern.permute.xlu0 0
    %1219 = vperm.xlu0 %1218, %v1197
    %v1220 = vpop.permute.xlu0 %1219
    %1222 = vset.pattern.permute.xlu0 0
    %1223 = vperm.xlu0 %1222, %v1201
    %v1224 = vpop.permute.xlu0 %1223
    %1226 = vset.pattern.permute.xlu0 0
    %1227 = vperm.xlu0 %1226, %v1205
    %v1228 = vpop.permute.xlu0 %1227
    %1230 = vset.pattern.permute.xlu0 0
    %1231 = vperm.xlu0 %1230, %v1209
    %v1232 = vpop.permute.xlu0 %1231
    %1234 = vset.pattern.permute.xlu0 0
    %1235 = vperm.xlu0 %1234, %v1213
    %v1236 = vpop.permute.xlu0 %1235
    %1238 = vset.pattern.permute.xlu0 0
    %1239 = vperm.xlu0 %1238, %v1217
    %v1240 = vpop.permute.xlu0 %1239
    %v1242 = vmul.f32 %v1220, %v1176
    %v1243 = vmul.f32 %v1220, %v1177
    %v1244 = vmul.f32 %v1220, %v1178
    %v1245 = vmul.f32 %v1220, %v1179
    %v1246 = vmul.f32 %v1220, %v1180
    %v1247 = vmul.f32 %v1220, %v1181
    %v1248 = vmul.f32 %v1220, %v1182
    %v1249 = vmul.f32 %v1220, %v1183
    %v1250 = vmul.f32 %v1220, %v1184
    %v1251 = vmul.f32 %v1220, %v1185
    %v1252 = vmul.f32 %v1220, %v1186
    %v1253 = vmul.f32 %v1220, %v1187
    %v1254 = vmul.f32 %v1224, %v1176
    %v1255 = vmul.f32 %v1224, %v1177
    %v1256 = vmul.f32 %v1224, %v1178
    %v1257 = vmul.f32 %v1224, %v1179
    %v1258 = vmul.f32 %v1224, %v1180
    %v1259 = vmul.f32 %v1224, %v1181
    %v1260 = vmul.f32 %v1224, %v1182
    %v1261 = vmul.f32 %v1224, %v1183
    %v1262 = vmul.f32 %v1224, %v1184
    %v1263 = vmul.f32 %v1224, %v1185
    %v1264 = vmul.f32 %v1224, %v1186
    %v1265 = vmul.f32 %v1224, %v1187
    %v1266 = vmul.f32 %v1228, %v1176
    %v1267 = vmul.f32 %v1228, %v1177
    %v1268 = vmul.f32 %v1228, %v1178
    %v1269 = vmul.f32 %v1228, %v1179
    %v1270 = vmul.f32 %v1228, %v1180
    %v1271 = vmul.f32 %v1228, %v1181
    %v1272 = vmul.f32 %v1228, %v1182
    %v1273 = vmul.f32 %v1228, %v1183
    %v1274 = vmul.f32 %v1228, %v1184
    %v1275 = vmul.f32 %v1228, %v1185
    %v1276 = vmul.f32 %v1228, %v1186
    %v1277 = vmul.f32 %v1228, %v1187
    %v1278 = vmul.f32 %v1232, %v1176
    %v1279 = vmul.f32 %v1232, %v1177
    %v1280 = vmul.f32 %v1232, %v1178
    %v1281 = vmul.f32 %v1232, %v1179
    %v1282 = vmul.f32 %v1232, %v1180
    %v1283 = vmul.f32 %v1232, %v1181
    %v1284 = vmul.f32 %v1232, %v1182
    %v1285 = vmul.f32 %v1232, %v1183
    %v1286 = vmul.f32 %v1232, %v1184
    %v1287 = vmul.f32 %v1232, %v1185
    %v1288 = vmul.f32 %v1232, %v1186
    %v1289 = vmul.f32 %v1232, %v1187
    %v1290 = vmul.f32 %v1236, %v1176
    %v1291 = vmul.f32 %v1236, %v1177
    %v1292 = vmul.f32 %v1236, %v1178
    %v1293 = vmul.f32 %v1236, %v1179
    %v1294 = vmul.f32 %v1236, %v1180
    %v1295 = vmul.f32 %v1236, %v1181
    %v1296 = vmul.f32 %v1236, %v1182
    %v1297 = vmul.f32 %v1236, %v1183
    %v1298 = vmul.f32 %v1236, %v1184
    %v1299 = vmul.f32 %v1236, %v1185
    %v1300 = vmul.f32 %v1236, %v1186
    %v1301 = vmul.f32 %v1236, %v1187
    %v1302 = vmul.f32 %v1240, %v1176
    %v1303 = vmul.f32 %v1240, %v1177
    %v1304 = vmul.f32 %v1240, %v1178
    %v1305 = vmul.f32 %v1240, %v1179
    %v1306 = vmul.f32 %v1240, %v1180
    %v1307 = vmul.f32 %v1240, %v1181
    %v1308 = vmul.f32 %v1240, %v1182
    %v1309 = vmul.f32 %v1240, %v1183
    %v1310 = vmul.f32 %v1240, %v1184
    %v1311 = vmul.f32 %v1240, %v1185
    %v1312 = vmul.f32 %v1240, %v1186
    %v1313 = vmul.f32 %v1240, %v1187
    %v1314 = vadd.f32 %v1103, %v1242
    %v1315 = vadd.f32 %v1104, %v1243
    %v1316 = vadd.f32 %v1105, %v1244
    %v1317 = vadd.f32 %v1106, %v1245
    %v1318 = vadd.f32 %v1107, %v1246
    %v1319 = vadd.f32 %v1108, %v1247
    %v1320 = vadd.f32 %v1109, %v1248
    %v1321 = vadd.f32 %v1110, %v1249
    %v1322 = vadd.f32 %v1111, %v1250
    %v1323 = vadd.f32 %v1112, %v1251
    %v1324 = vadd.f32 %v1113, %v1252
    %v1325 = vadd.f32 %v1114, %v1253
    %v1326 = vadd.f32 %v1115, %v1254
    %v1327 = vadd.f32 %v1116, %v1255
    %v1328 = vadd.f32 %v1117, %v1256
    %v1329 = vadd.f32 %v1118, %v1257
    %v1330 = vadd.f32 %v1119, %v1258
    %v1331 = vadd.f32 %v1120, %v1259
    %v1332 = vadd.f32 %v1121, %v1260
    %v1333 = vadd.f32 %v1122, %v1261
    %v1334 = vadd.f32 %v1123, %v1262
    %v1335 = vadd.f32 %v1124, %v1263
    %v1336 = vadd.f32 %v1125, %v1264
    %v1337 = vadd.f32 %v1126, %v1265
    %v1338 = vadd.f32 %v1127, %v1266
    %v1339 = vadd.f32 %v1128, %v1267
    %v1340 = vadd.f32 %v1129, %v1268
    %v1341 = vadd.f32 %v1130, %v1269
    %v1342 = vadd.f32 %v1131, %v1270
    %v1343 = vadd.f32 %v1132, %v1271
    %v1344 = vadd.f32 %v1133, %v1272
    %v1345 = vadd.f32 %v1134, %v1273
    %v1346 = vadd.f32 %v1135, %v1274
    %v1347 = vadd.f32 %v1136, %v1275
    %v1348 = vadd.f32 %v1137, %v1276
    %v1349 = vadd.f32 %v1138, %v1277
    %v1350 = vadd.f32 %v1139, %v1278
    %v1351 = vadd.f32 %v1140, %v1279
    %v1352 = vadd.f32 %v1141, %v1280
    %v1353 = vadd.f32 %v1142, %v1281
    %v1354 = vadd.f32 %v1143, %v1282
    %v1355 = vadd.f32 %v1144, %v1283
    %v1356 = vadd.f32 %v1145, %v1284
    %v1357 = vadd.f32 %v1146, %v1285
    %v1358 = vadd.f32 %v1147, %v1286
    %v1359 = vadd.f32 %v1148, %v1287
    %v1360 = vadd.f32 %v1149, %v1288
    %v1361 = vadd.f32 %v1150, %v1289
    %v1362 = vadd.f32 %v1151, %v1290
    %v1363 = vadd.f32 %v1152, %v1291
    %v1364 = vadd.f32 %v1153, %v1292
    %v1365 = vadd.f32 %v1154, %v1293
    %v1366 = vadd.f32 %v1155, %v1294
    %v1367 = vadd.f32 %v1156, %v1295
    %v1368 = vadd.f32 %v1157, %v1296
    %v1369 = vadd.f32 %v1158, %v1297
    %v1370 = vadd.f32 %v1159, %v1298
    %v1371 = vadd.f32 %v1160, %v1299
    %v1372 = vadd.f32 %v1161, %v1300
    %v1373 = vadd.f32 %v1162, %v1301
    %v1374 = vadd.f32 %v1163, %v1302
    %v1375 = vadd.f32 %v1164, %v1303
    %v1376 = vadd.f32 %v1165, %v1304
    %v1377 = vadd.f32 %v1166, %v1305
    %v1378 = vadd.f32 %v1167, %v1306
    %v1379 = vadd.f32 %v1168, %v1307
    %v1380 = vadd.f32 %v1169, %v1308
    %v1381 = vadd.f32 %v1170, %v1309
    %v1382 = vadd.f32 %v1171, %v1310
    %v1383 = vadd.f32 %v1172, %v1311
    %v1384 = vadd.f32 %v1173, %v1312
    %v1385 = vadd.f32 %v1174, %v1313
    %s1386 = scalar_lea.vmem [#allocation2], 192
    %v1387 = vld [vmem:[%s1386] sm:$0xff]
    %v1388 = vld [vmem:[%s1386 + $0x8] sm:$0xff]
    %v1389 = vld [vmem:[%s1386 + $0x10] sm:$0xff]
    %v1390 = vld [vmem:[%s1386 + $0x18] sm:$0xff]
    %v1391 = vld [vmem:[%s1386 + $0x20] sm:$0xff]
    %v1392 = vld [vmem:[%s1386 + $0x28] sm:$0xff]
    %v1393 = vld [vmem:[%s1386 + $0x30] sm:$0xff]
    %v1394 = vld [vmem:[%s1386 + $0x38] sm:$0xff]
    %v1395 = vld [vmem:[%s1386 + $0x40] sm:$0x3f]
    %v1396 = vld [vmem:[%s1386 + $0x48] sm:$0x3f]
    %v1397 = vld [vmem:[%s1386 + $0x50] sm:$0x3f]
    %v1398 = vld [vmem:[%s1386 + $0x58] sm:$0x3f]
    %v1405 = vlaneseq
    %v1406 = vshrl.u32 %v1405, 7
    %v1407 = vsub.s32 0, %v1406
    %v1408 = vrot.slane %v68, %v1407
    %v1409 = vlaneseq
    %v1410 = vshrl.u32 %v1409, 7
    %v1411 = vsub.s32 0, %v1410
    %v1412 = vrot.slane %v69, %v1411
    %v1413 = vlaneseq
    %v1414 = vshrl.u32 %v1413, 7
    %v1415 = vsub.s32 0, %v1414
    %v1416 = vrot.slane %v70, %v1415
    %v1417 = vlaneseq
    %v1418 = vshrl.u32 %v1417, 7
    %v1419 = vsub.s32 0, %v1418
    %v1420 = vrot.slane %v71, %v1419
    %v1421 = vlaneseq
    %v1422 = vshrl.u32 %v1421, 7
    %v1423 = vsub.s32 0, %v1422
    %v1424 = vrot.slane %v72, %v1423
    %v1425 = vlaneseq
    %v1426 = vshrl.u32 %v1425, 7
    %v1427 = vsub.s32 0, %v1426
    %v1428 = vrot.slane %v73, %v1427
    %1429 = vset.pattern.permute.xlu0 0
    %1430 = vperm.xlu0 %1429, %v1408
    %v1431 = vpop.permute.xlu0 %1430
    %1433 = vset.pattern.permute.xlu0 0
    %1434 = vperm.xlu0 %1433, %v1412
    %v1435 = vpop.permute.xlu0 %1434
    %1437 = vset.pattern.permute.xlu0 0
    %1438 = vperm.xlu0 %1437, %v1416
    %v1439 = vpop.permute.xlu0 %1438
    %1441 = vset.pattern.permute.xlu0 0
    %1442 = vperm.xlu0 %1441, %v1420
    %v1443 = vpop.permute.xlu0 %1442
    %1445 = vset.pattern.permute.xlu0 0
    %1446 = vperm.xlu0 %1445, %v1424
    %v1447 = vpop.permute.xlu0 %1446
    %1449 = vset.pattern.permute.xlu0 0
    %1450 = vperm.xlu0 %1449, %v1428
    %v1451 = vpop.permute.xlu0 %1450
    %v1453 = vmul.f32 %v1431, %v1387
    %v1454 = vmul.f32 %v1431, %v1388
    %v1455 = vmul.f32 %v1431, %v1389
    %v1456 = vmul.f32 %v1431, %v1390
    %v1457 = vmul.f32 %v1431, %v1391
    %v1458 = vmul.f32 %v1431, %v1392
    %v1459 = vmul.f32 %v1431, %v1393
    %v1460 = vmul.f32 %v1431, %v1394
    %v1461 = vmul.f32 %v1431, %v1395
    %v1462 = vmul.f32 %v1431, %v1396
    %v1463 = vmul.f32 %v1431, %v1397
    %v1464 = vmul.f32 %v1431, %v1398
    %v1465 = vmul.f32 %v1435, %v1387
    %v1466 = vmul.f32 %v1435, %v1388
    %v1467 = vmul.f32 %v1435, %v1389
    %v1468 = vmul.f32 %v1435, %v1390
    %v1469 = vmul.f32 %v1435, %v1391
    %v1470 = vmul.f32 %v1435, %v1392
    %v1471 = vmul.f32 %v1435, %v1393
    %v1472 = vmul.f32 %v1435, %v1394
    %v1473 = vmul.f32 %v1435, %v1395
    %v1474 = vmul.f32 %v1435, %v1396
    %v1475 = vmul.f32 %v1435, %v1397
    %v1476 = vmul.f32 %v1435, %v1398
    %v1477 = vmul.f32 %v1439, %v1387
    %v1478 = vmul.f32 %v1439, %v1388
    %v1479 = vmul.f32 %v1439, %v1389
    %v1480 = vmul.f32 %v1439, %v1390
    %v1481 = vmul.f32 %v1439, %v1391
    %v1482 = vmul.f32 %v1439, %v1392
    %v1483 = vmul.f32 %v1439, %v1393
    %v1484 = vmul.f32 %v1439, %v1394
    %v1485 = vmul.f32 %v1439, %v1395
    %v1486 = vmul.f32 %v1439, %v1396
    %v1487 = vmul.f32 %v1439, %v1397
    %v1488 = vmul.f32 %v1439, %v1398
    %v1489 = vmul.f32 %v1443, %v1387
    %v1490 = vmul.f32 %v1443, %v1388
    %v1491 = vmul.f32 %v1443, %v1389
    %v1492 = vmul.f32 %v1443, %v1390
    %v1493 = vmul.f32 %v1443, %v1391
    %v1494 = vmul.f32 %v1443, %v1392
    %v1495 = vmul.f32 %v1443, %v1393
    %v1496 = vmul.f32 %v1443, %v1394
    %v1497 = vmul.f32 %v1443, %v1395
    %v1498 = vmul.f32 %v1443, %v1396
    %v1499 = vmul.f32 %v1443, %v1397
    %v1500 = vmul.f32 %v1443, %v1398
    %v1501 = vmul.f32 %v1447, %v1387
    %v1502 = vmul.f32 %v1447, %v1388
    %v1503 = vmul.f32 %v1447, %v1389
    %v1504 = vmul.f32 %v1447, %v1390
    %v1505 = vmul.f32 %v1447, %v1391
    %v1506 = vmul.f32 %v1447, %v1392
    %v1507 = vmul.f32 %v1447, %v1393
    %v1508 = vmul.f32 %v1447, %v1394
    %v1509 = vmul.f32 %v1447, %v1395
    %v1510 = vmul.f32 %v1447, %v1396
    %v1511 = vmul.f32 %v1447, %v1397
    %v1512 = vmul.f32 %v1447, %v1398
    %v1513 = vmul.f32 %v1451, %v1387
    %v1514 = vmul.f32 %v1451, %v1388
    %v1515 = vmul.f32 %v1451, %v1389
    %v1516 = vmul.f32 %v1451, %v1390
    %v1517 = vmul.f32 %v1451, %v1391
    %v1518 = vmul.f32 %v1451, %v1392
    %v1519 = vmul.f32 %v1451, %v1393
    %v1520 = vmul.f32 %v1451, %v1394
    %v1521 = vmul.f32 %v1451, %v1395
    %v1522 = vmul.f32 %v1451, %v1396
    %v1523 = vmul.f32 %v1451, %v1397
    %v1524 = vmul.f32 %v1451, %v1398
    %v1525 = vadd.f32 %v1314, %v1453
    %v1526 = vadd.f32 %v1315, %v1454
    %v1527 = vadd.f32 %v1316, %v1455
    %v1528 = vadd.f32 %v1317, %v1456
    %v1529 = vadd.f32 %v1318, %v1457
    %v1530 = vadd.f32 %v1319, %v1458
    %v1531 = vadd.f32 %v1320, %v1459
    %v1532 = vadd.f32 %v1321, %v1460
    %v1533 = vadd.f32 %v1322, %v1461
    %v1534 = vadd.f32 %v1323, %v1462
    %v1535 = vadd.f32 %v1324, %v1463
    %v1536 = vadd.f32 %v1325, %v1464
    %v1537 = vadd.f32 %v1326, %v1465
    %v1538 = vadd.f32 %v1327, %v1466
    %v1539 = vadd.f32 %v1328, %v1467
    %v1540 = vadd.f32 %v1329, %v1468
    %v1541 = vadd.f32 %v1330, %v1469
    %v1542 = vadd.f32 %v1331, %v1470
    %v1543 = vadd.f32 %v1332, %v1471
    %v1544 = vadd.f32 %v1333, %v1472
    %v1545 = vadd.f32 %v1334, %v1473
    %v1546 = vadd.f32 %v1335, %v1474
    %v1547 = vadd.f32 %v1336, %v1475
    %v1548 = vadd.f32 %v1337, %v1476
    %v1549 = vadd.f32 %v1338, %v1477
    %v1550 = vadd.f32 %v1339, %v1478
    %v1551 = vadd.f32 %v1340, %v1479
    %v1552 = vadd.f32 %v1341, %v1480
    %v1553 = vadd.f32 %v1342, %v1481
    %v1554 = vadd.f32 %v1343, %v1482
    %v1555 = vadd.f32 %v1344, %v1483
    %v1556 = vadd.f32 %v1345, %v1484
    %v1557 = vadd.f32 %v1346, %v1485
    %v1558 = vadd.f32 %v1347, %v1486
    %v1559 = vadd.f32 %v1348, %v1487
    %v1560 = vadd.f32 %v1349, %v1488
    %v1561 = vadd.f32 %v1350, %v1489
    %v1562 = vadd.f32 %v1351, %v1490
    %v1563 = vadd.f32 %v1352, %v1491
    %v1564 = vadd.f32 %v1353, %v1492
    %v1565 = vadd.f32 %v1354, %v1493
    %v1566 = vadd.f32 %v1355, %v1494
    %v1567 = vadd.f32 %v1356, %v1495
    %v1568 = vadd.f32 %v1357, %v1496
    %v1569 = vadd.f32 %v1358, %v1497
    %v1570 = vadd.f32 %v1359, %v1498
    %v1571 = vadd.f32 %v1360, %v1499
    %v1572 = vadd.f32 %v1361, %v1500
    %v1573 = vadd.f32 %v1362, %v1501
    %v1574 = vadd.f32 %v1363, %v1502
    %v1575 = vadd.f32 %v1364, %v1503
    %v1576 = vadd.f32 %v1365, %v1504
    %v1577 = vadd.f32 %v1366, %v1505
    %v1578 = vadd.f32 %v1367, %v1506
    %v1579 = vadd.f32 %v1368, %v1507
    %v1580 = vadd.f32 %v1369, %v1508
    %v1581 = vadd.f32 %v1370, %v1509
    %v1582 = vadd.f32 %v1371, %v1510
    %v1583 = vadd.f32 %v1372, %v1511
    %v1584 = vadd.f32 %v1373, %v1512
    %v1585 = vadd.f32 %v1374, %v1513
    %v1586 = vadd.f32 %v1375, %v1514
    %v1587 = vadd.f32 %v1376, %v1515
    %v1588 = vadd.f32 %v1377, %v1516
    %v1589 = vadd.f32 %v1378, %v1517
    %v1590 = vadd.f32 %v1379, %v1518
    %v1591 = vadd.f32 %v1380, %v1519
    %v1592 = vadd.f32 %v1381, %v1520
    %v1593 = vadd.f32 %v1382, %v1521
    %v1594 = vadd.f32 %v1383, %v1522
    %v1595 = vadd.f32 %v1384, %v1523
    %v1596 = vadd.f32 %v1385, %v1524
    %v1597 = vld [vmem:[#allocation2] sm:$0xfe]
    %v1598 = vld [vmem:[#allocation2 + $0x8] sm:$0xfe]
    %v1599 = vld [vmem:[#allocation2 + $0x10] sm:$0xfe]
    %v1600 = vld [vmem:[#allocation2 + $0x18] sm:$0xfe]
    %v1601 = vld [vmem:[#allocation2 + $0x40] sm:$0x7f]
    %v1602 = vld [vmem:[#allocation2 + $0x48] sm:$0x7f]
    %v1603 = vld [vmem:[#allocation2 + $0x50] sm:$0x7f]
    %v1604 = vld [vmem:[#allocation2 + $0x58] sm:$0x7f]
    %v1611 = vlaneseq
    %v1612 = vshrl.u32 %v1611, 7
    %v1613 = vsub.s32 0, %v1612
    %v1614 = vrot.slane %v74, %v1613
    %v1615 = vlaneseq
    %v1616 = vshrl.u32 %v1615, 7
    %v1617 = vsub.s32 0, %v1616
    %v1618 = vrot.slane %v75, %v1617
    %v1619 = vlaneseq
    %v1620 = vshrl.u32 %v1619, 7
    %v1621 = vsub.s32 0, %v1620
    %v1622 = vrot.slane %v76, %v1621
    %v1623 = vlaneseq
    %v1624 = vshrl.u32 %v1623, 7
    %v1625 = vsub.s32 0, %v1624
    %v1626 = vrot.slane %v77, %v1625
    %v1627 = vlaneseq
    %v1628 = vshrl.u32 %v1627, 7
    %v1629 = vsub.s32 0, %v1628
    %v1630 = vrot.slane %v78, %v1629
    %v1631 = vlaneseq
    %v1632 = vshrl.u32 %v1631, 7
    %v1633 = vsub.s32 0, %v1632
    %v1634 = vrot.slane %v79, %v1633
    %1635 = vset.pattern.permute.xlu0 0
    %1636 = vperm.xlu0 %1635, %v1614
    %v1637 = vpop.permute.xlu0 %1636
    %1639 = vset.pattern.permute.xlu0 0
    %1640 = vperm.xlu0 %1639, %v1618
    %v1641 = vpop.permute.xlu0 %1640
    %1643 = vset.pattern.permute.xlu0 0
    %1644 = vperm.xlu0 %1643, %v1622
    %v1645 = vpop.permute.xlu0 %1644
    %1647 = vset.pattern.permute.xlu0 0
    %1648 = vperm.xlu0 %1647, %v1626
    %v1649 = vpop.permute.xlu0 %1648
    %1651 = vset.pattern.permute.xlu0 0
    %1652 = vperm.xlu0 %1651, %v1630
    %v1653 = vpop.permute.xlu0 %1652
    %1655 = vset.pattern.permute.xlu0 0
    %1656 = vperm.xlu0 %1655, %v1634
    %v1657 = vpop.permute.xlu0 %1656
    %v1659 = vmul.f32 %v1637, %v1597
    %v1660 = vmul.f32 %v1637, %v1598
    %v1661 = vmul.f32 %v1637, %v1599
    %v1662 = vmul.f32 %v1637, %v1600
    %v1663 = vmul.f32 %v1637, %v969
    %v1664 = vmul.f32 %v1637, %v970
    %v1665 = vmul.f32 %v1637, %v971
    %v1666 = vmul.f32 %v1637, %v972
    %v1667 = vmul.f32 %v1637, %v1601
    %v1668 = vmul.f32 %v1637, %v1602
    %v1669 = vmul.f32 %v1637, %v1603
    %v1670 = vmul.f32 %v1637, %v1604
    %v1671 = vmul.f32 %v1641, %v1597
    %v1672 = vmul.f32 %v1641, %v1598
    %v1673 = vmul.f32 %v1641, %v1599
    %v1674 = vmul.f32 %v1641, %v1600
    %v1675 = vmul.f32 %v1641, %v969
    %v1676 = vmul.f32 %v1641, %v970
    %v1677 = vmul.f32 %v1641, %v971
    %v1678 = vmul.f32 %v1641, %v972
    %v1679 = vmul.f32 %v1641, %v1601
    %v1680 = vmul.f32 %v1641, %v1602
    %v1681 = vmul.f32 %v1641, %v1603
    %v1682 = vmul.f32 %v1641, %v1604
    %v1683 = vmul.f32 %v1645, %v1597
    %v1684 = vmul.f32 %v1645, %v1598
    %v1685 = vmul.f32 %v1645, %v1599
    %v1686 = vmul.f32 %v1645, %v1600
    %v1687 = vmul.f32 %v1645, %v969
    %v1688 = vmul.f32 %v1645, %v970
    %v1689 = vmul.f32 %v1645, %v971
    %v1690 = vmul.f32 %v1645, %v972
    %v1691 = vmul.f32 %v1645, %v1601
    %v1692 = vmul.f32 %v1645, %v1602
    %v1693 = vmul.f32 %v1645, %v1603
    %v1694 = vmul.f32 %v1645, %v1604
    %v1695 = vmul.f32 %v1649, %v1597
    %v1696 = vmul.f32 %v1649, %v1598
    %v1697 = vmul.f32 %v1649, %v1599
    %v1698 = vmul.f32 %v1649, %v1600
    %v1699 = vmul.f32 %v1649, %v969
    %v1700 = vmul.f32 %v1649, %v970
    %v1701 = vmul.f32 %v1649, %v971
    %v1702 = vmul.f32 %v1649, %v972
    %v1703 = vmul.f32 %v1649, %v1601
    %v1704 = vmul.f32 %v1649, %v1602
    %v1705 = vmul.f32 %v1649, %v1603
    %v1706 = vmul.f32 %v1649, %v1604
    %v1707 = vmul.f32 %v1653, %v1597
    %v1708 = vmul.f32 %v1653, %v1598
    %v1709 = vmul.f32 %v1653, %v1599
    %v1710 = vmul.f32 %v1653, %v1600
    %v1711 = vmul.f32 %v1653, %v969
    %v1712 = vmul.f32 %v1653, %v970
    %v1713 = vmul.f32 %v1653, %v971
    %v1714 = vmul.f32 %v1653, %v972
    %v1715 = vmul.f32 %v1653, %v1601
    %v1716 = vmul.f32 %v1653, %v1602
    %v1717 = vmul.f32 %v1653, %v1603
    %v1718 = vmul.f32 %v1653, %v1604
    %v1719 = vmul.f32 %v1657, %v1597
    %v1720 = vmul.f32 %v1657, %v1598
    %v1721 = vmul.f32 %v1657, %v1599
    %v1722 = vmul.f32 %v1657, %v1600
    %v1723 = vmul.f32 %v1657, %v969
    %v1724 = vmul.f32 %v1657, %v970
    %v1725 = vmul.f32 %v1657, %v971
    %v1726 = vmul.f32 %v1657, %v972
    %v1727 = vmul.f32 %v1657, %v1601
    %v1728 = vmul.f32 %v1657, %v1602
    %v1729 = vmul.f32 %v1657, %v1603
    %v1730 = vmul.f32 %v1657, %v1604
    %v1803 = vrot.slane %v1659, 1
    %v1804 = vrot.slane %v1663, 1
    %v1805 = vsel %vm308, %v1803, %v1804
    %v1806 = vrot.slane %v1660, 1
    %v1807 = vrot.slane %v1664, 1
    %v1808 = vsel %vm308, %v1806, %v1807
    %v1809 = vrot.slane %v1661, 1
    %v1810 = vrot.slane %v1665, 1
    %v1811 = vsel %vm308, %v1809, %v1810
    %v1812 = vrot.slane %v1662, 1
    %v1813 = vrot.slane %v1666, 1
    %v1814 = vsel %vm308, %v1812, %v1813
    %v1815 = vrot.slane %v1667, 1
    %v1816 = vsel %vm308, %v1804, %v1815
    %v1817 = vrot.slane %v1668, 1
    %v1818 = vsel %vm308, %v1807, %v1817
    %v1819 = vrot.slane %v1669, 1
    %v1820 = vsel %vm308, %v1810, %v1819
    %v1821 = vrot.slane %v1670, 1
    %v1822 = vsel %vm308, %v1813, %v1821
    %v1823 = vrot.slane %v1671, 1
    %v1824 = vrot.slane %v1675, 1
    %v1825 = vsel %vm308, %v1823, %v1824
    %v1826 = vrot.slane %v1672, 1
    %v1827 = vrot.slane %v1676, 1
    %v1828 = vsel %vm308, %v1826, %v1827
    %v1829 = vrot.slane %v1673, 1
    %v1830 = vrot.slane %v1677, 1
    %v1831 = vsel %vm308, %v1829, %v1830
    %v1832 = vrot.slane %v1674, 1
    %v1833 = vrot.slane %v1678, 1
    %v1834 = vsel %vm308, %v1832, %v1833
    %v1835 = vrot.slane %v1679, 1
    %v1836 = vsel %vm308, %v1824, %v1835
    %v1837 = vrot.slane %v1680, 1
    %v1838 = vsel %vm308, %v1827, %v1837
    %v1839 = vrot.slane %v1681, 1
    %v1840 = vsel %vm308, %v1830, %v1839
    %v1841 = vrot.slane %v1682, 1
    %v1842 = vsel %vm308, %v1833, %v1841
    %v1843 = vrot.slane %v1683, 1
    %v1844 = vrot.slane %v1687, 1
    %v1845 = vsel %vm308, %v1843, %v1844
    %v1846 = vrot.slane %v1684, 1
    %v1847 = vrot.slane %v1688, 1
    %v1848 = vsel %vm308, %v1846, %v1847
    %v1849 = vrot.slane %v1685, 1
    %v1850 = vrot.slane %v1689, 1
    %v1851 = vsel %vm308, %v1849, %v1850
    %v1852 = vrot.slane %v1686, 1
    %v1853 = vrot.slane %v1690, 1
    %v1854 = vsel %vm308, %v1852, %v1853
    %v1855 = vrot.slane %v1691, 1
    %v1856 = vsel %vm308, %v1844, %v1855
    %v1857 = vrot.slane %v1692, 1
    %v1858 = vsel %vm308, %v1847, %v1857
    %v1859 = vrot.slane %v1693, 1
    %v1860 = vsel %vm308, %v1850, %v1859
    %v1861 = vrot.slane %v1694, 1
    %v1862 = vsel %vm308, %v1853, %v1861
    %v1863 = vrot.slane %v1695, 1
    %v1864 = vrot.slane %v1699, 1
    %v1865 = vsel %vm308, %v1863, %v1864
    %v1866 = vrot.slane %v1696, 1
    %v1867 = vrot.slane %v1700, 1
    %v1868 = vsel %vm308, %v1866, %v1867
    %v1869 = vrot.slane %v1697, 1
    %v1870 = vrot.slane %v1701, 1
    %v1871 = vsel %vm308, %v1869, %v1870
    %v1872 = vrot.slane %v1698, 1
    %v1873 = vrot.slane %v1702, 1
    %v1874 = vsel %vm308, %v1872, %v1873
    %v1875 = vrot.slane %v1703, 1
    %v1876 = vsel %vm308, %v1864, %v1875
    %v1877 = vrot.slane %v1704, 1
    %v1878 = vsel %vm308, %v1867, %v1877
    %v1879 = vrot.slane %v1705, 1
    %v1880 = vsel %vm308, %v1870, %v1879
    %v1881 = vrot.slane %v1706, 1
    %v1882 = vsel %vm308, %v1873, %v1881
    %v1883 = vrot.slane %v1707, 1
    %v1884 = vrot.slane %v1711, 1
    %v1885 = vsel %vm308, %v1883, %v1884
    %v1886 = vrot.slane %v1708, 1
    %v1887 = vrot.slane %v1712, 1
    %v1888 = vsel %vm308, %v1886, %v1887
    %v1889 = vrot.slane %v1709, 1
    %v1890 = vrot.slane %v1713, 1
    %v1891 = vsel %vm308, %v1889, %v1890
    %v1892 = vrot.slane %v1710, 1
    %v1893 = vrot.slane %v1714, 1
    %v1894 = vsel %vm308, %v1892, %v1893
    %v1895 = vrot.slane %v1715, 1
    %v1896 = vsel %vm308, %v1884, %v1895
    %v1897 = vrot.slane %v1716, 1
    %v1898 = vsel %vm308, %v1887, %v1897
    %v1899 = vrot.slane %v1717, 1
    %v1900 = vsel %vm308, %v1890, %v1899
    %v1901 = vrot.slane %v1718, 1
    %v1902 = vsel %vm308, %v1893, %v1901
    %v1903 = vrot.slane %v1719, 1
    %v1904 = vrot.slane %v1723, 1
    %v1905 = vsel %vm308, %v1903, %v1904
    %v1906 = vrot.slane %v1720, 1
    %v1907 = vrot.slane %v1724, 1
    %v1908 = vsel %vm308, %v1906, %v1907
    %v1909 = vrot.slane %v1721, 1
    %v1910 = vrot.slane %v1725, 1
    %v1911 = vsel %vm308, %v1909, %v1910
    %v1912 = vrot.slane %v1722, 1
    %v1913 = vrot.slane %v1726, 1
    %v1914 = vsel %vm308, %v1912, %v1913
    %v1915 = vrot.slane %v1727, 1
    %v1916 = vsel %vm308, %v1904, %v1915
    %v1917 = vrot.slane %v1728, 1
    %v1918 = vsel %vm308, %v1907, %v1917
    %v1919 = vrot.slane %v1729, 1
    %v1920 = vsel %vm308, %v1910, %v1919
    %v1921 = vrot.slane %v1730, 1
    %v1922 = vsel %vm308, %v1913, %v1921
    %v1995 = vadd.f32 %v1525, %v1805
    %v1996 = vadd.f32 %v1526, %v1808
    %v1997 = vadd.f32 %v1527, %v1811
    %v1998 = vadd.f32 %v1528, %v1814
    %v1999 = vadd.f32 %v1529, %v1816
    %v2000 = vadd.f32 %v1530, %v1818
    %v2001 = vadd.f32 %v1531, %v1820
    %v2002 = vadd.f32 %v1532, %v1822
    %v2003 = vadd.f32 %v1533, %v1815
    %v2004 = vadd.f32 %v1534, %v1817
    %v2005 = vadd.f32 %v1535, %v1819
    %v2006 = vadd.f32 %v1536, %v1821
    %v2007 = vadd.f32 %v1537, %v1825
    %v2008 = vadd.f32 %v1538, %v1828
    %v2009 = vadd.f32 %v1539, %v1831
    %v2010 = vadd.f32 %v1540, %v1834
    %v2011 = vadd.f32 %v1541, %v1836
    %v2012 = vadd.f32 %v1542, %v1838
    %v2013 = vadd.f32 %v1543, %v1840
    %v2014 = vadd.f32 %v1544, %v1842
    %v2015 = vadd.f32 %v1545, %v1835
    %v2016 = vadd.f32 %v1546, %v1837
    %v2017 = vadd.f32 %v1547, %v1839
    %v2018 = vadd.f32 %v1548, %v1841
    %v2019 = vadd.f32 %v1549, %v1845
    %v2020 = vadd.f32 %v1550, %v1848
    %v2021 = vadd.f32 %v1551, %v1851
    %v2022 = vadd.f32 %v1552, %v1854
    %v2023 = vadd.f32 %v1553, %v1856
    %v2024 = vadd.f32 %v1554, %v1858
    %v2025 = vadd.f32 %v1555, %v1860
    %v2026 = vadd.f32 %v1556, %v1862
    %v2027 = vadd.f32 %v1557, %v1855
    %v2028 = vadd.f32 %v1558, %v1857
    %v2029 = vadd.f32 %v1559, %v1859
    %v2030 = vadd.f32 %v1560, %v1861
    %v2031 = vadd.f32 %v1561, %v1865
    %v2032 = vadd.f32 %v1562, %v1868
    %v2033 = vadd.f32 %v1563, %v1871
    %v2034 = vadd.f32 %v1564, %v1874
    %v2035 = vadd.f32 %v1565, %v1876
    %v2036 = vadd.f32 %v1566, %v1878
    %v2037 = vadd.f32 %v1567, %v1880
    %v2038 = vadd.f32 %v1568, %v1882
    %v2039 = vadd.f32 %v1569, %v1875
    %v2040 = vadd.f32 %v1570, %v1877
    %v2041 = vadd.f32 %v1571, %v1879
    %v2042 = vadd.f32 %v1572, %v1881
    %v2043 = vadd.f32 %v1573, %v1885
    %v2044 = vadd.f32 %v1574, %v1888
    %v2045 = vadd.f32 %v1575, %v1891
    %v2046 = vadd.f32 %v1576, %v1894
    %v2047 = vadd.f32 %v1577, %v1896
    %v2048 = vadd.f32 %v1578, %v1898
    %v2049 = vadd.f32 %v1579, %v1900
    %v2050 = vadd.f32 %v1580, %v1902
    %v2051 = vadd.f32 %v1581, %v1895
    %v2052 = vadd.f32 %v1582, %v1897
    %v2053 = vadd.f32 %v1583, %v1899
    %v2054 = vadd.f32 %v1584, %v1901
    %v2055 = vadd.f32 %v1585, %v1905
    %v2056 = vadd.f32 %v1586, %v1908
    %v2057 = vadd.f32 %v1587, %v1911
    %v2058 = vadd.f32 %v1588, %v1914
    %v2059 = vadd.f32 %v1589, %v1916
    %v2060 = vadd.f32 %v1590, %v1918
    %v2061 = vadd.f32 %v1591, %v1920
    %v2062 = vadd.f32 %v1592, %v1922
    %v2063 = vadd.f32 %v1593, %v1915
    %v2064 = vadd.f32 %v1594, %v1917
    %v2065 = vadd.f32 %v1595, %v1919
    %v2066 = vadd.f32 %v1596, %v1921
    %v2067 = vld [vmem:[%s1175] sm:$0xfe]
    %v2068 = vld [vmem:[%s1175 + $0x8] sm:$0xfe]
    %v2069 = vld [vmem:[%s1175 + $0x10] sm:$0xfe]
    %v2070 = vld [vmem:[%s1175 + $0x18] sm:$0xfe]
    %v2071 = vld [vmem:[%s1175 + $0x40] sm:$0x7f]
    %v2072 = vld [vmem:[%s1175 + $0x48] sm:$0x7f]
    %v2073 = vld [vmem:[%s1175 + $0x50] sm:$0x7f]
    %v2074 = vld [vmem:[%s1175 + $0x58] sm:$0x7f]
    %v2081 = vlaneseq
    %v2082 = vshrl.u32 %v2081, 7
    %v2083 = vsub.s32 0, %v2082
    %v2084 = vrot.slane %v80, %v2083
    %v2085 = vlaneseq
    %v2086 = vshrl.u32 %v2085, 7
    %v2087 = vsub.s32 0, %v2086
    %v2088 = vrot.slane %v81, %v2087
    %v2089 = vlaneseq
    %v2090 = vshrl.u32 %v2089, 7
    %v2091 = vsub.s32 0, %v2090
    %v2092 = vrot.slane %v82, %v2091
    %v2093 = vlaneseq
    %v2094 = vshrl.u32 %v2093, 7
    %v2095 = vsub.s32 0, %v2094
    %v2096 = vrot.slane %v83, %v2095
    %v2097 = vlaneseq
    %v2098 = vshrl.u32 %v2097, 7
    %v2099 = vsub.s32 0, %v2098
    %v2100 = vrot.slane %v84, %v2099
    %v2101 = vlaneseq
    %v2102 = vshrl.u32 %v2101, 7
    %v2103 = vsub.s32 0, %v2102
    %v2104 = vrot.slane %v85, %v2103
    %2105 = vset.pattern.permute.xlu0 0
    %2106 = vperm.xlu0 %2105, %v2084
    %v2107 = vpop.permute.xlu0 %2106
    %2109 = vset.pattern.permute.xlu0 0
    %2110 = vperm.xlu0 %2109, %v2088
    %v2111 = vpop.permute.xlu0 %2110
    %2113 = vset.pattern.permute.xlu0 0
    %2114 = vperm.xlu0 %2113, %v2092
    %v2115 = vpop.permute.xlu0 %2114
    %2117 = vset.pattern.permute.xlu0 0
    %2118 = vperm.xlu0 %2117, %v2096
    %v2119 = vpop.permute.xlu0 %2118
    %2121 = vset.pattern.permute.xlu0 0
    %2122 = vperm.xlu0 %2121, %v2100
    %v2123 = vpop.permute.xlu0 %2122
    %2125 = vset.pattern.permute.xlu0 0
    %2126 = vperm.xlu0 %2125, %v2104
    %v2127 = vpop.permute.xlu0 %2126
    %v2129 = vmul.f32 %v2107, %v2067
    %v2130 = vmul.f32 %v2107, %v2068
    %v2131 = vmul.f32 %v2107, %v2069
    %v2132 = vmul.f32 %v2107, %v2070
    %v2133 = vmul.f32 %v2107, %v1180
    %v2134 = vmul.f32 %v2107, %v1181
    %v2135 = vmul.f32 %v2107, %v1182
    %v2136 = vmul.f32 %v2107, %v1183
    %v2137 = vmul.f32 %v2107, %v2071
    %v2138 = vmul.f32 %v2107, %v2072
    %v2139 = vmul.f32 %v2107, %v2073
    %v2140 = vmul.f32 %v2107, %v2074
    %v2141 = vmul.f32 %v2111, %v2067
    %v2142 = vmul.f32 %v2111, %v2068
    %v2143 = vmul.f32 %v2111, %v2069
    %v2144 = vmul.f32 %v2111, %v2070
    %v2145 = vmul.f32 %v2111, %v1180
    %v2146 = vmul.f32 %v2111, %v1181
    %v2147 = vmul.f32 %v2111, %v1182
    %v2148 = vmul.f32 %v2111, %v1183
    %v2149 = vmul.f32 %v2111, %v2071
    %v2150 = vmul.f32 %v2111, %v2072
    %v2151 = vmul.f32 %v2111, %v2073
    %v2152 = vmul.f32 %v2111, %v2074
    %v2153 = vmul.f32 %v2115, %v2067
    %v2154 = vmul.f32 %v2115, %v2068
    %v2155 = vmul.f32 %v2115, %v2069
    %v2156 = vmul.f32 %v2115, %v2070
    %v2157 = vmul.f32 %v2115, %v1180
    %v2158 = vmul.f32 %v2115, %v1181
    %v2159 = vmul.f32 %v2115, %v1182
    %v2160 = vmul.f32 %v2115, %v1183
    %v2161 = vmul.f32 %v2115, %v2071
    %v2162 = vmul.f32 %v2115, %v2072
    %v2163 = vmul.f32 %v2115, %v2073
    %v2164 = vmul.f32 %v2115, %v2074
    %v2165 = vmul.f32 %v2119, %v2067
    %v2166 = vmul.f32 %v2119, %v2068
    %v2167 = vmul.f32 %v2119, %v2069
    %v2168 = vmul.f32 %v2119, %v2070
    %v2169 = vmul.f32 %v2119, %v1180
    %v2170 = vmul.f32 %v2119, %v1181
    %v2171 = vmul.f32 %v2119, %v1182
    %v2172 = vmul.f32 %v2119, %v1183
    %v2173 = vmul.f32 %v2119, %v2071
    %v2174 = vmul.f32 %v2119, %v2072
    %v2175 = vmul.f32 %v2119, %v2073
    %v2176 = vmul.f32 %v2119, %v2074
    %v2177 = vmul.f32 %v2123, %v2067
    %v2178 = vmul.f32 %v2123, %v2068
    %v2179 = vmul.f32 %v2123, %v2069
    %v2180 = vmul.f32 %v2123, %v2070
    %v2181 = vmul.f32 %v2123, %v1180
    %v2182 = vmul.f32 %v2123, %v1181
    %v2183 = vmul.f32 %v2123, %v1182
    %v2184 = vmul.f32 %v2123, %v1183
    %v2185 = vmul.f32 %v2123, %v2071
    %v2186 = vmul.f32 %v2123, %v2072
    %v2187 = vmul.f32 %v2123, %v2073
    %v2188 = vmul.f32 %v2123, %v2074
    %v2189 = vmul.f32 %v2127, %v2067
    %v2190 = vmul.f32 %v2127, %v2068
    %v2191 = vmul.f32 %v2127, %v2069
    %v2192 = vmul.f32 %v2127, %v2070
    %v2193 = vmul.f32 %v2127, %v1180
    %v2194 = vmul.f32 %v2127, %v1181
    %v2195 = vmul.f32 %v2127, %v1182
    %v2196 = vmul.f32 %v2127, %v1183
    %v2197 = vmul.f32 %v2127, %v2071
    %v2198 = vmul.f32 %v2127, %v2072
    %v2199 = vmul.f32 %v2127, %v2073
    %v2200 = vmul.f32 %v2127, %v2074
    %v2273 = vrot.slane %v2129, 1
    %v2274 = vrot.slane %v2133, 1
    %v2275 = vsel %vm308, %v2273, %v2274
    %v2276 = vrot.slane %v2130, 1
    %v2277 = vrot.slane %v2134, 1
    %v2278 = vsel %vm308, %v2276, %v2277
    %v2279 = vrot.slane %v2131, 1
    %v2280 = vrot.slane %v2135, 1
    %v2281 = vsel %vm308, %v2279, %v2280
    %v2282 = vrot.slane %v2132, 1
    %v2283 = vrot.slane %v2136, 1
    %v2284 = vsel %vm308, %v2282, %v2283
    %v2285 = vrot.slane %v2137, 1
    %v2286 = vsel %vm308, %v2274, %v2285
    %v2287 = vrot.slane %v2138, 1
    %v2288 = vsel %vm308, %v2277, %v2287
    %v2289 = vrot.slane %v2139, 1
    %v2290 = vsel %vm308, %v2280, %v2289
    %v2291 = vrot.slane %v2140, 1
    %v2292 = vsel %vm308, %v2283, %v2291
    %v2293 = vrot.slane %v2141, 1
    %v2294 = vrot.slane %v2145, 1
    %v2295 = vsel %vm308, %v2293, %v2294
    %v2296 = vrot.slane %v2142, 1
    %v2297 = vrot.slane %v2146, 1
    %v2298 = vsel %vm308, %v2296, %v2297
    %v2299 = vrot.slane %v2143, 1
    %v2300 = vrot.slane %v2147, 1
    %v2301 = vsel %vm308, %v2299, %v2300
    %v2302 = vrot.slane %v2144, 1
    %v2303 = vrot.slane %v2148, 1
    %v2304 = vsel %vm308, %v2302, %v2303
    %v2305 = vrot.slane %v2149, 1
    %v2306 = vsel %vm308, %v2294, %v2305
    %v2307 = vrot.slane %v2150, 1
    %v2308 = vsel %vm308, %v2297, %v2307
    %v2309 = vrot.slane %v2151, 1
    %v2310 = vsel %vm308, %v2300, %v2309
    %v2311 = vrot.slane %v2152, 1
    %v2312 = vsel %vm308, %v2303, %v2311
    %v2313 = vrot.slane %v2153, 1
    %v2314 = vrot.slane %v2157, 1
    %v2315 = vsel %vm308, %v2313, %v2314
    %v2316 = vrot.slane %v2154, 1
    %v2317 = vrot.slane %v2158, 1
    %v2318 = vsel %vm308, %v2316, %v2317
    %v2319 = vrot.slane %v2155, 1
    %v2320 = vrot.slane %v2159, 1
    %v2321 = vsel %vm308, %v2319, %v2320
    %v2322 = vrot.slane %v2156, 1
    %v2323 = vrot.slane %v2160, 1
    %v2324 = vsel %vm308, %v2322, %v2323
    %v2325 = vrot.slane %v2161, 1
    %v2326 = vsel %vm308, %v2314, %v2325
    %v2327 = vrot.slane %v2162, 1
    %v2328 = vsel %vm308, %v2317, %v2327
    %v2329 = vrot.slane %v2163, 1
    %v2330 = vsel %vm308, %v2320, %v2329
    %v2331 = vrot.slane %v2164, 1
    %v2332 = vsel %vm308, %v2323, %v2331
    %v2333 = vrot.slane %v2165, 1
    %v2334 = vrot.slane %v2169, 1
    %v2335 = vsel %vm308, %v2333, %v2334
    %v2336 = vrot.slane %v2166, 1
    %v2337 = vrot.slane %v2170, 1
    %v2338 = vsel %vm308, %v2336, %v2337
    %v2339 = vrot.slane %v2167, 1
    %v2340 = vrot.slane %v2171, 1
    %v2341 = vsel %vm308, %v2339, %v2340
    %v2342 = vrot.slane %v2168, 1
    %v2343 = vrot.slane %v2172, 1
    %v2344 = vsel %vm308, %v2342, %v2343
    %v2345 = vrot.slane %v2173, 1
    %v2346 = vsel %vm308, %v2334, %v2345
    %v2347 = vrot.slane %v2174, 1
    %v2348 = vsel %vm308, %v2337, %v2347
    %v2349 = vrot.slane %v2175, 1
    %v2350 = vsel %vm308, %v2340, %v2349
    %v2351 = vrot.slane %v2176, 1
    %v2352 = vsel %vm308, %v2343, %v2351
    %v2353 = vrot.slane %v2177, 1
    %v2354 = vrot.slane %v2181, 1
    %v2355 = vsel %vm308, %v2353, %v2354
    %v2356 = vrot.slane %v2178, 1
    %v2357 = vrot.slane %v2182, 1
    %v2358 = vsel %vm308, %v2356, %v2357
    %v2359 = vrot.slane %v2179, 1
    %v2360 = vrot.slane %v2183, 1
    %v2361 = vsel %vm308, %v2359, %v2360
    %v2362 = vrot.slane %v2180, 1
    %v2363 = vrot.slane %v2184, 1
    %v2364 = vsel %vm308, %v2362, %v2363
    %v2365 = vrot.slane %v2185, 1
    %v2366 = vsel %vm308, %v2354, %v2365
    %v2367 = vrot.slane %v2186, 1
    %v2368 = vsel %vm308, %v2357, %v2367
    %v2369 = vrot.slane %v2187, 1
    %v2370 = vsel %vm308, %v2360, %v2369
    %v2371 = vrot.slane %v2188, 1
    %v2372 = vsel %vm308, %v2363, %v2371
    %v2373 = vrot.slane %v2189, 1
    %v2374 = vrot.slane %v2193, 1
    %v2375 = vsel %vm308, %v2373, %v2374
    %v2376 = vrot.slane %v2190, 1
    %v2377 = vrot.slane %v2194, 1
    %v2378 = vsel %vm308, %v2376, %v2377
    %v2379 = vrot.slane %v2191, 1
    %v2380 = vrot.slane %v2195, 1
    %v2381 = vsel %vm308, %v2379, %v2380
    %v2382 = vrot.slane %v2192, 1
    %v2383 = vrot.slane %v2196, 1
    %v2384 = vsel %vm308, %v2382, %v2383
    %v2385 = vrot.slane %v2197, 1
    %v2386 = vsel %vm308, %v2374, %v2385
    %v2387 = vrot.slane %v2198, 1
    %v2388 = vsel %vm308, %v2377, %v2387
    %v2389 = vrot.slane %v2199, 1
    %v2390 = vsel %vm308, %v2380, %v2389
    %v2391 = vrot.slane %v2200, 1
    %v2392 = vsel %vm308, %v2383, %v2391
    %v2465 = vadd.f32 %v1995, %v2275
    %v2466 = vadd.f32 %v1996, %v2278
    %v2467 = vadd.f32 %v1997, %v2281
    %v2468 = vadd.f32 %v1998, %v2284
    %v2469 = vadd.f32 %v1999, %v2286
    %v2470 = vadd.f32 %v2000, %v2288
    %v2471 = vadd.f32 %v2001, %v2290
    %v2472 = vadd.f32 %v2002, %v2292
    %v2473 = vadd.f32 %v2003, %v2285
    %v2474 = vadd.f32 %v2004, %v2287
    %v2475 = vadd.f32 %v2005, %v2289
    %v2476 = vadd.f32 %v2006, %v2291
    %v2477 = vadd.f32 %v2007, %v2295
    %v2478 = vadd.f32 %v2008, %v2298
    %v2479 = vadd.f32 %v2009, %v2301
    %v2480 = vadd.f32 %v2010, %v2304
    %v2481 = vadd.f32 %v2011, %v2306
    %v2482 = vadd.f32 %v2012, %v2308
    %v2483 = vadd.f32 %v2013, %v2310
    %v2484 = vadd.f32 %v2014, %v2312
    %v2485 = vadd.f32 %v2015, %v2305
    %v2486 = vadd.f32 %v2016, %v2307
    %v2487 = vadd.f32 %v2017, %v2309
    %v2488 = vadd.f32 %v2018, %v2311
    %v2489 = vadd.f32 %v2019, %v2315
    %v2490 = vadd.f32 %v2020, %v2318
    %v2491 = vadd.f32 %v2021, %v2321
    %v2492 = vadd.f32 %v2022, %v2324
    %v2493 = vadd.f32 %v2023, %v2326
    %v2494 = vadd.f32 %v2024, %v2328
    %v2495 = vadd.f32 %v2025, %v2330
    %v2496 = vadd.f32 %v2026, %v2332
    %v2497 = vadd.f32 %v2027, %v2325
    %v2498 = vadd.f32 %v2028, %v2327
    %v2499 = vadd.f32 %v2029, %v2329
    %v2500 = vadd.f32 %v2030, %v2331
    %v2501 = vadd.f32 %v2031, %v2335
    %v2502 = vadd.f32 %v2032, %v2338
    %v2503 = vadd.f32 %v2033, %v2341
    %v2504 = vadd.f32 %v2034, %v2344
    %v2505 = vadd.f32 %v2035, %v2346
    %v2506 = vadd.f32 %v2036, %v2348
    %v2507 = vadd.f32 %v2037, %v2350
    %v2508 = vadd.f32 %v2038, %v2352
    %v2509 = vadd.f32 %v2039, %v2345
    %v2510 = vadd.f32 %v2040, %v2347
    %v2511 = vadd.f32 %v2041, %v2349
    %v2512 = vadd.f32 %v2042, %v2351
    %v2513 = vadd.f32 %v2043, %v2355
    %v2514 = vadd.f32 %v2044, %v2358
    %v2515 = vadd.f32 %v2045, %v2361
    %v2516 = vadd.f32 %v2046, %v2364
    %v2517 = vadd.f32 %v2047, %v2366
    %v2518 = vadd.f32 %v2048, %v2368
    %v2519 = vadd.f32 %v2049, %v2370
    %v2520 = vadd.f32 %v2050, %v2372
    %v2521 = vadd.f32 %v2051, %v2365
    %v2522 = vadd.f32 %v2052, %v2367
    %v2523 = vadd.f32 %v2053, %v2369
    %v2524 = vadd.f32 %v2054, %v2371
    %v2525 = vadd.f32 %v2055, %v2375
    %v2526 = vadd.f32 %v2056, %v2378
    %v2527 = vadd.f32 %v2057, %v2381
    %v2528 = vadd.f32 %v2058, %v2384
    %v2529 = vadd.f32 %v2059, %v2386
    %v2530 = vadd.f32 %v2060, %v2388
    %v2531 = vadd.f32 %v2061, %v2390
    %v2532 = vadd.f32 %v2062, %v2392
    %v2533 = vadd.f32 %v2063, %v2385
    %v2534 = vadd.f32 %v2064, %v2387
    %v2535 = vadd.f32 %v2065, %v2389
    %v2536 = vadd.f32 %v2066, %v2391
    %v2537 = vld [vmem:[%s1386] sm:$0xfe]
    %v2538 = vld [vmem:[%s1386 + $0x8] sm:$0xfe]
    %v2539 = vld [vmem:[%s1386 + $0x10] sm:$0xfe]
    %v2540 = vld [vmem:[%s1386 + $0x18] sm:$0xfe]
    %v2541 = vld [vmem:[%s1386 + $0x40] sm:$0x7f]
    %v2542 = vld [vmem:[%s1386 + $0x48] sm:$0x7f]
    %v2543 = vld [vmem:[%s1386 + $0x50] sm:$0x7f]
    %v2544 = vld [vmem:[%s1386 + $0x58] sm:$0x7f]
    %v2551 = vlaneseq
    %v2552 = vshrl.u32 %v2551, 7
    %v2553 = vsub.s32 0, %v2552
    %v2554 = vrot.slane %v86, %v2553
    %v2555 = vlaneseq
    %v2556 = vshrl.u32 %v2555, 7
    %v2557 = vsub.s32 0, %v2556
    %v2558 = vrot.slane %v87, %v2557
    %v2559 = vlaneseq
    %v2560 = vshrl.u32 %v2559, 7
    %v2561 = vsub.s32 0, %v2560
    %v2562 = vrot.slane %v88, %v2561
    %v2563 = vlaneseq
    %v2564 = vshrl.u32 %v2563, 7
    %v2565 = vsub.s32 0, %v2564
    %v2566 = vrot.slane %v89, %v2565
    %v2567 = vlaneseq
    %v2568 = vshrl.u32 %v2567, 7
    %v2569 = vsub.s32 0, %v2568
    %v2570 = vrot.slane %v90, %v2569
    %v2571 = vlaneseq
    %v2572 = vshrl.u32 %v2571, 7
    %v2573 = vsub.s32 0, %v2572
    %v2574 = vrot.slane %v91, %v2573
    %2575 = vset.pattern.permute.xlu0 0
    %2576 = vperm.xlu0 %2575, %v2554
    %v2577 = vpop.permute.xlu0 %2576
    %2579 = vset.pattern.permute.xlu0 0
    %2580 = vperm.xlu0 %2579, %v2558
    %v2581 = vpop.permute.xlu0 %2580
    %2583 = vset.pattern.permute.xlu0 0
    %2584 = vperm.xlu0 %2583, %v2562
    %v2585 = vpop.permute.xlu0 %2584
    %2587 = vset.pattern.permute.xlu0 0
    %2588 = vperm.xlu0 %2587, %v2566
    %v2589 = vpop.permute.xlu0 %2588
    %2591 = vset.pattern.permute.xlu0 0
    %2592 = vperm.xlu0 %2591, %v2570
    %v2593 = vpop.permute.xlu0 %2592
    %2595 = vset.pattern.permute.xlu0 0
    %2596 = vperm.xlu0 %2595, %v2574
    %v2597 = vpop.permute.xlu0 %2596
    %v2599 = vmul.f32 %v2577, %v2537
    %v2600 = vmul.f32 %v2577, %v2538
    %v2601 = vmul.f32 %v2577, %v2539
    %v2602 = vmul.f32 %v2577, %v2540
    %v2603 = vmul.f32 %v2577, %v1391
    %v2604 = vmul.f32 %v2577, %v1392
    %v2605 = vmul.f32 %v2577, %v1393
    %v2606 = vmul.f32 %v2577, %v1394
    %v2607 = vmul.f32 %v2577, %v2541
    %v2608 = vmul.f32 %v2577, %v2542
    %v2609 = vmul.f32 %v2577, %v2543
    %v2610 = vmul.f32 %v2577, %v2544
    %v2611 = vmul.f32 %v2581, %v2537
    %v2612 = vmul.f32 %v2581, %v2538
    %v2613 = vmul.f32 %v2581, %v2539
    %v2614 = vmul.f32 %v2581, %v2540
    %v2615 = vmul.f32 %v2581, %v1391
    %v2616 = vmul.f32 %v2581, %v1392
    %v2617 = vmul.f32 %v2581, %v1393
    %v2618 = vmul.f32 %v2581, %v1394
    %v2619 = vmul.f32 %v2581, %v2541
    %v2620 = vmul.f32 %v2581, %v2542
    %v2621 = vmul.f32 %v2581, %v2543
    %v2622 = vmul.f32 %v2581, %v2544
    %v2623 = vmul.f32 %v2585, %v2537
    %v2624 = vmul.f32 %v2585, %v2538
    %v2625 = vmul.f32 %v2585, %v2539
    %v2626 = vmul.f32 %v2585, %v2540
    %v2627 = vmul.f32 %v2585, %v1391
    %v2628 = vmul.f32 %v2585, %v1392
    %v2629 = vmul.f32 %v2585, %v1393
    %v2630 = vmul.f32 %v2585, %v1394
    %v2631 = vmul.f32 %v2585, %v2541
    %v2632 = vmul.f32 %v2585, %v2542
    %v2633 = vmul.f32 %v2585, %v2543
    %v2634 = vmul.f32 %v2585, %v2544
    %v2635 = vmul.f32 %v2589, %v2537
    %v2636 = vmul.f32 %v2589, %v2538
    %v2637 = vmul.f32 %v2589, %v2539
    %v2638 = vmul.f32 %v2589, %v2540
    %v2639 = vmul.f32 %v2589, %v1391
    %v2640 = vmul.f32 %v2589, %v1392
    %v2641 = vmul.f32 %v2589, %v1393
    %v2642 = vmul.f32 %v2589, %v1394
    %v2643 = vmul.f32 %v2589, %v2541
    %v2644 = vmul.f32 %v2589, %v2542
    %v2645 = vmul.f32 %v2589, %v2543
    %v2646 = vmul.f32 %v2589, %v2544
    %v2647 = vmul.f32 %v2593, %v2537
    %v2648 = vmul.f32 %v2593, %v2538
    %v2649 = vmul.f32 %v2593, %v2539
    %v2650 = vmul.f32 %v2593, %v2540
    %v2651 = vmul.f32 %v2593, %v1391
    %v2652 = vmul.f32 %v2593, %v1392
    %v2653 = vmul.f32 %v2593, %v1393
    %v2654 = vmul.f32 %v2593, %v1394
    %v2655 = vmul.f32 %v2593, %v2541
    %v2656 = vmul.f32 %v2593, %v2542
    %v2657 = vmul.f32 %v2593, %v2543
    %v2658 = vmul.f32 %v2593, %v2544
    %v2659 = vmul.f32 %v2597, %v2537
    %v2660 = vmul.f32 %v2597, %v2538
    %v2661 = vmul.f32 %v2597, %v2539
    %v2662 = vmul.f32 %v2597, %v2540
    %v2663 = vmul.f32 %v2597, %v1391
    %v2664 = vmul.f32 %v2597, %v1392
    %v2665 = vmul.f32 %v2597, %v1393
    %v2666 = vmul.f32 %v2597, %v1394
    %v2667 = vmul.f32 %v2597, %v2541
    %v2668 = vmul.f32 %v2597, %v2542
    %v2669 = vmul.f32 %v2597, %v2543
    %v2670 = vmul.f32 %v2597, %v2544
    %v2743 = vrot.slane %v2599, 1
    %v2744 = vrot.slane %v2603, 1
    %v2745 = vsel %vm308, %v2743, %v2744
    %v2746 = vrot.slane %v2600, 1
    %v2747 = vrot.slane %v2604, 1
    %v2748 = vsel %vm308, %v2746, %v2747
    %v2749 = vrot.slane %v2601, 1
    %v2750 = vrot.slane %v2605, 1
    %v2751 = vsel %vm308, %v2749, %v2750
    %v2752 = vrot.slane %v2602, 1
    %v2753 = vrot.slane %v2606, 1
    %v2754 = vsel %vm308, %v2752, %v2753
    %v2755 = vrot.slane %v2607, 1
    %v2756 = vsel %vm308, %v2744, %v2755
    %v2757 = vrot.slane %v2608, 1
    %v2758 = vsel %vm308, %v2747, %v2757
    %v2759 = vrot.slane %v2609, 1
    %v2760 = vsel %vm308, %v2750, %v2759
    %v2761 = vrot.slane %v2610, 1
    %v2762 = vsel %vm308, %v2753, %v2761
    %v2763 = vrot.slane %v2611, 1
    %v2764 = vrot.slane %v2615, 1
    %v2765 = vsel %vm308, %v2763, %v2764
    %v2766 = vrot.slane %v2612, 1
    %v2767 = vrot.slane %v2616, 1
    %v2768 = vsel %vm308, %v2766, %v2767
    %v2769 = vrot.slane %v2613, 1
    %v2770 = vrot.slane %v2617, 1
    %v2771 = vsel %vm308, %v2769, %v2770
    %v2772 = vrot.slane %v2614, 1
    %v2773 = vrot.slane %v2618, 1
    %v2774 = vsel %vm308, %v2772, %v2773
    %v2775 = vrot.slane %v2619, 1
    %v2776 = vsel %vm308, %v2764, %v2775
    %v2777 = vrot.slane %v2620, 1
    %v2778 = vsel %vm308, %v2767, %v2777
    %v2779 = vrot.slane %v2621, 1
    %v2780 = vsel %vm308, %v2770, %v2779
    %v2781 = vrot.slane %v2622, 1
    %v2782 = vsel %vm308, %v2773, %v2781
    %v2783 = vrot.slane %v2623, 1
    %v2784 = vrot.slane %v2627, 1
    %v2785 = vsel %vm308, %v2783, %v2784
    %v2786 = vrot.slane %v2624, 1
    %v2787 = vrot.slane %v2628, 1
    %v2788 = vsel %vm308, %v2786, %v2787
    %v2789 = vrot.slane %v2625, 1
    %v2790 = vrot.slane %v2629, 1
    %v2791 = vsel %vm308, %v2789, %v2790
    %v2792 = vrot.slane %v2626, 1
    %v2793 = vrot.slane %v2630, 1
    %v2794 = vsel %vm308, %v2792, %v2793
    %v2795 = vrot.slane %v2631, 1
    %v2796 = vsel %vm308, %v2784, %v2795
    %v2797 = vrot.slane %v2632, 1
    %v2798 = vsel %vm308, %v2787, %v2797
    %v2799 = vrot.slane %v2633, 1
    %v2800 = vsel %vm308, %v2790, %v2799
    %v2801 = vrot.slane %v2634, 1
    %v2802 = vsel %vm308, %v2793, %v2801
    %v2803 = vrot.slane %v2635, 1
    %v2804 = vrot.slane %v2639, 1
    %v2805 = vsel %vm308, %v2803, %v2804
    %v2806 = vrot.slane %v2636, 1
    %v2807 = vrot.slane %v2640, 1
    %v2808 = vsel %vm308, %v2806, %v2807
    %v2809 = vrot.slane %v2637, 1
    %v2810 = vrot.slane %v2641, 1
    %v2811 = vsel %vm308, %v2809, %v2810
    %v2812 = vrot.slane %v2638, 1
    %v2813 = vrot.slane %v2642, 1
    %v2814 = vsel %vm308, %v2812, %v2813
    %v2815 = vrot.slane %v2643, 1
    %v2816 = vsel %vm308, %v2804, %v2815
    %v2817 = vrot.slane %v2644, 1
    %v2818 = vsel %vm308, %v2807, %v2817
    %v2819 = vrot.slane %v2645, 1
    %v2820 = vsel %vm308, %v2810, %v2819
    %v2821 = vrot.slane %v2646, 1
    %v2822 = vsel %vm308, %v2813, %v2821
    %v2823 = vrot.slane %v2647, 1
    %v2824 = vrot.slane %v2651, 1
    %v2825 = vsel %vm308, %v2823, %v2824
    %v2826 = vrot.slane %v2648, 1
    %v2827 = vrot.slane %v2652, 1
    %v2828 = vsel %vm308, %v2826, %v2827
    %v2829 = vrot.slane %v2649, 1
    %v2830 = vrot.slane %v2653, 1
    %v2831 = vsel %vm308, %v2829, %v2830
    %v2832 = vrot.slane %v2650, 1
    %v2833 = vrot.slane %v2654, 1
    %v2834 = vsel %vm308, %v2832, %v2833
    %v2835 = vrot.slane %v2655, 1
    %v2836 = vsel %vm308, %v2824, %v2835
    %v2837 = vrot.slane %v2656, 1
    %v2838 = vsel %vm308, %v2827, %v2837
    %v2839 = vrot.slane %v2657, 1
    %v2840 = vsel %vm308, %v2830, %v2839
    %v2841 = vrot.slane %v2658, 1
    %v2842 = vsel %vm308, %v2833, %v2841
    %v2843 = vrot.slane %v2659, 1
    %v2844 = vrot.slane %v2663, 1
    %v2845 = vsel %vm308, %v2843, %v2844
    %v2846 = vrot.slane %v2660, 1
    %v2847 = vrot.slane %v2664, 1
    %v2848 = vsel %vm308, %v2846, %v2847
    %v2849 = vrot.slane %v2661, 1
    %v2850 = vrot.slane %v2665, 1
    %v2851 = vsel %vm308, %v2849, %v2850
    %v2852 = vrot.slane %v2662, 1
    %v2853 = vrot.slane %v2666, 1
    %v2854 = vsel %vm308, %v2852, %v2853
    %v2855 = vrot.slane %v2667, 1
    %v2856 = vsel %vm308, %v2844, %v2855
    %v2857 = vrot.slane %v2668, 1
    %v2858 = vsel %vm308, %v2847, %v2857
    %v2859 = vrot.slane %v2669, 1
    %v2860 = vsel %vm308, %v2850, %v2859
    %v2861 = vrot.slane %v2670, 1
    %v2862 = vsel %vm308, %v2853, %v2861
    %v2935 = vadd.f32 %v2465, %v2745
    %v2936 = vadd.f32 %v2466, %v2748
    %v2937 = vadd.f32 %v2467, %v2751
    %v2938 = vadd.f32 %v2468, %v2754
    %v2939 = vadd.f32 %v2469, %v2756
    %v2940 = vadd.f32 %v2470, %v2758
    %v2941 = vadd.f32 %v2471, %v2760
    %v2942 = vadd.f32 %v2472, %v2762
    %v2943 = vadd.f32 %v2473, %v2755
    %v2944 = vadd.f32 %v2474, %v2757
    %v2945 = vadd.f32 %v2475, %v2759
    %v2946 = vadd.f32 %v2476, %v2761
    %v2947 = vadd.f32 %v2477, %v2765
    %v2948 = vadd.f32 %v2478, %v2768
    %v2949 = vadd.f32 %v2479, %v2771
    %v2950 = vadd.f32 %v2480, %v2774
    %v2951 = vadd.f32 %v2481, %v2776
    %v2952 = vadd.f32 %v2482, %v2778
    %v2953 = vadd.f32 %v2483, %v2780
    %v2954 = vadd.f32 %v2484, %v2782
    %v2955 = vadd.f32 %v2485, %v2775
    %v2956 = vadd.f32 %v2486, %v2777
    %v2957 = vadd.f32 %v2487, %v2779
    %v2958 = vadd.f32 %v2488, %v2781
    %v2959 = vadd.f32 %v2489, %v2785
    %v2960 = vadd.f32 %v2490, %v2788
    %v2961 = vadd.f32 %v2491, %v2791
    %v2962 = vadd.f32 %v2492, %v2794
    %v2963 = vadd.f32 %v2493, %v2796
    %v2964 = vadd.f32 %v2494, %v2798
    %v2965 = vadd.f32 %v2495, %v2800
    %v2966 = vadd.f32 %v2496, %v2802
    %v2967 = vadd.f32 %v2497, %v2795
    %v2968 = vadd.f32 %v2498, %v2797
    %v2969 = vadd.f32 %v2499, %v2799
    %v2970 = vadd.f32 %v2500, %v2801
    %v2971 = vadd.f32 %v2501, %v2805
    %v2972 = vadd.f32 %v2502, %v2808
    %v2973 = vadd.f32 %v2503, %v2811
    %v2974 = vadd.f32 %v2504, %v2814
    %v2975 = vadd.f32 %v2505, %v2816
    %v2976 = vadd.f32 %v2506, %v2818
    %v2977 = vadd.f32 %v2507, %v2820
    %v2978 = vadd.f32 %v2508, %v2822
    %v2979 = vadd.f32 %v2509, %v2815
    %v2980 = vadd.f32 %v2510, %v2817
    %v2981 = vadd.f32 %v2511, %v2819
    %v2982 = vadd.f32 %v2512, %v2821
    %v2983 = vadd.f32 %v2513, %v2825
    %v2984 = vadd.f32 %v2514, %v2828
    %v2985 = vadd.f32 %v2515, %v2831
    %v2986 = vadd.f32 %v2516, %v2834
    %v2987 = vadd.f32 %v2517, %v2836
    %v2988 = vadd.f32 %v2518, %v2838
    %v2989 = vadd.f32 %v2519, %v2840
    %v2990 = vadd.f32 %v2520, %v2842
    %v2991 = vadd.f32 %v2521, %v2835
    %v2992 = vadd.f32 %v2522, %v2837
    %v2993 = vadd.f32 %v2523, %v2839
    %v2994 = vadd.f32 %v2524, %v2841
    %v2995 = vadd.f32 %v2525, %v2845
    %v2996 = vadd.f32 %v2526, %v2848
    %v2997 = vadd.f32 %v2527, %v2851
    %v2998 = vadd.f32 %v2528, %v2854
    %v2999 = vadd.f32 %v2529, %v2856
    %v3000 = vadd.f32 %v2530, %v2858
    %v3001 = vadd.f32 %v2531, %v2860
    %v3002 = vadd.f32 %v2532, %v2862
    %v3003 = vadd.f32 %v2533, %v2855
    %v3004 = vadd.f32 %v2534, %v2857
    %v3005 = vadd.f32 %v2535, %v2859
    %v3006 = vadd.f32 %v2536, %v2861
    %v3007 = vld [vmem:[#allocation2] sm:$0xfc]
    %v3008 = vld [vmem:[#allocation2 + $0x8] sm:$0xfc]
    %v3009 = vld [vmem:[#allocation2 + $0x10] sm:$0xfc]
    %v3010 = vld [vmem:[#allocation2 + $0x18] sm:$0xfc]
    %v3011 = vld [vmem:[#allocation2 + $0x40] sm:$0xff]
    %v3012 = vld [vmem:[#allocation2 + $0x48] sm:$0xff]
    %v3013 = vld [vmem:[#allocation2 + $0x50] sm:$0xff]
    %v3014 = vld [vmem:[#allocation2 + $0x58] sm:$0xff]
    %v3021 = vlaneseq
    %v3022 = vshrl.u32 %v3021, 7
    %v3023 = vsub.s32 0, %v3022
    %v3024 = vrot.slane %v92, %v3023
    %v3025 = vlaneseq
    %v3026 = vshrl.u32 %v3025, 7
    %v3027 = vsub.s32 0, %v3026
    %v3028 = vrot.slane %v93, %v3027
    %v3029 = vlaneseq
    %v3030 = vshrl.u32 %v3029, 7
    %v3031 = vsub.s32 0, %v3030
    %v3032 = vrot.slane %v94, %v3031
    %v3033 = vlaneseq
    %v3034 = vshrl.u32 %v3033, 7
    %v3035 = vsub.s32 0, %v3034
    %v3036 = vrot.slane %v95, %v3035
    %v3037 = vlaneseq
    %v3038 = vshrl.u32 %v3037, 7
    %v3039 = vsub.s32 0, %v3038
    %v3040 = vrot.slane %v96, %v3039
    %v3041 = vlaneseq
    %v3042 = vshrl.u32 %v3041, 7
    %v3043 = vsub.s32 0, %v3042
    %v3044 = vrot.slane %v97, %v3043
    %3045 = vset.pattern.permute.xlu0 0
    %3046 = vperm.xlu0 %3045, %v3024
    %v3047 = vpop.permute.xlu0 %3046
    %3049 = vset.pattern.permute.xlu0 0
    %3050 = vperm.xlu0 %3049, %v3028
    %v3051 = vpop.permute.xlu0 %3050
    %3053 = vset.pattern.permute.xlu0 0
    %3054 = vperm.xlu0 %3053, %v3032
    %v3055 = vpop.permute.xlu0 %3054
    %3057 = vset.pattern.permute.xlu0 0
    %3058 = vperm.xlu0 %3057, %v3036
    %v3059 = vpop.permute.xlu0 %3058
    %3061 = vset.pattern.permute.xlu0 0
    %3062 = vperm.xlu0 %3061, %v3040
    %v3063 = vpop.permute.xlu0 %3062
    %3065 = vset.pattern.permute.xlu0 0
    %3066 = vperm.xlu0 %3065, %v3044
    %v3067 = vpop.permute.xlu0 %3066
    %v3069 = vmul.f32 %v3047, %v3007
    %v3070 = vmul.f32 %v3047, %v3008
    %v3071 = vmul.f32 %v3047, %v3009
    %v3072 = vmul.f32 %v3047, %v3010
    %v3073 = vmul.f32 %v3047, %v969
    %v3074 = vmul.f32 %v3047, %v970
    %v3075 = vmul.f32 %v3047, %v971
    %v3076 = vmul.f32 %v3047, %v972
    %v3077 = vmul.f32 %v3047, %v3011
    %v3078 = vmul.f32 %v3047, %v3012
    %v3079 = vmul.f32 %v3047, %v3013
    %v3080 = vmul.f32 %v3047, %v3014
    %v3081 = vmul.f32 %v3051, %v3007
    %v3082 = vmul.f32 %v3051, %v3008
    %v3083 = vmul.f32 %v3051, %v3009
    %v3084 = vmul.f32 %v3051, %v3010
    %v3085 = vmul.f32 %v3051, %v969
    %v3086 = vmul.f32 %v3051, %v970
    %v3087 = vmul.f32 %v3051, %v971
    %v3088 = vmul.f32 %v3051, %v972
    %v3089 = vmul.f32 %v3051, %v3011
    %v3090 = vmul.f32 %v3051, %v3012
    %v3091 = vmul.f32 %v3051, %v3013
    %v3092 = vmul.f32 %v3051, %v3014
    %v3093 = vmul.f32 %v3055, %v3007
    %v3094 = vmul.f32 %v3055, %v3008
    %v3095 = vmul.f32 %v3055, %v3009
    %v3096 = vmul.f32 %v3055, %v3010
    %v3097 = vmul.f32 %v3055, %v969
    %v3098 = vmul.f32 %v3055, %v970
    %v3099 = vmul.f32 %v3055, %v971
    %v3100 = vmul.f32 %v3055, %v972
    %v3101 = vmul.f32 %v3055, %v3011
    %v3102 = vmul.f32 %v3055, %v3012
    %v3103 = vmul.f32 %v3055, %v3013
    %v3104 = vmul.f32 %v3055, %v3014
    %v3105 = vmul.f32 %v3059, %v3007
    %v3106 = vmul.f32 %v3059, %v3008
    %v3107 = vmul.f32 %v3059, %v3009
    %v3108 = vmul.f32 %v3059, %v3010
    %v3109 = vmul.f32 %v3059, %v969
    %v3110 = vmul.f32 %v3059, %v970
    %v3111 = vmul.f32 %v3059, %v971
    %v3112 = vmul.f32 %v3059, %v972
    %v3113 = vmul.f32 %v3059, %v3011
    %v3114 = vmul.f32 %v3059, %v3012
    %v3115 = vmul.f32 %v3059, %v3013
    %v3116 = vmul.f32 %v3059, %v3014
    %v3117 = vmul.f32 %v3063, %v3007
    %v3118 = vmul.f32 %v3063, %v3008
    %v3119 = vmul.f32 %v3063, %v3009
    %v3120 = vmul.f32 %v3063, %v3010
    %v3121 = vmul.f32 %v3063, %v969
    %v3122 = vmul.f32 %v3063, %v970
    %v3123 = vmul.f32 %v3063, %v971
    %v3124 = vmul.f32 %v3063, %v972
    %v3125 = vmul.f32 %v3063, %v3011
    %v3126 = vmul.f32 %v3063, %v3012
    %v3127 = vmul.f32 %v3063, %v3013
    %v3128 = vmul.f32 %v3063, %v3014
    %v3129 = vmul.f32 %v3067, %v3007
    %v3130 = vmul.f32 %v3067, %v3008
    %v3131 = vmul.f32 %v3067, %v3009
    %v3132 = vmul.f32 %v3067, %v3010
    %v3133 = vmul.f32 %v3067, %v969
    %v3134 = vmul.f32 %v3067, %v970
    %v3135 = vmul.f32 %v3067, %v971
    %v3136 = vmul.f32 %v3067, %v972
    %v3137 = vmul.f32 %v3067, %v3011
    %v3138 = vmul.f32 %v3067, %v3012
    %v3139 = vmul.f32 %v3067, %v3013
    %v3140 = vmul.f32 %v3067, %v3014
    %v3213 = vrot.slane %v3069, 2
    %v3214 = vrot.slane %v3073, 2
    %v3215 = vsel %vm540, %v3213, %v3214
    %v3216 = vrot.slane %v3070, 2
    %v3217 = vrot.slane %v3074, 2
    %v3218 = vsel %vm540, %v3216, %v3217
    %v3219 = vrot.slane %v3071, 2
    %v3220 = vrot.slane %v3075, 2
    %v3221 = vsel %vm540, %v3219, %v3220
    %v3222 = vrot.slane %v3072, 2
    %v3223 = vrot.slane %v3076, 2
    %v3224 = vsel %vm540, %v3222, %v3223
    %v3225 = vrot.slane %v3077, 2
    %v3226 = vsel %vm540, %v3214, %v3225
    %v3227 = vrot.slane %v3078, 2
    %v3228 = vsel %vm540, %v3217, %v3227
    %v3229 = vrot.slane %v3079, 2
    %v3230 = vsel %vm540, %v3220, %v3229
    %v3231 = vrot.slane %v3080, 2
    %v3232 = vsel %vm540, %v3223, %v3231
    %v3233 = vrot.slane %v3081, 2
    %v3234 = vrot.slane %v3085, 2
    %v3235 = vsel %vm540, %v3233, %v3234
    %v3236 = vrot.slane %v3082, 2
    %v3237 = vrot.slane %v3086, 2
    %v3238 = vsel %vm540, %v3236, %v3237
    %v3239 = vrot.slane %v3083, 2
    %v3240 = vrot.slane %v3087, 2
    %v3241 = vsel %vm540, %v3239, %v3240
    %v3242 = vrot.slane %v3084, 2
    %v3243 = vrot.slane %v3088, 2
    %v3244 = vsel %vm540, %v3242, %v3243
    %v3245 = vrot.slane %v3089, 2
    %v3246 = vsel %vm540, %v3234, %v3245
    %v3247 = vrot.slane %v3090, 2
    %v3248 = vsel %vm540, %v3237, %v3247
    %v3249 = vrot.slane %v3091, 2
    %v3250 = vsel %vm540, %v3240, %v3249
    %v3251 = vrot.slane %v3092, 2
    %v3252 = vsel %vm540, %v3243, %v3251
    %v3253 = vrot.slane %v3093, 2
    %v3254 = vrot.slane %v3097, 2
    %v3255 = vsel %vm540, %v3253, %v3254
    %v3256 = vrot.slane %v3094, 2
    %v3257 = vrot.slane %v3098, 2
    %v3258 = vsel %vm540, %v3256, %v3257
    %v3259 = vrot.slane %v3095, 2
    %v3260 = vrot.slane %v3099, 2
    %v3261 = vsel %vm540, %v3259, %v3260
    %v3262 = vrot.slane %v3096, 2
    %v3263 = vrot.slane %v3100, 2
    %v3264 = vsel %vm540, %v3262, %v3263
    %v3265 = vrot.slane %v3101, 2
    %v3266 = vsel %vm540, %v3254, %v3265
    %v3267 = vrot.slane %v3102, 2
    %v3268 = vsel %vm540, %v3257, %v3267
    %v3269 = vrot.slane %v3103, 2
    %v3270 = vsel %vm540, %v3260, %v3269
    %v3271 = vrot.slane %v3104, 2
    %v3272 = vsel %vm540, %v3263, %v3271
    %v3273 = vrot.slane %v3105, 2
    %v3274 = vrot.slane %v3109, 2
    %v3275 = vsel %vm540, %v3273, %v3274
    %v3276 = vrot.slane %v3106, 2
    %v3277 = vrot.slane %v3110, 2
    %v3278 = vsel %vm540, %v3276, %v3277
    %v3279 = vrot.slane %v3107, 2
    %v3280 = vrot.slane %v3111, 2
    %v3281 = vsel %vm540, %v3279, %v3280
    %v3282 = vrot.slane %v3108, 2
    %v3283 = vrot.slane %v3112, 2
    %v3284 = vsel %vm540, %v3282, %v3283
    %v3285 = vrot.slane %v3113, 2
    %v3286 = vsel %vm540, %v3274, %v3285
    %v3287 = vrot.slane %v3114, 2
    %v3288 = vsel %vm540, %v3277, %v3287
    %v3289 = vrot.slane %v3115, 2
    %v3290 = vsel %vm540, %v3280, %v3289
    %v3291 = vrot.slane %v3116, 2
    %v3292 = vsel %vm540, %v3283, %v3291
    %v3293 = vrot.slane %v3117, 2
    %v3294 = vrot.slane %v3121, 2
    %v3295 = vsel %vm540, %v3293, %v3294
    %v3296 = vrot.slane %v3118, 2
    %v3297 = vrot.slane %v3122, 2
    %v3298 = vsel %vm540, %v3296, %v3297
    %v3299 = vrot.slane %v3119, 2
    %v3300 = vrot.slane %v3123, 2
    %v3301 = vsel %vm540, %v3299, %v3300
    %v3302 = vrot.slane %v3120, 2
    %v3303 = vrot.slane %v3124, 2
    %v3304 = vsel %vm540, %v3302, %v3303
    %v3305 = vrot.slane %v3125, 2
    %v3306 = vsel %vm540, %v3294, %v3305
    %v3307 = vrot.slane %v3126, 2
    %v3308 = vsel %vm540, %v3297, %v3307
    %v3309 = vrot.slane %v3127, 2
    %v3310 = vsel %vm540, %v3300, %v3309
    %v3311 = vrot.slane %v3128, 2
    %v3312 = vsel %vm540, %v3303, %v3311
    %v3313 = vrot.slane %v3129, 2
    %v3314 = vrot.slane %v3133, 2
    %v3315 = vsel %vm540, %v3313, %v3314
    %v3316 = vrot.slane %v3130, 2
    %v3317 = vrot.slane %v3134, 2
    %v3318 = vsel %vm540, %v3316, %v3317
    %v3319 = vrot.slane %v3131, 2
    %v3320 = vrot.slane %v3135, 2
    %v3321 = vsel %vm540, %v3319, %v3320
    %v3322 = vrot.slane %v3132, 2
    %v3323 = vrot.slane %v3136, 2
    %v3324 = vsel %vm540, %v3322, %v3323
    %v3325 = vrot.slane %v3137, 2
    %v3326 = vsel %vm540, %v3314, %v3325
    %v3327 = vrot.slane %v3138, 2
    %v3328 = vsel %vm540, %v3317, %v3327
    %v3329 = vrot.slane %v3139, 2
    %v3330 = vsel %vm540, %v3320, %v3329
    %v3331 = vrot.slane %v3140, 2
    %v3332 = vsel %vm540, %v3323, %v3331
    %v3405 = vadd.f32 %v2935, %v3215
    %v3406 = vadd.f32 %v2936, %v3218
    %v3407 = vadd.f32 %v2937, %v3221
    %v3408 = vadd.f32 %v2938, %v3224
    %v3409 = vadd.f32 %v2939, %v3226
    %v3410 = vadd.f32 %v2940, %v3228
    %v3411 = vadd.f32 %v2941, %v3230
    %v3412 = vadd.f32 %v2942, %v3232
    %v3413 = vadd.f32 %v2943, %v3225
    %v3414 = vadd.f32 %v2944, %v3227
    %v3415 = vadd.f32 %v2945, %v3229
    %v3416 = vadd.f32 %v2946, %v3231
    %v3417 = vadd.f32 %v2947, %v3235
    %v3418 = vadd.f32 %v2948, %v3238
    %v3419 = vadd.f32 %v2949, %v3241
    %v3420 = vadd.f32 %v2950, %v3244
    %v3421 = vadd.f32 %v2951, %v3246
    %v3422 = vadd.f32 %v2952, %v3248
    %v3423 = vadd.f32 %v2953, %v3250
    %v3424 = vadd.f32 %v2954, %v3252
    %v3425 = vadd.f32 %v2955, %v3245
    %v3426 = vadd.f32 %v2956, %v3247
    %v3427 = vadd.f32 %v2957, %v3249
    %v3428 = vadd.f32 %v2958, %v3251
    %v3429 = vadd.f32 %v2959, %v3255
    %v3430 = vadd.f32 %v2960, %v3258
    %v3431 = vadd.f32 %v2961, %v3261
    %v3432 = vadd.f32 %v2962, %v3264
    %v3433 = vadd.f32 %v2963, %v3266
    %v3434 = vadd.f32 %v2964, %v3268
    %v3435 = vadd.f32 %v2965, %v3270
    %v3436 = vadd.f32 %v2966, %v3272
    %v3437 = vadd.f32 %v2967, %v3265
    %v3438 = vadd.f32 %v2968, %v3267
    %v3439 = vadd.f32 %v2969, %v3269
    %v3440 = vadd.f32 %v2970, %v3271
    %v3441 = vadd.f32 %v2971, %v3275
    %v3442 = vadd.f32 %v2972, %v3278
    %v3443 = vadd.f32 %v2973, %v3281
    %v3444 = vadd.f32 %v2974, %v3284
    %v3445 = vadd.f32 %v2975, %v3286
    %v3446 = vadd.f32 %v2976, %v3288
    %v3447 = vadd.f32 %v2977, %v3290
    %v3448 = vadd.f32 %v2978, %v3292
    %v3449 = vadd.f32 %v2979, %v3285
    %v3450 = vadd.f32 %v2980, %v3287
    %v3451 = vadd.f32 %v2981, %v3289
    %v3452 = vadd.f32 %v2982, %v3291
    %v3453 = vadd.f32 %v2983, %v3295
    %v3454 = vadd.f32 %v2984, %v3298
    %v3455 = vadd.f32 %v2985, %v3301
    %v3456 = vadd.f32 %v2986, %v3304
    %v3457 = vadd.f32 %v2987, %v3306
    %v3458 = vadd.f32 %v2988, %v3308
    %v3459 = vadd.f32 %v2989, %v3310
    %v3460 = vadd.f32 %v2990, %v3312
    %v3461 = vadd.f32 %v2991, %v3305
    %v3462 = vadd.f32 %v2992, %v3307
    %v3463 = vadd.f32 %v2993, %v3309
    %v3464 = vadd.f32 %v2994, %v3311
    %v3465 = vadd.f32 %v2995, %v3315
    %v3466 = vadd.f32 %v2996, %v3318
    %v3467 = vadd.f32 %v2997, %v3321
    %v3468 = vadd.f32 %v2998, %v3324
    %v3469 = vadd.f32 %v2999, %v3326
    %v3470 = vadd.f32 %v3000, %v3328
    %v3471 = vadd.f32 %v3001, %v3330
    %v3472 = vadd.f32 %v3002, %v3332
    %v3473 = vadd.f32 %v3003, %v3325
    %v3474 = vadd.f32 %v3004, %v3327
    %v3475 = vadd.f32 %v3005, %v3329
    %v3476 = vadd.f32 %v3006, %v3331
    %v3477 = vld [vmem:[%s1175] sm:$0xfc]
    %v3478 = vld [vmem:[%s1175 + $0x8] sm:$0xfc]
    %v3479 = vld [vmem:[%s1175 + $0x10] sm:$0xfc]
    %v3480 = vld [vmem:[%s1175 + $0x18] sm:$0xfc]
    %v3481 = vld [vmem:[%s1175 + $0x40] sm:$0xff]
    %v3482 = vld [vmem:[%s1175 + $0x48] sm:$0xff]
    %v3483 = vld [vmem:[%s1175 + $0x50] sm:$0xff]
    %v3484 = vld [vmem:[%s1175 + $0x58] sm:$0xff]
    %v3491 = vlaneseq
    %v3492 = vshrl.u32 %v3491, 7
    %v3493 = vsub.s32 0, %v3492
    %v3494 = vrot.slane %v98, %v3493
    %v3495 = vlaneseq
    %v3496 = vshrl.u32 %v3495, 7
    %v3497 = vsub.s32 0, %v3496
    %v3498 = vrot.slane %v99, %v3497
    %v3499 = vlaneseq
    %v3500 = vshrl.u32 %v3499, 7
    %v3501 = vsub.s32 0, %v3500
    %v3502 = vrot.slane %v100, %v3501
    %v3503 = vlaneseq
    %v3504 = vshrl.u32 %v3503, 7
    %v3505 = vsub.s32 0, %v3504
    %v3506 = vrot.slane %v101, %v3505
    %v3507 = vlaneseq
    %v3508 = vshrl.u32 %v3507, 7
    %v3509 = vsub.s32 0, %v3508
    %v3510 = vrot.slane %v102, %v3509
    %v3511 = vlaneseq
    %v3512 = vshrl.u32 %v3511, 7
    %v3513 = vsub.s32 0, %v3512
    %v3514 = vrot.slane %v103, %v3513
    %3515 = vset.pattern.permute.xlu0 0
    %3516 = vperm.xlu0 %3515, %v3494
    %v3517 = vpop.permute.xlu0 %3516
    %3519 = vset.pattern.permute.xlu0 0
    %3520 = vperm.xlu0 %3519, %v3498
    %v3521 = vpop.permute.xlu0 %3520
    %3523 = vset.pattern.permute.xlu0 0
    %3524 = vperm.xlu0 %3523, %v3502
    %v3525 = vpop.permute.xlu0 %3524
    %3527 = vset.pattern.permute.xlu0 0
    %3528 = vperm.xlu0 %3527, %v3506
    %v3529 = vpop.permute.xlu0 %3528
    %3531 = vset.pattern.permute.xlu0 0
    %3532 = vperm.xlu0 %3531, %v3510
    %v3533 = vpop.permute.xlu0 %3532
    %3535 = vset.pattern.permute.xlu0 0
    %3536 = vperm.xlu0 %3535, %v3514
    %v3537 = vpop.permute.xlu0 %3536
    %v3539 = vmul.f32 %v3517, %v3477
    %v3540 = vmul.f32 %v3517, %v3478
    %v3541 = vmul.f32 %v3517, %v3479
    %v3542 = vmul.f32 %v3517, %v3480
    %v3543 = vmul.f32 %v3517, %v1180
    %v3544 = vmul.f32 %v3517, %v1181
    %v3545 = vmul.f32 %v3517, %v1182
    %v3546 = vmul.f32 %v3517, %v1183
    %v3547 = vmul.f32 %v3517, %v3481
    %v3548 = vmul.f32 %v3517, %v3482
    %v3549 = vmul.f32 %v3517, %v3483
    %v3550 = vmul.f32 %v3517, %v3484
    %v3551 = vmul.f32 %v3521, %v3477
    %v3552 = vmul.f32 %v3521, %v3478
    %v3553 = vmul.f32 %v3521, %v3479
    %v3554 = vmul.f32 %v3521, %v3480
    %v3555 = vmul.f32 %v3521, %v1180
    %v3556 = vmul.f32 %v3521, %v1181
    %v3557 = vmul.f32 %v3521, %v1182
    %v3558 = vmul.f32 %v3521, %v1183
    %v3559 = vmul.f32 %v3521, %v3481
    %v3560 = vmul.f32 %v3521, %v3482
    %v3561 = vmul.f32 %v3521, %v3483
    %v3562 = vmul.f32 %v3521, %v3484
    %v3563 = vmul.f32 %v3525, %v3477
    %v3564 = vmul.f32 %v3525, %v3478
    %v3565 = vmul.f32 %v3525, %v3479
    %v3566 = vmul.f32 %v3525, %v3480
    %v3567 = vmul.f32 %v3525, %v1180
    %v3568 = vmul.f32 %v3525, %v1181
    %v3569 = vmul.f32 %v3525, %v1182
    %v3570 = vmul.f32 %v3525, %v1183
    %v3571 = vmul.f32 %v3525, %v3481
    %v3572 = vmul.f32 %v3525, %v3482
    %v3573 = vmul.f32 %v3525, %v3483
    %v3574 = vmul.f32 %v3525, %v3484
    %v3575 = vmul.f32 %v3529, %v3477
    %v3576 = vmul.f32 %v3529, %v3478
    %v3577 = vmul.f32 %v3529, %v3479
    %v3578 = vmul.f32 %v3529, %v3480
    %v3579 = vmul.f32 %v3529, %v1180
    %v3580 = vmul.f32 %v3529, %v1181
    %v3581 = vmul.f32 %v3529, %v1182
    %v3582 = vmul.f32 %v3529, %v1183
    %v3583 = vmul.f32 %v3529, %v3481
    %v3584 = vmul.f32 %v3529, %v3482
    %v3585 = vmul.f32 %v3529, %v3483
    %v3586 = vmul.f32 %v3529, %v3484
    %v3587 = vmul.f32 %v3533, %v3477
    %v3588 = vmul.f32 %v3533, %v3478
    %v3589 = vmul.f32 %v3533, %v3479
    %v3590 = vmul.f32 %v3533, %v3480
    %v3591 = vmul.f32 %v3533, %v1180
    %v3592 = vmul.f32 %v3533, %v1181
    %v3593 = vmul.f32 %v3533, %v1182
    %v3594 = vmul.f32 %v3533, %v1183
    %v3595 = vmul.f32 %v3533, %v3481
    %v3596 = vmul.f32 %v3533, %v3482
    %v3597 = vmul.f32 %v3533, %v3483
    %v3598 = vmul.f32 %v3533, %v3484
    %v3599 = vmul.f32 %v3537, %v3477
    %v3600 = vmul.f32 %v3537, %v3478
    %v3601 = vmul.f32 %v3537, %v3479
    %v3602 = vmul.f32 %v3537, %v3480
    %v3603 = vmul.f32 %v3537, %v1180
    %v3604 = vmul.f32 %v3537, %v1181
    %v3605 = vmul.f32 %v3537, %v1182
    %v3606 = vmul.f32 %v3537, %v1183
    %v3607 = vmul.f32 %v3537, %v3481
    %v3608 = vmul.f32 %v3537, %v3482
    %v3609 = vmul.f32 %v3537, %v3483
    %v3610 = vmul.f32 %v3537, %v3484
    %v3683 = vrot.slane %v3539, 2
    %v3684 = vrot.slane %v3543, 2
    %v3685 = vsel %vm540, %v3683, %v3684
    %v3686 = vrot.slane %v3540, 2
    %v3687 = vrot.slane %v3544, 2
    %v3688 = vsel %vm540, %v3686, %v3687
    %v3689 = vrot.slane %v3541, 2
    %v3690 = vrot.slane %v3545, 2
    %v3691 = vsel %vm540, %v3689, %v3690
    %v3692 = vrot.slane %v3542, 2
    %v3693 = vrot.slane %v3546, 2
    %v3694 = vsel %vm540, %v3692, %v3693
    %v3695 = vrot.slane %v3547, 2
    %v3696 = vsel %vm540, %v3684, %v3695
    %v3697 = vrot.slane %v3548, 2
    %v3698 = vsel %vm540, %v3687, %v3697
    %v3699 = vrot.slane %v3549, 2
    %v3700 = vsel %vm540, %v3690, %v3699
    %v3701 = vrot.slane %v3550, 2
    %v3702 = vsel %vm540, %v3693, %v3701
    %v3703 = vrot.slane %v3551, 2
    %v3704 = vrot.slane %v3555, 2
    %v3705 = vsel %vm540, %v3703, %v3704
    %v3706 = vrot.slane %v3552, 2
    %v3707 = vrot.slane %v3556, 2
    %v3708 = vsel %vm540, %v3706, %v3707
    %v3709 = vrot.slane %v3553, 2
    %v3710 = vrot.slane %v3557, 2
    %v3711 = vsel %vm540, %v3709, %v3710
    %v3712 = vrot.slane %v3554, 2
    %v3713 = vrot.slane %v3558, 2
    %v3714 = vsel %vm540, %v3712, %v3713
    %v3715 = vrot.slane %v3559, 2
    %v3716 = vsel %vm540, %v3704, %v3715
    %v3717 = vrot.slane %v3560, 2
    %v3718 = vsel %vm540, %v3707, %v3717
    %v3719 = vrot.slane %v3561, 2
    %v3720 = vsel %vm540, %v3710, %v3719
    %v3721 = vrot.slane %v3562, 2
    %v3722 = vsel %vm540, %v3713, %v3721
    %v3723 = vrot.slane %v3563, 2
    %v3724 = vrot.slane %v3567, 2
    %v3725 = vsel %vm540, %v3723, %v3724
    %v3726 = vrot.slane %v3564, 2
    %v3727 = vrot.slane %v3568, 2
    %v3728 = vsel %vm540, %v3726, %v3727
    %v3729 = vrot.slane %v3565, 2
    %v3730 = vrot.slane %v3569, 2
    %v3731 = vsel %vm540, %v3729, %v3730
    %v3732 = vrot.slane %v3566, 2
    %v3733 = vrot.slane %v3570, 2
    %v3734 = vsel %vm540, %v3732, %v3733
    %v3735 = vrot.slane %v3571, 2
    %v3736 = vsel %vm540, %v3724, %v3735
    %v3737 = vrot.slane %v3572, 2
    %v3738 = vsel %vm540, %v3727, %v3737
    %v3739 = vrot.slane %v3573, 2
    %v3740 = vsel %vm540, %v3730, %v3739
    %v3741 = vrot.slane %v3574, 2
    %v3742 = vsel %vm540, %v3733, %v3741
    %v3743 = vrot.slane %v3575, 2
    %v3744 = vrot.slane %v3579, 2
    %v3745 = vsel %vm540, %v3743, %v3744
    %v3746 = vrot.slane %v3576, 2
    %v3747 = vrot.slane %v3580, 2
    %v3748 = vsel %vm540, %v3746, %v3747
    %v3749 = vrot.slane %v3577, 2
    %v3750 = vrot.slane %v3581, 2
    %v3751 = vsel %vm540, %v3749, %v3750
    %v3752 = vrot.slane %v3578, 2
    %v3753 = vrot.slane %v3582, 2
    %v3754 = vsel %vm540, %v3752, %v3753
    %v3755 = vrot.slane %v3583, 2
    %v3756 = vsel %vm540, %v3744, %v3755
    %v3757 = vrot.slane %v3584, 2
    %v3758 = vsel %vm540, %v3747, %v3757
    %v3759 = vrot.slane %v3585, 2
    %v3760 = vsel %vm540, %v3750, %v3759
    %v3761 = vrot.slane %v3586, 2
    %v3762 = vsel %vm540, %v3753, %v3761
    %v3763 = vrot.slane %v3587, 2
    %v3764 = vrot.slane %v3591, 2
    %v3765 = vsel %vm540, %v3763, %v3764
    %v3766 = vrot.slane %v3588, 2
    %v3767 = vrot.slane %v3592, 2
    %v3768 = vsel %vm540, %v3766, %v3767
    %v3769 = vrot.slane %v3589, 2
    %v3770 = vrot.slane %v3593, 2
    %v3771 = vsel %vm540, %v3769, %v3770
    %v3772 = vrot.slane %v3590, 2
    %v3773 = vrot.slane %v3594, 2
    %v3774 = vsel %vm540, %v3772, %v3773
    %v3775 = vrot.slane %v3595, 2
    %v3776 = vsel %vm540, %v3764, %v3775
    %v3777 = vrot.slane %v3596, 2
    %v3778 = vsel %vm540, %v3767, %v3777
    %v3779 = vrot.slane %v3597, 2
    %v3780 = vsel %vm540, %v3770, %v3779
    %v3781 = vrot.slane %v3598, 2
    %v3782 = vsel %vm540, %v3773, %v3781
    %v3783 = vrot.slane %v3599, 2
    %v3784 = vrot.slane %v3603, 2
    %v3785 = vsel %vm540, %v3783, %v3784
    %v3786 = vrot.slane %v3600, 2
    %v3787 = vrot.slane %v3604, 2
    %v3788 = vsel %vm540, %v3786, %v3787
    %v3789 = vrot.slane %v3601, 2
    %v3790 = vrot.slane %v3605, 2
    %v3791 = vsel %vm540, %v3789, %v3790
    %v3792 = vrot.slane %v3602, 2
    %v3793 = vrot.slane %v3606, 2
    %v3794 = vsel %vm540, %v3792, %v3793
    %v3795 = vrot.slane %v3607, 2
    %v3796 = vsel %vm540, %v3784, %v3795
    %v3797 = vrot.slane %v3608, 2
    %v3798 = vsel %vm540, %v3787, %v3797
    %v3799 = vrot.slane %v3609, 2
    %v3800 = vsel %vm540, %v3790, %v3799
    %v3801 = vrot.slane %v3610, 2
    %v3802 = vsel %vm540, %v3793, %v3801
    %v3875 = vadd.f32 %v3405, %v3685
    %v3876 = vadd.f32 %v3406, %v3688
    %v3877 = vadd.f32 %v3407, %v3691
    %v3878 = vadd.f32 %v3408, %v3694
    %v3879 = vadd.f32 %v3409, %v3696
    %v3880 = vadd.f32 %v3410, %v3698
    %v3881 = vadd.f32 %v3411, %v3700
    %v3882 = vadd.f32 %v3412, %v3702
    %v3883 = vadd.f32 %v3413, %v3695
    %v3884 = vadd.f32 %v3414, %v3697
    %v3885 = vadd.f32 %v3415, %v3699
    %v3886 = vadd.f32 %v3416, %v3701
    %v3887 = vadd.f32 %v3417, %v3705
    %v3888 = vadd.f32 %v3418, %v3708
    %v3889 = vadd.f32 %v3419, %v3711
    %v3890 = vadd.f32 %v3420, %v3714
    %v3891 = vadd.f32 %v3421, %v3716
    %v3892 = vadd.f32 %v3422, %v3718
    %v3893 = vadd.f32 %v3423, %v3720
    %v3894 = vadd.f32 %v3424, %v3722
    %v3895 = vadd.f32 %v3425, %v3715
    %v3896 = vadd.f32 %v3426, %v3717
    %v3897 = vadd.f32 %v3427, %v3719
    %v3898 = vadd.f32 %v3428, %v3721
    %v3899 = vadd.f32 %v3429, %v3725
    %v3900 = vadd.f32 %v3430, %v3728
    %v3901 = vadd.f32 %v3431, %v3731
    %v3902 = vadd.f32 %v3432, %v3734
    %v3903 = vadd.f32 %v3433, %v3736
    %v3904 = vadd.f32 %v3434, %v3738
    %v3905 = vadd.f32 %v3435, %v3740
    %v3906 = vadd.f32 %v3436, %v3742
    %v3907 = vadd.f32 %v3437, %v3735
    %v3908 = vadd.f32 %v3438, %v3737
    %v3909 = vadd.f32 %v3439, %v3739
    %v3910 = vadd.f32 %v3440, %v3741
    %v3911 = vadd.f32 %v3441, %v3745
    %v3912 = vadd.f32 %v3442, %v3748
    %v3913 = vadd.f32 %v3443, %v3751
    %v3914 = vadd.f32 %v3444, %v3754
    %v3915 = vadd.f32 %v3445, %v3756
    %v3916 = vadd.f32 %v3446, %v3758
    %v3917 = vadd.f32 %v3447, %v3760
    %v3918 = vadd.f32 %v3448, %v3762
    %v3919 = vadd.f32 %v3449, %v3755
    %v3920 = vadd.f32 %v3450, %v3757
    %v3921 = vadd.f32 %v3451, %v3759
    %v3922 = vadd.f32 %v3452, %v3761
    %v3923 = vadd.f32 %v3453, %v3765
    %v3924 = vadd.f32 %v3454, %v3768
    %v3925 = vadd.f32 %v3455, %v3771
    %v3926 = vadd.f32 %v3456, %v3774
    %v3927 = vadd.f32 %v3457, %v3776
    %v3928 = vadd.f32 %v3458, %v3778
    %v3929 = vadd.f32 %v3459, %v3780
    %v3930 = vadd.f32 %v3460, %v3782
    %v3931 = vadd.f32 %v3461, %v3775
    %v3932 = vadd.f32 %v3462, %v3777
    %v3933 = vadd.f32 %v3463, %v3779
    %v3934 = vadd.f32 %v3464, %v3781
    %v3935 = vadd.f32 %v3465, %v3785
    %v3936 = vadd.f32 %v3466, %v3788
    %v3937 = vadd.f32 %v3467, %v3791
    %v3938 = vadd.f32 %v3468, %v3794
    %v3939 = vadd.f32 %v3469, %v3796
    %v3940 = vadd.f32 %v3470, %v3798
    %v3941 = vadd.f32 %v3471, %v3800
    %v3942 = vadd.f32 %v3472, %v3802
    %v3943 = vadd.f32 %v3473, %v3795
    %v3944 = vadd.f32 %v3474, %v3797
    %v3945 = vadd.f32 %v3475, %v3799
    %v3946 = vadd.f32 %v3476, %v3801
    %v3947 = vld [vmem:[%s1386] sm:$0xfc]
    %v3948 = vld [vmem:[%s1386 + $0x8] sm:$0xfc]
    %v3949 = vld [vmem:[%s1386 + $0x10] sm:$0xfc]
    %v3950 = vld [vmem:[%s1386 + $0x18] sm:$0xfc]
    %v3951 = vld [vmem:[%s1386 + $0x40] sm:$0xff]
    %v3952 = vld [vmem:[%s1386 + $0x48] sm:$0xff]
    %v3953 = vld [vmem:[%s1386 + $0x50] sm:$0xff]
    %v3954 = vld [vmem:[%s1386 + $0x58] sm:$0xff]
    %v3961 = vlaneseq
    %v3962 = vshrl.u32 %v3961, 7
    %v3963 = vsub.s32 0, %v3962
    %v3964 = vrot.slane %v104, %v3963
    %v3965 = vlaneseq
    %v3966 = vshrl.u32 %v3965, 7
    %v3967 = vsub.s32 0, %v3966
    %v3968 = vrot.slane %v105, %v3967
    %v3969 = vlaneseq
    %v3970 = vshrl.u32 %v3969, 7
    %v3971 = vsub.s32 0, %v3970
    %v3972 = vrot.slane %v106, %v3971
    %v3973 = vlaneseq
    %v3974 = vshrl.u32 %v3973, 7
    %v3975 = vsub.s32 0, %v3974
    %v3976 = vrot.slane %v107, %v3975
    %v3977 = vlaneseq
    %v3978 = vshrl.u32 %v3977, 7
    %v3979 = vsub.s32 0, %v3978
    %v3980 = vrot.slane %v108, %v3979
    %v3981 = vlaneseq
    %v3982 = vshrl.u32 %v3981, 7
    %v3983 = vsub.s32 0, %v3982
    %v3984 = vrot.slane %v109, %v3983
    %3985 = vset.pattern.permute.xlu0 0
    %3986 = vperm.xlu0 %3985, %v3964
    %v3987 = vpop.permute.xlu0 %3986
    %3989 = vset.pattern.permute.xlu0 0
    %3990 = vperm.xlu0 %3989, %v3968
    %v3991 = vpop.permute.xlu0 %3990
    %3993 = vset.pattern.permute.xlu0 0
    %3994 = vperm.xlu0 %3993, %v3972
    %v3995 = vpop.permute.xlu0 %3994
    %3997 = vset.pattern.permute.xlu0 0
    %3998 = vperm.xlu0 %3997, %v3976
    %v3999 = vpop.permute.xlu0 %3998
    %4001 = vset.pattern.permute.xlu0 0
    %4002 = vperm.xlu0 %4001, %v3980
    %v4003 = vpop.permute.xlu0 %4002
    %4005 = vset.pattern.permute.xlu0 0
    %4006 = vperm.xlu0 %4005, %v3984
    %v4007 = vpop.permute.xlu0 %4006
    %v4009 = vmul.f32 %v3987, %v3947
    %v4010 = vmul.f32 %v3987, %v3948
    %v4011 = vmul.f32 %v3987, %v3949
    %v4012 = vmul.f32 %v3987, %v3950
    %v4013 = vmul.f32 %v3987, %v1391
    %v4014 = vmul.f32 %v3987, %v1392
    %v4015 = vmul.f32 %v3987, %v1393
    %v4016 = vmul.f32 %v3987, %v1394
    %v4017 = vmul.f32 %v3987, %v3951
    %v4018 = vmul.f32 %v3987, %v3952
    %v4019 = vmul.f32 %v3987, %v3953
    %v4020 = vmul.f32 %v3987, %v3954
    %v4021 = vmul.f32 %v3991, %v3947
    %v4022 = vmul.f32 %v3991, %v3948
    %v4023 = vmul.f32 %v3991, %v3949
    %v4024 = vmul.f32 %v3991, %v3950
    %v4025 = vmul.f32 %v3991, %v1391
    %v4026 = vmul.f32 %v3991, %v1392
    %v4027 = vmul.f32 %v3991, %v1393
    %v4028 = vmul.f32 %v3991, %v1394
    %v4029 = vmul.f32 %v3991, %v3951
    %v4030 = vmul.f32 %v3991, %v3952
    %v4031 = vmul.f32 %v3991, %v3953
    %v4032 = vmul.f32 %v3991, %v3954
    %v4033 = vmul.f32 %v3995, %v3947
    %v4034 = vmul.f32 %v3995, %v3948
    %v4035 = vmul.f32 %v3995, %v3949
    %v4036 = vmul.f32 %v3995, %v3950
    %v4037 = vmul.f32 %v3995, %v1391
    %v4038 = vmul.f32 %v3995, %v1392
    %v4039 = vmul.f32 %v3995, %v1393
    %v4040 = vmul.f32 %v3995, %v1394
    %v4041 = vmul.f32 %v3995, %v3951
    %v4042 = vmul.f32 %v3995, %v3952
    %v4043 = vmul.f32 %v3995, %v3953
    %v4044 = vmul.f32 %v3995, %v3954
    %v4045 = vmul.f32 %v3999, %v3947
    %v4046 = vmul.f32 %v3999, %v3948
    %v4047 = vmul.f32 %v3999, %v3949
    %v4048 = vmul.f32 %v3999, %v3950
    %v4049 = vmul.f32 %v3999, %v1391
    %v4050 = vmul.f32 %v3999, %v1392
    %v4051 = vmul.f32 %v3999, %v1393
    %v4052 = vmul.f32 %v3999, %v1394
    %v4053 = vmul.f32 %v3999, %v3951
    %v4054 = vmul.f32 %v3999, %v3952
    %v4055 = vmul.f32 %v3999, %v3953
    %v4056 = vmul.f32 %v3999, %v3954
    %v4057 = vmul.f32 %v4003, %v3947
    %v4058 = vmul.f32 %v4003, %v3948
    %v4059 = vmul.f32 %v4003, %v3949
    %v4060 = vmul.f32 %v4003, %v3950
    %v4061 = vmul.f32 %v4003, %v1391
    %v4062 = vmul.f32 %v4003, %v1392
    %v4063 = vmul.f32 %v4003, %v1393
    %v4064 = vmul.f32 %v4003, %v1394
    %v4065 = vmul.f32 %v4003, %v3951
    %v4066 = vmul.f32 %v4003, %v3952
    %v4067 = vmul.f32 %v4003, %v3953
    %v4068 = vmul.f32 %v4003, %v3954
    %v4069 = vmul.f32 %v4007, %v3947
    %v4070 = vmul.f32 %v4007, %v3948
    %v4071 = vmul.f32 %v4007, %v3949
    %v4072 = vmul.f32 %v4007, %v3950
    %v4073 = vmul.f32 %v4007, %v1391
    %v4074 = vmul.f32 %v4007, %v1392
    %v4075 = vmul.f32 %v4007, %v1393
    %v4076 = vmul.f32 %v4007, %v1394
    %v4077 = vmul.f32 %v4007, %v3951
    %v4078 = vmul.f32 %v4007, %v3952
    %v4079 = vmul.f32 %v4007, %v3953
    %v4080 = vmul.f32 %v4007, %v3954
    %v4153 = vrot.slane %v4009, 2
    %v4154 = vrot.slane %v4013, 2
    %v4155 = vsel %vm540, %v4153, %v4154
    %v4156 = vrot.slane %v4010, 2
    %v4157 = vrot.slane %v4014, 2
    %v4158 = vsel %vm540, %v4156, %v4157
    %v4159 = vrot.slane %v4011, 2
    %v4160 = vrot.slane %v4015, 2
    %v4161 = vsel %vm540, %v4159, %v4160
    %v4162 = vrot.slane %v4012, 2
    %v4163 = vrot.slane %v4016, 2
    %v4164 = vsel %vm540, %v4162, %v4163
    %v4165 = vrot.slane %v4017, 2
    %v4166 = vsel %vm540, %v4154, %v4165
    %v4167 = vrot.slane %v4018, 2
    %v4168 = vsel %vm540, %v4157, %v4167
    %v4169 = vrot.slane %v4019, 2
    %v4170 = vsel %vm540, %v4160, %v4169
    %v4171 = vrot.slane %v4020, 2
    %v4172 = vsel %vm540, %v4163, %v4171
    %v4173 = vrot.slane %v4021, 2
    %v4174 = vrot.slane %v4025, 2
    %v4175 = vsel %vm540, %v4173, %v4174
    %v4176 = vrot.slane %v4022, 2
    %v4177 = vrot.slane %v4026, 2
    %v4178 = vsel %vm540, %v4176, %v4177
    %v4179 = vrot.slane %v4023, 2
    %v4180 = vrot.slane %v4027, 2
    %v4181 = vsel %vm540, %v4179, %v4180
    %v4182 = vrot.slane %v4024, 2
    %v4183 = vrot.slane %v4028, 2
    %v4184 = vsel %vm540, %v4182, %v4183
    %v4185 = vrot.slane %v4029, 2
    %v4186 = vsel %vm540, %v4174, %v4185
    %v4187 = vrot.slane %v4030, 2
    %v4188 = vsel %vm540, %v4177, %v4187
    %v4189 = vrot.slane %v4031, 2
    %v4190 = vsel %vm540, %v4180, %v4189
    %v4191 = vrot.slane %v4032, 2
    %v4192 = vsel %vm540, %v4183, %v4191
    %v4193 = vrot.slane %v4033, 2
    %v4194 = vrot.slane %v4037, 2
    %v4195 = vsel %vm540, %v4193, %v4194
    %v4196 = vrot.slane %v4034, 2
    %v4197 = vrot.slane %v4038, 2
    %v4198 = vsel %vm540, %v4196, %v4197
    %v4199 = vrot.slane %v4035, 2
    %v4200 = vrot.slane %v4039, 2
    %v4201 = vsel %vm540, %v4199, %v4200
    %v4202 = vrot.slane %v4036, 2
    %v4203 = vrot.slane %v4040, 2
    %v4204 = vsel %vm540, %v4202, %v4203
    %v4205 = vrot.slane %v4041, 2
    %v4206 = vsel %vm540, %v4194, %v4205
    %v4207 = vrot.slane %v4042, 2
    %v4208 = vsel %vm540, %v4197, %v4207
    %v4209 = vrot.slane %v4043, 2
    %v4210 = vsel %vm540, %v4200, %v4209
    %v4211 = vrot.slane %v4044, 2
    %v4212 = vsel %vm540, %v4203, %v4211
    %v4213 = vrot.slane %v4045, 2
    %v4214 = vrot.slane %v4049, 2
    %v4215 = vsel %vm540, %v4213, %v4214
    %v4216 = vrot.slane %v4046, 2
    %v4217 = vrot.slane %v4050, 2
    %v4218 = vsel %vm540, %v4216, %v4217
    %v4219 = vrot.slane %v4047, 2
    %v4220 = vrot.slane %v4051, 2
    %v4221 = vsel %vm540, %v4219, %v4220
    %v4222 = vrot.slane %v4048, 2
    %v4223 = vrot.slane %v4052, 2
    %v4224 = vsel %vm540, %v4222, %v4223
    %v4225 = vrot.slane %v4053, 2
    %v4226 = vsel %vm540, %v4214, %v4225
    %v4227 = vrot.slane %v4054, 2
    %v4228 = vsel %vm540, %v4217, %v4227
    %v4229 = vrot.slane %v4055, 2
    %v4230 = vsel %vm540, %v4220, %v4229
    %v4231 = vrot.slane %v4056, 2
    %v4232 = vsel %vm540, %v4223, %v4231
    %v4233 = vrot.slane %v4057, 2
    %v4234 = vrot.slane %v4061, 2
    %v4235 = vsel %vm540, %v4233, %v4234
    %v4236 = vrot.slane %v4058, 2
    %v4237 = vrot.slane %v4062, 2
    %v4238 = vsel %vm540, %v4236, %v4237
    %v4239 = vrot.slane %v4059, 2
    %v4240 = vrot.slane %v4063, 2
    %v4241 = vsel %vm540, %v4239, %v4240
    %v4242 = vrot.slane %v4060, 2
    %v4243 = vrot.slane %v4064, 2
    %v4244 = vsel %vm540, %v4242, %v4243
    %v4245 = vrot.slane %v4065, 2
    %v4246 = vsel %vm540, %v4234, %v4245
    %v4247 = vrot.slane %v4066, 2
    %v4248 = vsel %vm540, %v4237, %v4247
    %v4249 = vrot.slane %v4067, 2
    %v4250 = vsel %vm540, %v4240, %v4249
    %v4251 = vrot.slane %v4068, 2
    %v4252 = vsel %vm540, %v4243, %v4251
    %v4253 = vrot.slane %v4069, 2
    %v4254 = vrot.slane %v4073, 2
    %v4255 = vsel %vm540, %v4253, %v4254
    %v4256 = vrot.slane %v4070, 2
    %v4257 = vrot.slane %v4074, 2
    %v4258 = vsel %vm540, %v4256, %v4257
    %v4259 = vrot.slane %v4071, 2
    %v4260 = vrot.slane %v4075, 2
    %v4261 = vsel %vm540, %v4259, %v4260
    %v4262 = vrot.slane %v4072, 2
    %v4263 = vrot.slane %v4076, 2
    %v4264 = vsel %vm540, %v4262, %v4263
    %v4265 = vrot.slane %v4077, 2
    %v4266 = vsel %vm540, %v4254, %v4265
    %v4267 = vrot.slane %v4078, 2
    %v4268 = vsel %vm540, %v4257, %v4267
    %v4269 = vrot.slane %v4079, 2
    %v4270 = vsel %vm540, %v4260, %v4269
    %v4271 = vrot.slane %v4080, 2
    %v4272 = vsel %vm540, %v4263, %v4271
    %v4345 = vadd.f32 %v3875, %v4155
    %v4346 = vadd.f32 %v3876, %v4158
    %v4347 = vadd.f32 %v3877, %v4161
    %v4348 = vadd.f32 %v3878, %v4164
    %v4349 = vadd.f32 %v3879, %v4166
    %v4350 = vadd.f32 %v3880, %v4168
    %v4351 = vadd.f32 %v3881, %v4170
    %v4352 = vadd.f32 %v3882, %v4172
    %v4353 = vadd.f32 %v3883, %v4165
    %v4354 = vadd.f32 %v3884, %v4167
    %v4355 = vadd.f32 %v3885, %v4169
    %v4356 = vadd.f32 %v3886, %v4171
    %v4357 = vadd.f32 %v3887, %v4175
    %v4358 = vadd.f32 %v3888, %v4178
    %v4359 = vadd.f32 %v3889, %v4181
    %v4360 = vadd.f32 %v3890, %v4184
    %v4361 = vadd.f32 %v3891, %v4186
    %v4362 = vadd.f32 %v3892, %v4188
    %v4363 = vadd.f32 %v3893, %v4190
    %v4364 = vadd.f32 %v3894, %v4192
    %v4365 = vadd.f32 %v3895, %v4185
    %v4366 = vadd.f32 %v3896, %v4187
    %v4367 = vadd.f32 %v3897, %v4189
    %v4368 = vadd.f32 %v3898, %v4191
    %v4369 = vadd.f32 %v3899, %v4195
    %v4370 = vadd.f32 %v3900, %v4198
    %v4371 = vadd.f32 %v3901, %v4201
    %v4372 = vadd.f32 %v3902, %v4204
    %v4373 = vadd.f32 %v3903, %v4206
    %v4374 = vadd.f32 %v3904, %v4208
    %v4375 = vadd.f32 %v3905, %v4210
    %v4376 = vadd.f32 %v3906, %v4212
    %v4377 = vadd.f32 %v3907, %v4205
    %v4378 = vadd.f32 %v3908, %v4207
    %v4379 = vadd.f32 %v3909, %v4209
    %v4380 = vadd.f32 %v3910, %v4211
    %v4381 = vadd.f32 %v3911, %v4215
    %v4382 = vadd.f32 %v3912, %v4218
    %v4383 = vadd.f32 %v3913, %v4221
    %v4384 = vadd.f32 %v3914, %v4224
    %v4385 = vadd.f32 %v3915, %v4226
    %v4386 = vadd.f32 %v3916, %v4228
    %v4387 = vadd.f32 %v3917, %v4230
    %v4388 = vadd.f32 %v3918, %v4232
    %v4389 = vadd.f32 %v3919, %v4225
    %v4390 = vadd.f32 %v3920, %v4227
    %v4391 = vadd.f32 %v3921, %v4229
    %v4392 = vadd.f32 %v3922, %v4231
    %v4393 = vadd.f32 %v3923, %v4235
    %v4394 = vadd.f32 %v3924, %v4238
    %v4395 = vadd.f32 %v3925, %v4241
    %v4396 = vadd.f32 %v3926, %v4244
    %v4397 = vadd.f32 %v3927, %v4246
    %v4398 = vadd.f32 %v3928, %v4248
    %v4399 = vadd.f32 %v3929, %v4250
    %v4400 = vadd.f32 %v3930, %v4252
    %v4401 = vadd.f32 %v3931, %v4245
    %v4402 = vadd.f32 %v3932, %v4247
    %v4403 = vadd.f32 %v3933, %v4249
    %v4404 = vadd.f32 %v3934, %v4251
    %v4405 = vadd.f32 %v3935, %v4255
    %v4406 = vadd.f32 %v3936, %v4258
    %v4407 = vadd.f32 %v3937, %v4261
    %v4408 = vadd.f32 %v3938, %v4264
    %v4409 = vadd.f32 %v3939, %v4266
    %v4410 = vadd.f32 %v3940, %v4268
    %v4411 = vadd.f32 %v3941, %v4270
    %v4412 = vadd.f32 %v3942, %v4272
    %v4413 = vadd.f32 %v3943, %v4265
    %v4414 = vadd.f32 %v3944, %v4267
    %v4415 = vadd.f32 %v3945, %v4269
    %v4416 = vadd.f32 %v3946, %v4271
    %v4417 = vld [vmem:[%s4] sm:$0x1]
    %v4418 = vld [vmem:[%s4 + $0x1] sm:$0x1]
    %v4419 = vld [vmem:[%s4 + $0x2] sm:$0x1]
    %v4420 = vld [vmem:[%s4 + $0x3] sm:$0x1]
    %v4421 = vld [vmem:[%s4 + $0x4] sm:$0x1]
    %v4422 = vld [vmem:[%s4 + $0x5] sm:$0x1]
    %v4429 = vlaneseq
    %v4430 = vshrl.u32 %v4429, 7
    %v4431 = vsub.s32 0, %v4430
    %v4432 = vrot.slane %v4417, %v4431
    %v4433 = vlaneseq
    %v4434 = vshrl.u32 %v4433, 7
    %v4435 = vsub.s32 0, %v4434
    %v4436 = vrot.slane %v4418, %v4435
    %v4437 = vlaneseq
    %v4438 = vshrl.u32 %v4437, 7
    %v4439 = vsub.s32 0, %v4438
    %v4440 = vrot.slane %v4419, %v4439
    %v4441 = vlaneseq
    %v4442 = vshrl.u32 %v4441, 7
    %v4443 = vsub.s32 0, %v4442
    %v4444 = vrot.slane %v4420, %v4443
    %v4445 = vlaneseq
    %v4446 = vshrl.u32 %v4445, 7
    %v4447 = vsub.s32 0, %v4446
    %v4448 = vrot.slane %v4421, %v4447
    %v4449 = vlaneseq
    %v4450 = vshrl.u32 %v4449, 7
    %v4451 = vsub.s32 0, %v4450
    %v4452 = vrot.slane %v4422, %v4451
    %4453 = vset.pattern.permute.xlu0 0
    %4454 = vperm.xlu0 %4453, %v4432
    %v4455 = vpop.permute.xlu0 %4454
    %4457 = vset.pattern.permute.xlu0 0
    %4458 = vperm.xlu0 %4457, %v4436
    %v4459 = vpop.permute.xlu0 %4458
    %4461 = vset.pattern.permute.xlu0 0
    %4462 = vperm.xlu0 %4461, %v4440
    %v4463 = vpop.permute.xlu0 %4462
    %4465 = vset.pattern.permute.xlu0 0
    %4466 = vperm.xlu0 %4465, %v4444
    %v4467 = vpop.permute.xlu0 %4466
    %4469 = vset.pattern.permute.xlu0 0
    %4470 = vperm.xlu0 %4469, %v4448
    %v4471 = vpop.permute.xlu0 %4470
    %4473 = vset.pattern.permute.xlu0 0
    %4474 = vperm.xlu0 %4473, %v4452
    %v4475 = vpop.permute.xlu0 %4474
    %v4477 = vadd.f32 %v4345, %v4455
    %v4478 = vadd.f32 %v4346, %v4455
    %v4479 = vadd.f32 %v4347, %v4455
    %v4480 = vadd.f32 %v4348, %v4455
    %v4481 = vadd.f32 %v4349, %v4455
    %v4482 = vadd.f32 %v4350, %v4455
    %v4483 = vadd.f32 %v4351, %v4455
    %v4484 = vadd.f32 %v4352, %v4455
    %v4485 = vadd.f32 %v4353, %v4455
    %v4486 = vadd.f32 %v4354, %v4455
    %v4487 = vadd.f32 %v4355, %v4455
    %v4488 = vadd.f32 %v4356, %v4455
    %v4489 = vadd.f32 %v4357, %v4459
    %v4490 = vadd.f32 %v4358, %v4459
    %v4491 = vadd.f32 %v4359, %v4459
    %v4492 = vadd.f32 %v4360, %v4459
    %v4493 = vadd.f32 %v4361, %v4459
    %v4494 = vadd.f32 %v4362, %v4459
    %v4495 = vadd.f32 %v4363, %v4459
    %v4496 = vadd.f32 %v4364, %v4459
    %v4497 = vadd.f32 %v4365, %v4459
    %v4498 = vadd.f32 %v4366, %v4459
    %v4499 = vadd.f32 %v4367, %v4459
    %v4500 = vadd.f32 %v4368, %v4459
    %v4501 = vadd.f32 %v4369, %v4463
    %v4502 = vadd.f32 %v4370, %v4463
    %v4503 = vadd.f32 %v4371, %v4463
    %v4504 = vadd.f32 %v4372, %v4463
    %v4505 = vadd.f32 %v4373, %v4463
    %v4506 = vadd.f32 %v4374, %v4463
    %v4507 = vadd.f32 %v4375, %v4463
    %v4508 = vadd.f32 %v4376, %v4463
    %v4509 = vadd.f32 %v4377, %v4463
    %v4510 = vadd.f32 %v4378, %v4463
    %v4511 = vadd.f32 %v4379, %v4463
    %v4512 = vadd.f32 %v4380, %v4463
    %v4513 = vadd.f32 %v4381, %v4467
    %v4514 = vadd.f32 %v4382, %v4467
    %v4515 = vadd.f32 %v4383, %v4467
    %v4516 = vadd.f32 %v4384, %v4467
    %v4517 = vadd.f32 %v4385, %v4467
    %v4518 = vadd.f32 %v4386, %v4467
    %v4519 = vadd.f32 %v4387, %v4467
    %v4520 = vadd.f32 %v4388, %v4467
    %v4521 = vadd.f32 %v4389, %v4467
    %v4522 = vadd.f32 %v4390, %v4467
    %v4523 = vadd.f32 %v4391, %v4467
    %v4524 = vadd.f32 %v4392, %v4467
    %v4525 = vadd.f32 %v4393, %v4471
    %v4526 = vadd.f32 %v4394, %v4471
    %v4527 = vadd.f32 %v4395, %v4471
    %v4528 = vadd.f32 %v4396, %v4471
    %v4529 = vadd.f32 %v4397, %v4471
    %v4530 = vadd.f32 %v4398, %v4471
    %v4531 = vadd.f32 %v4399, %v4471
    %v4532 = vadd.f32 %v4400, %v4471
    %v4533 = vadd.f32 %v4401, %v4471
    %v4534 = vadd.f32 %v4402, %v4471
    %v4535 = vadd.f32 %v4403, %v4471
    %v4536 = vadd.f32 %v4404, %v4471
    %v4537 = vadd.f32 %v4405, %v4475
    %v4538 = vadd.f32 %v4406, %v4475
    %v4539 = vadd.f32 %v4407, %v4475
    %v4540 = vadd.f32 %v4408, %v4475
    %v4541 = vadd.f32 %v4409, %v4475
    %v4542 = vadd.f32 %v4410, %v4475
    %v4543 = vadd.f32 %v4411, %v4475
    %v4544 = vadd.f32 %v4412, %v4475
    %v4545 = vadd.f32 %v4413, %v4475
    %v4546 = vadd.f32 %v4414, %v4475
    %v4547 = vadd.f32 %v4415, %v4475
    %v4548 = vadd.f32 %v4416, %v4475
    %v4549 = vmax.f32 %v4477, 0.0
    %v4550 = vmax.f32 %v4478, 0.0
    %v4551 = vmax.f32 %v4479, 0.0
    %v4552 = vmax.f32 %v4480, 0.0
    %v4553 = vmax.f32 %v4481, 0.0
    %v4554 = vmax.f32 %v4482, 0.0
    %v4555 = vmax.f32 %v4483, 0.0
    %v4556 = vmax.f32 %v4484, 0.0
    %v4557 = vmax.f32 %v4485, 0.0
    %v4558 = vmax.f32 %v4486, 0.0
    %v4559 = vmax.f32 %v4487, 0.0
    %v4560 = vmax.f32 %v4488, 0.0
    %v4561 = vmax.f32 %v4489, 0.0
    %v4562 = vmax.f32 %v4490, 0.0
    %v4563 = vmax.f32 %v4491, 0.0
    %v4564 = vmax.f32 %v4492, 0.0
    %v4565 = vmax.f32 %v4493, 0.0
    %v4566 = vmax.f32 %v4494, 0.0
    %v4567 = vmax.f32 %v4495, 0.0
    %v4568 = vmax.f32 %v4496, 0.0
    %v4569 = vmax.f32 %v4497, 0.0
    %v4570 = vmax.f32 %v4498, 0.0
    %v4571 = vmax.f32 %v4499, 0.0
    %v4572 = vmax.f32 %v4500, 0.0
    %v4573 = vmax.f32 %v4501, 0.0
    %v4574 = vmax.f32 %v4502, 0.0
    %v4575 = vmax.f32 %v4503, 0.0
    %v4576 = vmax.f32 %v4504, 0.0
    %v4577 = vmax.f32 %v4505, 0.0
    %v4578 = vmax.f32 %v4506, 0.0
    %v4579 = vmax.f32 %v4507, 0.0
    %v4580 = vmax.f32 %v4508, 0.0
    %v4581 = vmax.f32 %v4509, 0.0
    %v4582 = vmax.f32 %v4510, 0.0
    %v4583 = vmax.f32 %v4511, 0.0
    %v4584 = vmax.f32 %v4512, 0.0
    %v4585 = vmax.f32 %v4513, 0.0
    %v4586 = vmax.f32 %v4514, 0.0
    %v4587 = vmax.f32 %v4515, 0.0
    %v4588 = vmax.f32 %v4516, 0.0
    %v4589 = vmax.f32 %v4517, 0.0
    %v4590 = vmax.f32 %v4518, 0.0
    %v4591 = vmax.f32 %v4519, 0.0
    %v4592 = vmax.f32 %v4520, 0.0
    %v4593 = vmax.f32 %v4521, 0.0
    %v4594 = vmax.f32 %v4522, 0.0
    %v4595 = vmax.f32 %v4523, 0.0
    %v4596 = vmax.f32 %v4524, 0.0
    %v4597 = vmax.f32 %v4525, 0.0
    %v4598 = vmax.f32 %v4526, 0.0
    %v4599 = vmax.f32 %v4527, 0.0
    %v4600 = vmax.f32 %v4528, 0.0
    %v4601 = vmax.f32 %v4529, 0.0
    %v4602 = vmax.f32 %v4530, 0.0
    %v4603 = vmax.f32 %v4531, 0.0
    %v4604 = vmax.f32 %v4532, 0.0
    %v4605 = vmax.f32 %v4533, 0.0
    %v4606 = vmax.f32 %v4534, 0.0
    %v4607 = vmax.f32 %v4535, 0.0
    %v4608 = vmax.f32 %v4536, 0.0
    %v4609 = vmax.f32 %v4537, 0.0
    %v4610 = vmax.f32 %v4538, 0.0
    %v4611 = vmax.f32 %v4539, 0.0
    %v4612 = vmax.f32 %v4540, 0.0
    %v4613 = vmax.f32 %v4541, 0.0
    %v4614 = vmax.f32 %v4542, 0.0
    %v4615 = vmax.f32 %v4543, 0.0
    %v4616 = vmax.f32 %v4544, 0.0
    %v4617 = vmax.f32 %v4545, 0.0
    %v4618 = vmax.f32 %v4546, 0.0
    %v4619 = vmax.f32 %v4547, 0.0
    %v4620 = vmax.f32 %v4548, 0.0
    %4621 = vst [vmem:[#allocation3] sm:$0xff] %v4549
    %4622 = vst [vmem:[#allocation3 + $0x8] sm:$0xff] %v4550
    %4623 = vst [vmem:[#allocation3 + $0x10] sm:$0xff] %v4551
    %4624 = vst [vmem:[#allocation3 + $0x18] sm:$0xff] %v4552
    %4625 = vst [vmem:[#allocation3 + $0x20] sm:$0xff] %v4553
    %4626 = vst [vmem:[#allocation3 + $0x28] sm:$0xff] %v4554
    %4627 = vst [vmem:[#allocation3 + $0x30] sm:$0xff] %v4555
    %4628 = vst [vmem:[#allocation3 + $0x38] sm:$0xff] %v4556
    %4629 = vst [vmem:[#allocation3 + $0x40] sm:$0x3f] %v4557
    %4630 = vst [vmem:[#allocation3 + $0x48] sm:$0x3f] %v4558
    %4631 = vst [vmem:[#allocation3 + $0x50] sm:$0x3f] %v4559
    %4632 = vst [vmem:[#allocation3 + $0x58] sm:$0x3f] %v4560
    %v4645 = vrot.slane %v4561, 2
    %v4646 = vrot.slane %v4562, 2
    %v4647 = vrot.slane %v4563, 2
    %v4648 = vrot.slane %v4564, 2
    %v4649 = vrot.slane %v4565, 2
    %v4650 = vsel %vm540, %v4645, %v4649
    %v4651 = vrot.slane %v4566, 2
    %v4652 = vsel %vm540, %v4646, %v4651
    %v4653 = vrot.slane %v4567, 2
    %v4654 = vsel %vm540, %v4647, %v4653
    %v4655 = vrot.slane %v4568, 2
    %v4656 = vsel %vm540, %v4648, %v4655
    %v4657 = vrot.slane %v4569, 2
    %v4658 = vsel %vm540, %v4649, %v4657
    %v4659 = vrot.slane %v4570, 2
    %v4660 = vsel %vm540, %v4651, %v4659
    %v4661 = vrot.slane %v4571, 2
    %v4662 = vsel %vm540, %v4653, %v4661
    %v4663 = vrot.slane %v4572, 2
    %v4664 = vsel %vm540, %v4655, %v4663
    %4681 = vst [vmem:[#allocation3 + $0x40] sm:$0xc0] %v4645
    %4682 = vst [vmem:[#allocation3 + $0x48] sm:$0xc0] %v4646
    %4683 = vst [vmem:[#allocation3 + $0x50] sm:$0xc0] %v4647
    %4684 = vst [vmem:[#allocation3 + $0x58] sm:$0xc0] %v4648
    %4685 = vst [vmem:[#allocation3 + $0x60] sm:$0xff] %v4650
    %4686 = vst [vmem:[#allocation3 + $0x68] sm:$0xff] %v4652
    %4687 = vst [vmem:[#allocation3 + $0x70] sm:$0xff] %v4654
    %4688 = vst [vmem:[#allocation3 + $0x78] sm:$0xff] %v4656
    %4689 = vst [vmem:[#allocation3 + $0x80] sm:$0xff] %v4658
    %4690 = vst [vmem:[#allocation3 + $0x88] sm:$0xff] %v4660
    %4691 = vst [vmem:[#allocation3 + $0x90] sm:$0xff] %v4662
    %4692 = vst [vmem:[#allocation3 + $0x98] sm:$0xff] %v4664
    %4693 = vst [vmem:[#allocation3 + $0xa0] sm:$0xf] %v4657
    %4694 = vst [vmem:[#allocation3 + $0xa8] sm:$0xf] %v4659
    %4695 = vst [vmem:[#allocation3 + $0xb0] sm:$0xf] %v4661
    %4696 = vst [vmem:[#allocation3 + $0xb8] sm:$0xf] %v4663
    %vm4709 = vcmask 1043456
    %v4710 = vrot.slane %v4573, 4
    %v4711 = vrot.slane %v4574, 4
    %v4712 = vrot.slane %v4575, 4
    %v4713 = vrot.slane %v4576, 4
    %v4714 = vrot.slane %v4577, 4
    %v4715 = vsel %vm4709, %v4710, %v4714
    %v4716 = vrot.slane %v4578, 4
    %v4717 = vsel %vm4709, %v4711, %v4716
    %v4718 = vrot.slane %v4579, 4
    %v4719 = vsel %vm4709, %v4712, %v4718
    %v4720 = vrot.slane %v4580, 4
    %v4721 = vsel %vm4709, %v4713, %v4720
    %v4722 = vrot.slane %v4581, 4
    %v4723 = vsel %vm4709, %v4714, %v4722
    %v4724 = vrot.slane %v4582, 4
    %v4725 = vsel %vm4709, %v4716, %v4724
    %v4726 = vrot.slane %v4583, 4
    %v4727 = vsel %vm4709, %v4718, %v4726
    %v4728 = vrot.slane %v4584, 4
    %v4729 = vsel %vm4709, %v4720, %v4728
    %4746 = vst [vmem:[#allocation3 + $0xa0] sm:$0xf0] %v4710
    %4747 = vst [vmem:[#allocation3 + $0xa8] sm:$0xf0] %v4711
    %4748 = vst [vmem:[#allocation3 + $0xb0] sm:$0xf0] %v4712
    %4749 = vst [vmem:[#allocation3 + $0xb8] sm:$0xf0] %v4713
    %4750 = vst [vmem:[#allocation3 + $0xc0] sm:$0xff] %v4715
    %4751 = vst [vmem:[#allocation3 + $0xc8] sm:$0xff] %v4717
    %4752 = vst [vmem:[#allocation3 + $0xd0] sm:$0xff] %v4719
    %4753 = vst [vmem:[#allocation3 + $0xd8] sm:$0xff] %v4721
    %4754 = vst [vmem:[#allocation3 + $0xe0] sm:$0xff] %v4723
    %4755 = vst [vmem:[#allocation3 + $0xe8] sm:$0xff] %v4725
    %4756 = vst [vmem:[#allocation3 + $0xf0] sm:$0xff] %v4727
    %4757 = vst [vmem:[#allocation3 + $0xf8] sm:$0xff] %v4729
    %4758 = vst [vmem:[#allocation3 + $0x100] sm:$0x3] %v4722
    %4759 = vst [vmem:[#allocation3 + $0x108] sm:$0x3] %v4724
    %4760 = vst [vmem:[#allocation3 + $0x110] sm:$0x3] %v4726
    %4761 = vst [vmem:[#allocation3 + $0x118] sm:$0x3] %v4728
    %vm4774 = vcmask 1041408
    %v4775 = vrot.slane %v4585, 6
    %v4776 = vrot.slane %v4586, 6
    %v4777 = vrot.slane %v4587, 6
    %v4778 = vrot.slane %v4588, 6
    %v4779 = vrot.slane %v4589, 6
    %v4780 = vsel %vm4774, %v4775, %v4779
    %v4781 = vrot.slane %v4590, 6
    %v4782 = vsel %vm4774, %v4776, %v4781
    %v4783 = vrot.slane %v4591, 6
    %v4784 = vsel %vm4774, %v4777, %v4783
    %v4785 = vrot.slane %v4592, 6
    %v4786 = vsel %vm4774, %v4778, %v4785
    %v4787 = vrot.slane %v4593, 6
    %v4788 = vsel %vm4774, %v4779, %v4787
    %v4789 = vrot.slane %v4594, 6
    %v4790 = vsel %vm4774, %v4781, %v4789
    %v4791 = vrot.slane %v4595, 6
    %v4792 = vsel %vm4774, %v4783, %v4791
    %v4793 = vrot.slane %v4596, 6
    %v4794 = vsel %vm4774, %v4785, %v4793
    %4807 = vst [vmem:[#allocation3 + $0x100] sm:$0xfc] %v4775
    %4808 = vst [vmem:[#allocation3 + $0x108] sm:$0xfc] %v4776
    %4809 = vst [vmem:[#allocation3 + $0x110] sm:$0xfc] %v4777
    %4810 = vst [vmem:[#allocation3 + $0x118] sm:$0xfc] %v4778
    %4811 = vst [vmem:[#allocation3 + $0x120] sm:$0xff] %v4780
    %4812 = vst [vmem:[#allocation3 + $0x128] sm:$0xff] %v4782
    %4813 = vst [vmem:[#allocation3 + $0x130] sm:$0xff] %v4784
    %4814 = vst [vmem:[#allocation3 + $0x138] sm:$0xff] %v4786
    %4815 = vst [vmem:[#allocation3 + $0x140] sm:$0xff] %v4788
    %4816 = vst [vmem:[#allocation3 + $0x148] sm:$0xff] %v4790
    %4817 = vst [vmem:[#allocation3 + $0x150] sm:$0xff] %v4792
    %4818 = vst [vmem:[#allocation3 + $0x158] sm:$0xff] %v4794
    %4819 = vst [vmem:[#allocation3 + $0x160] sm:$0xff] %v4597
    %4820 = vst [vmem:[#allocation3 + $0x168] sm:$0xff] %v4598
    %4821 = vst [vmem:[#allocation3 + $0x170] sm:$0xff] %v4599
    %4822 = vst [vmem:[#allocation3 + $0x178] sm:$0xff] %v4600
    %4823 = vst [vmem:[#allocation3 + $0x180] sm:$0xff] %v4601
    %4824 = vst [vmem:[#allocation3 + $0x188] sm:$0xff] %v4602
    %4825 = vst [vmem:[#allocation3 + $0x190] sm:$0xff] %v4603
    %4826 = vst [vmem:[#allocation3 + $0x198] sm:$0xff] %v4604
    %4827 = vst [vmem:[#allocation3 + $0x1a0] sm:$0x3f] %v4605
    %4828 = vst [vmem:[#allocation3 + $0x1a8] sm:$0x3f] %v4606
    %4829 = vst [vmem:[#allocation3 + $0x1b0] sm:$0x3f] %v4607
    %4830 = vst [vmem:[#allocation3 + $0x1b8] sm:$0x3f] %v4608
    %v4843 = vrot.slane %v4609, 2
    %v4844 = vrot.slane %v4610, 2
    %v4845 = vrot.slane %v4611, 2
    %v4846 = vrot.slane %v4612, 2
    %v4847 = vrot.slane %v4613, 2
    %v4848 = vsel %vm540, %v4843, %v4847
    %v4849 = vrot.slane %v4614, 2
    %v4850 = vsel %vm540, %v4844, %v4849
    %v4851 = vrot.slane %v4615, 2
    %v4852 = vsel %vm540, %v4845, %v4851
    %v4853 = vrot.slane %v4616, 2
    %v4854 = vsel %vm540, %v4846, %v4853
    %v4855 = vrot.slane %v4617, 2
    %v4856 = vsel %vm540, %v4847, %v4855
    %v4857 = vrot.slane %v4618, 2
    %v4858 = vsel %vm540, %v4849, %v4857
    %v4859 = vrot.slane %v4619, 2
    %v4860 = vsel %vm540, %v4851, %v4859
    %v4861 = vrot.slane %v4620, 2
    %v4862 = vsel %vm540, %v4853, %v4861
    %4879 = vst [vmem:[#allocation3 + $0x1a0] sm:$0xc0] %v4843
    %4880 = vst [vmem:[#allocation3 + $0x1a8] sm:$0xc0] %v4844
    %4881 = vst [vmem:[#allocation3 + $0x1b0] sm:$0xc0] %v4845
    %4882 = vst [vmem:[#allocation3 + $0x1b8] sm:$0xc0] %v4846
    %4883 = vst [vmem:[#allocation3 + $0x1c0] sm:$0xff] %v4848
    %4884 = vst [vmem:[#allocation3 + $0x1c8] sm:$0xff] %v4850
    %4885 = vst [vmem:[#allocation3 + $0x1d0] sm:$0xff] %v4852
    %4886 = vst [vmem:[#allocation3 + $0x1d8] sm:$0xff] %v4854
    %4887 = vst [vmem:[#allocation3 + $0x1e0] sm:$0xff] %v4856
    %4888 = vst [vmem:[#allocation3 + $0x1e8] sm:$0xff] %v4858
    %4889 = vst [vmem:[#allocation3 + $0x1f0] sm:$0xff] %v4860
    %4890 = vst [vmem:[#allocation3 + $0x1f8] sm:$0xff] %v4862
    %4891 = vst [vmem:[#allocation3 + $0x200] sm:$0xf] %v4855
    %4892 = vst [vmem:[#allocation3 + $0x208] sm:$0xf] %v4857
    %4893 = vst [vmem:[#allocation3 + $0x210] sm:$0xf] %v4859
    %4894 = vst [vmem:[#allocation3 + $0x218] sm:$0xf] %v4861
    %v4895 = vld [vmem:[%s5] sm:$0xff]
    %v4896 = vld [vmem:[%s5 + $0x8] sm:$0xff]
    %v4897 = vld [vmem:[%s5 + $0x10] sm:$0xff]
    %v4898 = vld [vmem:[%s5 + $0x18] sm:$0xff]
    %v4899 = vld [vmem:[%s5 + $0x20] sm:$0xff]
    %v4900 = vld [vmem:[%s5 + $0x28] sm:$0xff]
    %v4901 = vld [vmem:[%s5 + $0x30] sm:$0xff]
    %v4902 = vld [vmem:[%s5 + $0x38] sm:$0xff]
    %v4903 = vld [vmem:[%s5 + $0x40] sm:$0xff]
    %v4904 = vld [vmem:[%s5 + $0x48] sm:$0xff]
    %v4905 = vld [vmem:[%s5 + $0x50] sm:$0xff]
    %v4906 = vld [vmem:[%s5 + $0x58] sm:$0xff]
    %v4907 = vld [vmem:[%s5 + $0x60] sm:$0xff]
    %v4908 = vld [vmem:[%s5 + $0x68] sm:$0xff]
    %v4909 = vld [vmem:[%s5 + $0x70] sm:$0xff]
    %v4910 = vld [vmem:[%s5 + $0x78] sm:$0xff]
    %v4911 = vld [vmem:[%s5 + $0x80] sm:$0xff]
    %v4912 = vld [vmem:[%s5 + $0x88] sm:$0xff]
    %v4913 = vld [vmem:[%s5 + $0x90] sm:$0xff]
    %v4914 = vld [vmem:[%s5 + $0x98] sm:$0xff]
    %v4915 = vld [vmem:[%s5 + $0xa0] sm:$0xff]
    %v4916 = vld [vmem:[%s5 + $0xa8] sm:$0xff]
    %v4917 = vld [vmem:[%s5 + $0xb0] sm:$0xff]
    %v4918 = vld [vmem:[%s5 + $0xb8] sm:$0xff]
    %v4919 = vld [vmem:[%s5 + $0xc0] sm:$0xf]
    %v4920 = vld [vmem:[%s5 + $0xc8] sm:$0xf]
    %v4921 = vld [vmem:[#allocation3] sm:$0xff]
    %v4922 = vld [vmem:[#allocation3 + $0x8] sm:$0xff]
    %v4923 = vld [vmem:[#allocation3 + $0x10] sm:$0xff]
    %v4924 = vld [vmem:[#allocation3 + $0x18] sm:$0xff]
    %v4925 = vld [vmem:[#allocation3 + $0x20] sm:$0xff]
    %v4926 = vld [vmem:[#allocation3 + $0x28] sm:$0xff]
    %v4927 = vld [vmem:[#allocation3 + $0x30] sm:$0xff]
    %v4928 = vld [vmem:[#allocation3 + $0x38] sm:$0xff]
    %v4929 = vld [vmem:[#allocation3 + $0x40] sm:$0xff]
    %v4930 = vld [vmem:[#allocation3 + $0x48] sm:$0xff]
    %v4931 = vld [vmem:[#allocation3 + $0x50] sm:$0xff]
    %v4932 = vld [vmem:[#allocation3 + $0x58] sm:$0xff]
    %v4933 = vld [vmem:[#allocation3 + $0x60] sm:$0xff]
    %v4934 = vld [vmem:[#allocation3 + $0x68] sm:$0xff]
    %v4935 = vld [vmem:[#allocation3 + $0x70] sm:$0xff]
    %v4936 = vld [vmem:[#allocation3 + $0x78] sm:$0xff]
    %v4937 = vld [vmem:[#allocation3 + $0x80] sm:$0xff]
    %v4938 = vld [vmem:[#allocation3 + $0x88] sm:$0xff]
    %v4939 = vld [vmem:[#allocation3 + $0x90] sm:$0xff]
    %v4940 = vld [vmem:[#allocation3 + $0x98] sm:$0xff]
    %v4941 = vld [vmem:[#allocation3 + $0xa0] sm:$0xff]
    %v4942 = vld [vmem:[#allocation3 + $0xa8] sm:$0xff]
    %v4943 = vld [vmem:[#allocation3 + $0xb0] sm:$0xff]
    %v4944 = vld [vmem:[#allocation3 + $0xb8] sm:$0xff]
    %v4945 = vld [vmem:[#allocation3 + $0xc0] sm:$0xff]
    %v4946 = vld [vmem:[#allocation3 + $0xc8] sm:$0xff]
    %v4947 = vld [vmem:[#allocation3 + $0xd0] sm:$0xff]
    %v4948 = vld [vmem:[#allocation3 + $0xd8] sm:$0xff]
    %v4949 = vld [vmem:[#allocation3 + $0xe0] sm:$0xff]
    %v4950 = vld [vmem:[#allocation3 + $0xe8] sm:$0xff]
    %v4951 = vld [vmem:[#allocation3 + $0xf0] sm:$0xff]
    %v4952 = vld [vmem:[#allocation3 + $0xf8] sm:$0xff]
    %v4953 = vld [vmem:[#allocation3 + $0x100] sm:$0xff]
    %v4954 = vld [vmem:[#allocation3 + $0x108] sm:$0xff]
    %v4955 = vld [vmem:[#allocation3 + $0x110] sm:$0xff]
    %v4956 = vld [vmem:[#allocation3 + $0x118] sm:$0xff]
    %v4957 = vld [vmem:[#allocation3 + $0x120] sm:$0xff]
    %v4958 = vld [vmem:[#allocation3 + $0x128] sm:$0xff]
    %v4959 = vld [vmem:[#allocation3 + $0x130] sm:$0xff]
    %v4960 = vld [vmem:[#allocation3 + $0x138] sm:$0xff]
    %v4961 = vld [vmem:[#allocation3 + $0x140] sm:$0xff]
    %v4962 = vld [vmem:[#allocation3 + $0x148] sm:$0xff]
    %v4963 = vld [vmem:[#allocation3 + $0x150] sm:$0xff]
    %v4964 = vld [vmem:[#allocation3 + $0x158] sm:$0xff]
    %v4965 = vld [vmem:[#allocation3 + $0x160] sm:$0xff]
    %v4966 = vld [vmem:[#allocation3 + $0x168] sm:$0xff]
    %v4967 = vld [vmem:[#allocation3 + $0x170] sm:$0xff]
    %v4968 = vld [vmem:[#allocation3 + $0x178] sm:$0xff]
    %v4969 = vld [vmem:[#allocation3 + $0x180] sm:$0xff]
    %v4970 = vld [vmem:[#allocation3 + $0x188] sm:$0xff]
    %v4971 = vld [vmem:[#allocation3 + $0x190] sm:$0xff]
    %v4972 = vld [vmem:[#allocation3 + $0x198] sm:$0xff]
    %v4973 = vld [vmem:[#allocation3 + $0x1a0] sm:$0xff]
    %v4974 = vld [vmem:[#allocation3 + $0x1a8] sm:$0xff]
    %v4975 = vld [vmem:[#allocation3 + $0x1b0] sm:$0xff]
    %v4976 = vld [vmem:[#allocation3 + $0x1b8] sm:$0xff]
    %v4977 = vld [vmem:[#allocation3 + $0x1c0] sm:$0xff]
    %v4978 = vld [vmem:[#allocation3 + $0x1c8] sm:$0xff]
    %v4979 = vld [vmem:[#allocation3 + $0x1d0] sm:$0xff]
    %v4980 = vld [vmem:[#allocation3 + $0x1d8] sm:$0xff]
    %v4981 = vld [vmem:[#allocation3 + $0x1e0] sm:$0xff]
    %v4982 = vld [vmem:[#allocation3 + $0x1e8] sm:$0xff]
    %v4983 = vld [vmem:[#allocation3 + $0x1f0] sm:$0xff]
    %v4984 = vld [vmem:[#allocation3 + $0x1f8] sm:$0xff]
    %v4985 = vld [vmem:[#allocation3 + $0x200] sm:$0xf]
    %v4986 = vld [vmem:[#allocation3 + $0x208] sm:$0xf]
    %v4987 = vld [vmem:[#allocation3 + $0x210] sm:$0xf]
    %v4988 = vld [vmem:[#allocation3 + $0x218] sm:$0xf]
    %v4989 = vld [vmem:[%s6] sm:$0xff]
    %v4990 = vld [vmem:[%s6 + $0x8] sm:$0xff]
    %v4991 = vld [vmem:[%s6 + $0x10] sm:$0xff]
    %v4992 = vld [vmem:[%s6 + $0x18] sm:$0xff]
    %v4993 = vld [vmem:[%s6 + $0x20] sm:$0xff]
    %v4994 = vld [vmem:[%s6 + $0x28] sm:$0xff]
    %v4995 = vld [vmem:[%s6 + $0x30] sm:$0xff]
    %v4996 = vld [vmem:[%s6 + $0x38] sm:$0xff]
    %v4997 = vld [vmem:[%s6 + $0x40] sm:$0xff]
    %v4998 = vld [vmem:[%s6 + $0x48] sm:$0xff]
    %v4999 = vld [vmem:[%s6 + $0x50] sm:$0xff]
    %v5000 = vld [vmem:[%s6 + $0x58] sm:$0xff]
    %v5001 = vld [vmem:[%s6 + $0x60] sm:$0xf]
    %5003 = vset.pattern.permute.xlu0 0
    %5004 = vperm.xlu0 %5003, %v4989
    %v5005 = vpop.permute.xlu0 %5004
    %5008 = vset.pattern.permute.xlu0 0
    %5009 = vperm.xlu0 %5008, %v4990
    %v5010 = vpop.permute.xlu0 %5009
    %5013 = vset.pattern.permute.xlu0 0
    %5014 = vperm.xlu0 %5013, %v4991
    %v5015 = vpop.permute.xlu0 %5014
    %5018 = vset.pattern.permute.xlu0 0
    %5019 = vperm.xlu0 %5018, %v4992
    %v5020 = vpop.permute.xlu0 %5019
    %5023 = vset.pattern.permute.xlu0 0
    %5024 = vperm.xlu0 %5023, %v4993
    %v5025 = vpop.permute.xlu0 %5024
    %5028 = vset.pattern.permute.xlu0 0
    %5029 = vperm.xlu0 %5028, %v4994
    %v5030 = vpop.permute.xlu0 %5029
    %5033 = vset.pattern.permute.xlu0 0
    %5034 = vperm.xlu0 %5033, %v4995
    %v5035 = vpop.permute.xlu0 %5034
    %5038 = vset.pattern.permute.xlu0 0
    %5039 = vperm.xlu0 %5038, %v4996
    %v5040 = vpop.permute.xlu0 %5039
    %5043 = vset.pattern.permute.xlu0 0
    %5044 = vperm.xlu0 %5043, %v4997
    %v5045 = vpop.permute.xlu0 %5044
    %5048 = vset.pattern.permute.xlu0 0
    %5049 = vperm.xlu0 %5048, %v4998
    %v5050 = vpop.permute.xlu0 %5049
    %5053 = vset.pattern.permute.xlu0 0
    %5054 = vperm.xlu0 %5053, %v4999
    %v5055 = vpop.permute.xlu0 %5054
    %5058 = vset.pattern.permute.xlu0 0
    %5059 = vperm.xlu0 %5058, %v5000
    %v5060 = vpop.permute.xlu0 %5059
    %5063 = vset.pattern.permute.xlu0 0
    %5064 = vperm.xlu0 %5063, %v5001
    %v5065 = vpop.permute.xlu0 %5064
    %vm5067 = vcmask 31744
    %v5069 = vsel %vm5067, %v4896, 0
    %v5072 = vsel %vm5067, %v4898, 0
    %v5075 = vsel %vm5067, %v4900, 0
    %v5078 = vsel %vm5067, %v4902, 0
    %v5081 = vsel %vm5067, %v4904, 0
    %v5084 = vsel %vm5067, %v4906, 0
    %v5087 = vsel %vm5067, %v4908, 0
    %v5090 = vsel %vm5067, %v4910, 0
    %v5093 = vsel %vm5067, %v4912, 0
    %v5096 = vsel %vm5067, %v4914, 0
    %v5099 = vsel %vm5067, %v4916, 0
    %v5102 = vsel %vm5067, %v4918, 0
    %v5105 = vsel %vm5067, %v4920, 0
    %v5108 = vsel %vm4709, %v4985, 0
    %v5111 = vsel %vm4709, %v4986, 0
    %v5114 = vsel %vm4709, %v4987, 0
    %v5117 = vsel %vm4709, %v4988, 0
    %5119 = vmatprep.subr.mxu0 %v4982
    %5120 = vmatpush1.msra.mxu0 %v4981
    %5121 = vmatprep.subr.mxu0 %v4978
    %5122 = vmatpush1.msra.mxu0 %v4977
    %5123 = vmatprep.subr.mxu0 %v4974
    %5124 = vmatpush1.msra.mxu0 %v4973
    %5125 = vmatprep.subr.mxu0 %v4970
    %5126 = vmatpush1.msra.mxu0 %v4969
    %5127 = vmatprep.subr.mxu0 %v4966
    %5128 = vmatpush1.msra.mxu0 %v4965
    %5129 = vmatprep.subr.mxu0 %v4962
    %5130 = vmatpush1.msra.mxu0 %v4961
    %5131 = vmatprep.subr.mxu0 %v4958
    %5132 = vmatpush1.msra.mxu0 %v4957
    %5133 = vmatprep.subr.mxu0 %v4954
    %5134 = vmatpush1.msra.mxu0 %v4953
    %5135 = vmatprep.subr.mxu0 %v4950
    %5136 = vmatpush1.msra.mxu0 %v4949
    %5137 = vmatprep.subr.mxu0 %v4946
    %5138 = vmatpush1.msra.mxu0 %v4945
    %5139 = vmatprep.subr.mxu0 %v4942
    %5140 = vmatpush1.msra.mxu0 %v4941
    %5141 = vmatprep.subr.mxu0 %v4938
    %5142 = vmatpush1.msra.mxu0 %v4937
    %5143 = vmatprep.subr.mxu0 %v4934
    %5144 = vmatpush1.msra.mxu0 %v4933
    %5145 = vmatprep.subr.mxu0 %v4930
    %5146 = vmatpush1.msra.mxu0 %v4929
    %5147 = vmatprep.subr.mxu0 %v4926
    %5148 = vmatpush1.msra.mxu0 %v4925
    %5149 = vmatprep.subr.mxu0 %v4922
    %5150 = vmatpush1.msra.mxu0 %v4921
    %5151 = vmatprep.subr.mxu0 0.0
    %5152 = vmatpush2.msra.mxu0 0.0
    %5153 = vmatprep.subr.mxu0 0.0
    %5154 = vmatpush2.msra.mxu0 0.0
    %5155 = vmatprep.subr.mxu0 0.0
    %5156 = vmatpush2.msra.mxu0 0.0
    %5157 = vmatprep.subr.mxu0 0.0
    %5158 = vmatpush2.msra.mxu0 0.0
    %5159 = vmatprep.subr.mxu0 0.0
    %5160 = vmatpush2.msra.mxu0 0.0
    %5161 = vmatprep.subr.mxu0 0.0
    %5162 = vmatpush2.msra.mxu0 0.0
    %5163 = vmatprep.subr.mxu0 0.0
    %5164 = vmatpush2.msra.mxu0 0.0
    %5165 = vmatprep.subr.mxu0 0.0
    %5166 = vmatpush2.msra.mxu0 0.0
    %5167 = vmatprep.subr.mxu0 0.0
    %5168 = vmatpush2.msra.mxu0 0.0
    %5169 = vmatprep.subr.mxu0 0.0
    %5170 = vmatpush2.msra.mxu0 0.0
    %5171 = vmatprep.subr.mxu0 0.0
    %5172 = vmatpush2.msra.mxu0 0.0
    %5173 = vmatprep.subr.mxu0 0.0
    %5174 = vmatpush2.msra.mxu0 0.0
    %5175 = vmatprep.subr.mxu0 0.0
    %5176 = vmatpush2.msra.mxu0 0.0
    %5177 = vmatprep.subr.mxu0 0.0
    %5178 = vmatpush2.msra.mxu0 0.0
    %5179 = vmatprep.subr.mxu0 0.0
    %5180 = vmatpush2.msra.mxu0 0.0
    %5181 = vmatprep.subr.mxu0 %v5111
    %5182 = vmatpush2.msra.mxu0 %v5108
    %5183 = vmatprep.mubr.f32.mxu0 %v5069
    %5184 = vmatmul.mubr.f32.gmra.mxu0 %v4895
    %v5185 = vpop.f32.mrf.mxu0
    %v5186 = vadd.f32 %v5005, %v5185
    %v5187 = vpop.f32.mrf.mxu0
    %v5188 = vadd.f32 %v5005, %v5187
    %5189 = vmatprep.mubr.f32.mxu0 %v5072
    %5190 = vmatmul.mubr.f32.gmra.mxu0 %v4897
    %v5191 = vpop.f32.mrf.mxu0
    %v5192 = vadd.f32 %v5010, %v5191
    %v5193 = vpop.f32.mrf.mxu0
    %v5194 = vadd.f32 %v5010, %v5193
    %5195 = vmatprep.mubr.f32.mxu0 %v5075
    %5196 = vmatmul.mubr.f32.gmra.mxu0 %v4899
    %v5197 = vpop.f32.mrf.mxu0
    %v5198 = vadd.f32 %v5015, %v5197
    %v5199 = vpop.f32.mrf.mxu0
    %v5200 = vadd.f32 %v5015, %v5199
    %5201 = vmatprep.mubr.f32.mxu0 %v5078
    %5202 = vmatmul.mubr.f32.gmra.mxu0 %v4901
    %v5203 = vpop.f32.mrf.mxu0
    %v5204 = vadd.f32 %v5020, %v5203
    %v5205 = vpop.f32.mrf.mxu0
    %v5206 = vadd.f32 %v5020, %v5205
    %5207 = vmatprep.mubr.f32.mxu0 %v5081
    %5208 = vmatmul.mubr.f32.gmra.mxu0 %v4903
    %v5209 = vpop.f32.mrf.mxu0
    %v5210 = vadd.f32 %v5025, %v5209
    %v5211 = vpop.f32.mrf.mxu0
    %v5212 = vadd.f32 %v5025, %v5211
    %5213 = vmatprep.mubr.f32.mxu0 %v5084
    %5214 = vmatmul.mubr.f32.gmra.mxu0 %v4905
    %v5215 = vpop.f32.mrf.mxu0
    %v5216 = vadd.f32 %v5030, %v5215
    %v5217 = vpop.f32.mrf.mxu0
    %v5218 = vadd.f32 %v5030, %v5217
    %5219 = vmatprep.mubr.f32.mxu0 %v5087
    %5220 = vmatmul.mubr.f32.gmra.mxu0 %v4907
    %v5221 = vpop.f32.mrf.mxu0
    %v5222 = vadd.f32 %v5035, %v5221
    %v5223 = vpop.f32.mrf.mxu0
    %v5224 = vadd.f32 %v5035, %v5223
    %5225 = vmatprep.mubr.f32.mxu0 %v5090
    %5226 = vmatmul.mubr.f32.gmra.mxu0 %v4909
    %v5227 = vpop.f32.mrf.mxu0
    %v5228 = vadd.f32 %v5040, %v5227
    %v5229 = vpop.f32.mrf.mxu0
    %v5230 = vadd.f32 %v5040, %v5229
    %5231 = vmatprep.mubr.f32.mxu0 %v5093
    %5232 = vmatmul.mubr.f32.gmra.mxu0 %v4911
    %v5233 = vpop.f32.mrf.mxu0
    %v5234 = vadd.f32 %v5045, %v5233
    %v5235 = vpop.f32.mrf.mxu0
    %v5236 = vadd.f32 %v5045, %v5235
    %5237 = vmatprep.mubr.f32.mxu0 %v5096
    %5238 = vmatmul.mubr.f32.gmra.mxu0 %v4913
    %v5239 = vpop.f32.mrf.mxu0
    %v5240 = vadd.f32 %v5050, %v5239
    %v5241 = vpop.f32.mrf.mxu0
    %v5242 = vadd.f32 %v5050, %v5241
    %5243 = vmatprep.mubr.f32.mxu0 %v5099
    %5244 = vmatmul.mubr.f32.gmra.mxu0 %v4915
    %v5245 = vpop.f32.mrf.mxu0
    %v5246 = vadd.f32 %v5055, %v5245
    %v5247 = vpop.f32.mrf.mxu0
    %v5248 = vadd.f32 %v5055, %v5247
    %5249 = vmatprep.mubr.f32.mxu0 %v5102
    %5250 = vmatmul.mubr.f32.gmra.mxu0 %v4917
    %v5251 = vpop.f32.mrf.mxu0
    %v5252 = vadd.f32 %v5060, %v5251
    %v5253 = vpop.f32.mrf.mxu0
    %v5254 = vadd.f32 %v5060, %v5253
    %5255 = vmatprep.mubr.f32.mxu0 %v5105
    %5256 = vmatmul.mubr.f32.gmra.mxu0 %v4919
    %v5257 = vpop.f32.mrf.mxu0
    %v5258 = vadd.f32 %v5065, %v5257
    %v5259 = vpop.f32.mrf.mxu0
    %v5260 = vadd.f32 %v5065, %v5259
    %5261 = vdwg.mxu0
    %5262 = vmatprep.subr.mxu0 %v4984
    %5263 = vmatpush1.msra.mxu0 %v4983
    %5264 = vmatprep.subr.mxu0 %v4980
    %5265 = vmatpush1.msra.mxu0 %v4979
    %5266 = vmatprep.subr.mxu0 %v4976
    %5267 = vmatpush1.msra.mxu0 %v4975
    %5268 = vmatprep.subr.mxu0 %v4972
    %5269 = vmatpush1.msra.mxu0 %v4971
    %5270 = vmatprep.subr.mxu0 %v4968
    %5271 = vmatpush1.msra.mxu0 %v4967
    %5272 = vmatprep.subr.mxu0 %v4964
    %5273 = vmatpush1.msra.mxu0 %v4963
    %5274 = vmatprep.subr.mxu0 %v4960
    %5275 = vmatpush1.msra.mxu0 %v4959
    %5276 = vmatprep.subr.mxu0 %v4956
    %5277 = vmatpush1.msra.mxu0 %v4955
    %5278 = vmatprep.subr.mxu0 %v4952
    %5279 = vmatpush1.msra.mxu0 %v4951
    %5280 = vmatprep.subr.mxu0 %v4948
    %5281 = vmatpush1.msra.mxu0 %v4947
    %5282 = vmatprep.subr.mxu0 %v4944
    %5283 = vmatpush1.msra.mxu0 %v4943
    %5284 = vmatprep.subr.mxu0 %v4940
    %5285 = vmatpush1.msra.mxu0 %v4939
    %5286 = vmatprep.subr.mxu0 %v4936
    %5287 = vmatpush1.msra.mxu0 %v4935
    %5288 = vmatprep.subr.mxu0 %v4932
    %5289 = vmatpush1.msra.mxu0 %v4931
    %5290 = vmatprep.subr.mxu0 %v4928
    %5291 = vmatpush1.msra.mxu0 %v4927
    %5292 = vmatprep.subr.mxu0 %v4924
    %5293 = vmatpush1.msra.mxu0 %v4923
    %5294 = vmatprep.subr.mxu0 0.0
    %5295 = vmatpush2.msra.mxu0 0.0
    %5296 = vmatprep.subr.mxu0 0.0
    %5297 = vmatpush2.msra.mxu0 0.0
    %5298 = vmatprep.subr.mxu0 0.0
    %5299 = vmatpush2.msra.mxu0 0.0
    %5300 = vmatprep.subr.mxu0 0.0
    %5301 = vmatpush2.msra.mxu0 0.0
    %5302 = vmatprep.subr.mxu0 0.0
    %5303 = vmatpush2.msra.mxu0 0.0
    %5304 = vmatprep.subr.mxu0 0.0
    %5305 = vmatpush2.msra.mxu0 0.0
    %5306 = vmatprep.subr.mxu0 0.0
    %5307 = vmatpush2.msra.mxu0 0.0
    %5308 = vmatprep.subr.mxu0 0.0
    %5309 = vmatpush2.msra.mxu0 0.0
    %5310 = vmatprep.subr.mxu0 0.0
    %5311 = vmatpush2.msra.mxu0 0.0
    %5312 = vmatprep.subr.mxu0 0.0
    %5313 = vmatpush2.msra.mxu0 0.0
    %5314 = vmatprep.subr.mxu0 0.0
    %5315 = vmatpush2.msra.mxu0 0.0
    %5316 = vmatprep.subr.mxu0 0.0
    %5317 = vmatpush2.msra.mxu0 0.0
    %5318 = vmatprep.subr.mxu0 0.0
    %5319 = vmatpush2.msra.mxu0 0.0
    %5320 = vmatprep.subr.mxu0 0.0
    %5321 = vmatpush2.msra.mxu0 0.0
    %5322 = vmatprep.subr.mxu0 0.0
    %5323 = vmatpush2.msra.mxu0 0.0
    %5324 = vmatprep.subr.mxu0 %v5117
    %5325 = vmatpush2.msra.mxu0 %v5114
    %5326 = vmatprep.mubr.f32.mxu0 %v5069
    %5327 = vmatmul.mubr.f32.gmra.mxu0 %v4895
    %v5328 = vpop.f32.mrf.mxu0
    %v5329 = vadd.f32 %v5005, %v5328
    %v5330 = vpop.f32.mrf.mxu0
    %v5331 = vadd.f32 %v5005, %v5330
    %5332 = vmatprep.mubr.f32.mxu0 %v5072
    %5333 = vmatmul.mubr.f32.gmra.mxu0 %v4897
    %v5334 = vpop.f32.mrf.mxu0
    %v5335 = vadd.f32 %v5010, %v5334
    %v5336 = vpop.f32.mrf.mxu0
    %v5337 = vadd.f32 %v5010, %v5336
    %5338 = vmatprep.mubr.f32.mxu0 %v5075
    %5339 = vmatmul.mubr.f32.gmra.mxu0 %v4899
    %v5340 = vpop.f32.mrf.mxu0
    %v5341 = vadd.f32 %v5015, %v5340
    %v5342 = vpop.f32.mrf.mxu0
    %v5343 = vadd.f32 %v5015, %v5342
    %5344 = vmatprep.mubr.f32.mxu0 %v5078
    %5345 = vmatmul.mubr.f32.gmra.mxu0 %v4901
    %v5346 = vpop.f32.mrf.mxu0
    %v5347 = vadd.f32 %v5020, %v5346
    %v5348 = vpop.f32.mrf.mxu0
    %v5349 = vadd.f32 %v5020, %v5348
    %5350 = vmatprep.mubr.f32.mxu0 %v5081
    %5351 = vmatmul.mubr.f32.gmra.mxu0 %v4903
    %v5352 = vpop.f32.mrf.mxu0
    %v5353 = vadd.f32 %v5025, %v5352
    %v5354 = vpop.f32.mrf.mxu0
    %v5355 = vadd.f32 %v5025, %v5354
    %5356 = vmatprep.mubr.f32.mxu0 %v5084
    %5357 = vmatmul.mubr.f32.gmra.mxu0 %v4905
    %v5358 = vpop.f32.mrf.mxu0
    %v5359 = vadd.f32 %v5030, %v5358
    %v5360 = vpop.f32.mrf.mxu0
    %v5361 = vadd.f32 %v5030, %v5360
    %5362 = vmatprep.mubr.f32.mxu0 %v5087
    %5363 = vmatmul.mubr.f32.gmra.mxu0 %v4907
    %v5364 = vpop.f32.mrf.mxu0
    %v5365 = vadd.f32 %v5035, %v5364
    %v5366 = vpop.f32.mrf.mxu0
    %v5367 = vadd.f32 %v5035, %v5366
    %5368 = vmatprep.mubr.f32.mxu0 %v5090
    %5369 = vmatmul.mubr.f32.gmra.mxu0 %v4909
    %v5370 = vpop.f32.mrf.mxu0
    %v5371 = vadd.f32 %v5040, %v5370
    %v5372 = vpop.f32.mrf.mxu0
    %v5373 = vadd.f32 %v5040, %v5372
    %5374 = vmatprep.mubr.f32.mxu0 %v5093
    %5375 = vmatmul.mubr.f32.gmra.mxu0 %v4911
    %v5376 = vpop.f32.mrf.mxu0
    %v5377 = vadd.f32 %v5045, %v5376
    %v5378 = vpop.f32.mrf.mxu0
    %v5379 = vadd.f32 %v5045, %v5378
    %5380 = vmatprep.mubr.f32.mxu0 %v5096
    %5381 = vmatmul.mubr.f32.gmra.mxu0 %v4913
    %v5382 = vpop.f32.mrf.mxu0
    %v5383 = vadd.f32 %v5050, %v5382
    %v5384 = vpop.f32.mrf.mxu0
    %v5385 = vadd.f32 %v5050, %v5384
    %5386 = vmatprep.mubr.f32.mxu0 %v5099
    %5387 = vmatmul.mubr.f32.gmra.mxu0 %v4915
    %v5388 = vpop.f32.mrf.mxu0
    %v5389 = vadd.f32 %v5055, %v5388
    %v5390 = vpop.f32.mrf.mxu0
    %v5391 = vadd.f32 %v5055, %v5390
    %5392 = vmatprep.mubr.f32.mxu0 %v5102
    %5393 = vmatmul.mubr.f32.gmra.mxu0 %v4917
    %v5394 = vpop.f32.mrf.mxu0
    %v5395 = vadd.f32 %v5060, %v5394
    %v5396 = vpop.f32.mrf.mxu0
    %v5397 = vadd.f32 %v5060, %v5396
    %5398 = vmatprep.mubr.f32.mxu0 %v5105
    %5399 = vmatmul.mubr.f32.gmra.mxu0 %v4919
    %v5400 = vpop.f32.mrf.mxu0
    %v5401 = vadd.f32 %v5065, %v5400
    %v5402 = vpop.f32.mrf.mxu0
    %v5403 = vadd.f32 %v5065, %v5402
    %5404 = vdwg.mxu0
    %v5405 = vmax.f32 %v5186, 0.0
    %v5406 = vmax.f32 %v5188, 0.0
    %v5407 = vmax.f32 %v5329, 0.0
    %v5408 = vmax.f32 %v5331, 0.0
    %v5409 = vmax.f32 %v5192, 0.0
    %v5410 = vmax.f32 %v5194, 0.0
    %v5411 = vmax.f32 %v5335, 0.0
    %v5412 = vmax.f32 %v5337, 0.0
    %v5413 = vmax.f32 %v5198, 0.0
    %v5414 = vmax.f32 %v5200, 0.0
    %v5415 = vmax.f32 %v5341, 0.0
    %v5416 = vmax.f32 %v5343, 0.0
    %v5417 = vmax.f32 %v5204, 0.0
    %v5418 = vmax.f32 %v5206, 0.0
    %v5419 = vmax.f32 %v5347, 0.0
    %v5420 = vmax.f32 %v5349, 0.0
    %v5421 = vmax.f32 %v5210, 0.0
    %v5422 = vmax.f32 %v5212, 0.0
    %v5423 = vmax.f32 %v5353, 0.0
    %v5424 = vmax.f32 %v5355, 0.0
    %v5425 = vmax.f32 %v5216, 0.0
    %v5426 = vmax.f32 %v5218, 0.0
    %v5427 = vmax.f32 %v5359, 0.0
    %v5428 = vmax.f32 %v5361, 0.0
    %v5429 = vmax.f32 %v5222, 0.0
    %v5430 = vmax.f32 %v5224, 0.0
    %v5431 = vmax.f32 %v5365, 0.0
    %v5432 = vmax.f32 %v5367, 0.0
    %v5433 = vmax.f32 %v5228, 0.0
    %v5434 = vmax.f32 %v5230, 0.0
    %v5435 = vmax.f32 %v5371, 0.0
    %v5436 = vmax.f32 %v5373, 0.0
    %v5437 = vmax.f32 %v5234, 0.0
    %v5438 = vmax.f32 %v5236, 0.0
    %v5439 = vmax.f32 %v5377, 0.0
    %v5440 = vmax.f32 %v5379, 0.0
    %v5441 = vmax.f32 %v5240, 0.0
    %v5442 = vmax.f32 %v5242, 0.0
    %v5443 = vmax.f32 %v5383, 0.0
    %v5444 = vmax.f32 %v5385, 0.0
    %v5445 = vmax.f32 %v5246, 0.0
    %v5446 = vmax.f32 %v5248, 0.0
    %v5447 = vmax.f32 %v5389, 0.0
    %v5448 = vmax.f32 %v5391, 0.0
    %v5449 = vmax.f32 %v5252, 0.0
    %v5450 = vmax.f32 %v5254, 0.0
    %v5451 = vmax.f32 %v5395, 0.0
    %v5452 = vmax.f32 %v5397, 0.0
    %v5453 = vmax.f32 %v5258, 0.0
    %v5454 = vmax.f32 %v5260, 0.0
    %v5455 = vmax.f32 %v5401, 0.0
    %v5456 = vmax.f32 %v5403, 0.0
    %v5457 = vld [vmem:[%s7] sm:$0xff]
    %v5458 = vld [vmem:[%s7 + $0x8] sm:$0xff]
    %v5459 = vld [vmem:[%s7 + $0x10] sm:$0xff]
    %v5460 = vld [vmem:[%s7 + $0x18] sm:$0xff]
    %v5461 = vld [vmem:[%s7 + $0x20] sm:$0xff]
    %v5462 = vld [vmem:[%s7 + $0x28] sm:$0xff]
    %v5463 = vld [vmem:[%s7 + $0x30] sm:$0xff]
    %v5464 = vld [vmem:[%s7 + $0x38] sm:$0xff]
    %v5465 = vld [vmem:[%s7 + $0x40] sm:$0xff]
    %v5466 = vld [vmem:[%s7 + $0x48] sm:$0xff]
    %v5467 = vld [vmem:[%s7 + $0x50] sm:$0xff]
    %v5468 = vld [vmem:[%s7 + $0x58] sm:$0xff]
    %v5469 = vld [vmem:[%s7 + $0x60] sm:$0xf]
    %5471 = vset.pattern.permute.xlu0 0
    %5472 = vperm.xlu0 %5471, %v5457
    %v5473 = vpop.permute.xlu0 %5472
    %5476 = vset.pattern.permute.xlu0 0
    %5477 = vperm.xlu0 %5476, %v5458
    %v5478 = vpop.permute.xlu0 %5477
    %5481 = vset.pattern.permute.xlu0 0
    %5482 = vperm.xlu0 %5481, %v5459
    %v5483 = vpop.permute.xlu0 %5482
    %5486 = vset.pattern.permute.xlu0 0
    %5487 = vperm.xlu0 %5486, %v5460
    %v5488 = vpop.permute.xlu0 %5487
    %5491 = vset.pattern.permute.xlu0 0
    %5492 = vperm.xlu0 %5491, %v5461
    %v5493 = vpop.permute.xlu0 %5492
    %5496 = vset.pattern.permute.xlu0 0
    %5497 = vperm.xlu0 %5496, %v5462
    %v5498 = vpop.permute.xlu0 %5497
    %5501 = vset.pattern.permute.xlu0 0
    %5502 = vperm.xlu0 %5501, %v5463
    %v5503 = vpop.permute.xlu0 %5502
    %5506 = vset.pattern.permute.xlu0 0
    %5507 = vperm.xlu0 %5506, %v5464
    %v5508 = vpop.permute.xlu0 %5507
    %5511 = vset.pattern.permute.xlu0 0
    %5512 = vperm.xlu0 %5511, %v5465
    %v5513 = vpop.permute.xlu0 %5512
    %5516 = vset.pattern.permute.xlu0 0
    %5517 = vperm.xlu0 %5516, %v5466
    %v5518 = vpop.permute.xlu0 %5517
    %5521 = vset.pattern.permute.xlu0 0
    %5522 = vperm.xlu0 %5521, %v5467
    %v5523 = vpop.permute.xlu0 %5522
    %5526 = vset.pattern.permute.xlu0 0
    %5527 = vperm.xlu0 %5526, %v5468
    %v5528 = vpop.permute.xlu0 %5527
    %5531 = vset.pattern.permute.xlu0 0
    %5532 = vperm.xlu0 %5531, %v5469
    %v5533 = vpop.permute.xlu0 %5532
    %v5535 = vmul.f32 %v5473, %v5405
    %v5536 = vmul.f32 %v5473, %v5406
    %v5537 = vmul.f32 %v5473, %v5407
    %v5538 = vmul.f32 %v5473, %v5408
    %v5539 = vmul.f32 %v5478, %v5409
    %v5540 = vmul.f32 %v5478, %v5410
    %v5541 = vmul.f32 %v5478, %v5411
    %v5542 = vmul.f32 %v5478, %v5412
    %v5543 = vmul.f32 %v5483, %v5413
    %v5544 = vmul.f32 %v5483, %v5414
    %v5545 = vmul.f32 %v5483, %v5415
    %v5546 = vmul.f32 %v5483, %v5416
    %v5547 = vmul.f32 %v5488, %v5417
    %v5548 = vmul.f32 %v5488, %v5418
    %v5549 = vmul.f32 %v5488, %v5419
    %v5550 = vmul.f32 %v5488, %v5420
    %v5551 = vmul.f32 %v5493, %v5421
    %v5552 = vmul.f32 %v5493, %v5422
    %v5553 = vmul.f32 %v5493, %v5423
    %v5554 = vmul.f32 %v5493, %v5424
    %v5555 = vmul.f32 %v5498, %v5425
    %v5556 = vmul.f32 %v5498, %v5426
    %v5557 = vmul.f32 %v5498, %v5427
    %v5558 = vmul.f32 %v5498, %v5428
    %v5559 = vmul.f32 %v5503, %v5429
    %v5560 = vmul.f32 %v5503, %v5430
    %v5561 = vmul.f32 %v5503, %v5431
    %v5562 = vmul.f32 %v5503, %v5432
    %v5563 = vmul.f32 %v5508, %v5433
    %v5564 = vmul.f32 %v5508, %v5434
    %v5565 = vmul.f32 %v5508, %v5435
    %v5566 = vmul.f32 %v5508, %v5436
    %v5567 = vmul.f32 %v5513, %v5437
    %v5568 = vmul.f32 %v5513, %v5438
    %v5569 = vmul.f32 %v5513, %v5439
    %v5570 = vmul.f32 %v5513, %v5440
    %v5571 = vmul.f32 %v5518, %v5441
    %v5572 = vmul.f32 %v5518, %v5442
    %v5573 = vmul.f32 %v5518, %v5443
    %v5574 = vmul.f32 %v5518, %v5444
    %v5575 = vmul.f32 %v5523, %v5445
    %v5576 = vmul.f32 %v5523, %v5446
    %v5577 = vmul.f32 %v5523, %v5447
    %v5578 = vmul.f32 %v5523, %v5448
    %v5579 = vmul.f32 %v5528, %v5449
    %v5580 = vmul.f32 %v5528, %v5450
    %v5581 = vmul.f32 %v5528, %v5451
    %v5582 = vmul.f32 %v5528, %v5452
    %v5583 = vmul.f32 %v5533, %v5453
    %v5584 = vmul.f32 %v5533, %v5454
    %v5585 = vmul.f32 %v5533, %v5455
    %v5586 = vmul.f32 %v5533, %v5456
    %v5587 = vadd.f32 %v5535, %v5539
    %v5588 = vadd.f32 %v5587, %v5543
    %v5589 = vadd.f32 %v5588, %v5547
    %v5590 = vadd.f32 %v5589, %v5551
    %v5591 = vadd.f32 %v5590, %v5555
    %v5592 = vadd.f32 %v5591, %v5559
    %v5593 = vadd.f32 %v5592, %v5563
    %v5594 = vadd.f32 %v5593, %v5567
    %v5595 = vadd.f32 %v5594, %v5571
    %v5596 = vadd.f32 %v5595, %v5575
    %v5597 = vadd.f32 %v5596, %v5579
    %v5598 = vsel %vm4709, %v5583, 0.0
    %v5599 = vadd.f32 %v5597, %v5598
    %v5600 = vrot.slane %v5599, 4
    %v5601 = vadd.f32 %v5599, %v5600
    %v5602 = vrot.slane %v5601, 2
    %v5603 = vadd.f32 %v5601, %v5602
    %v5604 = vrot.slane %v5603, 1
    %v5605 = vadd.f32 %v5603, %v5604
    %v5606 = vadd.f32 %v5536, %v5540
    %v5607 = vadd.f32 %v5606, %v5544
    %v5608 = vadd.f32 %v5607, %v5548
    %v5609 = vadd.f32 %v5608, %v5552
    %v5610 = vadd.f32 %v5609, %v5556
    %v5611 = vadd.f32 %v5610, %v5560
    %v5612 = vadd.f32 %v5611, %v5564
    %v5613 = vadd.f32 %v5612, %v5568
    %v5614 = vadd.f32 %v5613, %v5572
    %v5615 = vadd.f32 %v5614, %v5576
    %v5616 = vadd.f32 %v5615, %v5580
    %v5617 = vsel %vm4709, %v5584, 0.0
    %v5618 = vadd.f32 %v5616, %v5617
    %v5619 = vrot.slane %v5618, 4
    %v5620 = vadd.f32 %v5618, %v5619
    %v5621 = vrot.slane %v5620, 2
    %v5622 = vadd.f32 %v5620, %v5621
    %v5623 = vrot.slane %v5622, 1
    %v5624 = vadd.f32 %v5622, %v5623
    %v5625 = vadd.f32 %v5537, %v5541
    %v5626 = vadd.f32 %v5625, %v5545
    %v5627 = vadd.f32 %v5626, %v5549
    %v5628 = vadd.f32 %v5627, %v5553
    %v5629 = vadd.f32 %v5628, %v5557
    %v5630 = vadd.f32 %v5629, %v5561
    %v5631 = vadd.f32 %v5630, %v5565
    %v5632 = vadd.f32 %v5631, %v5569
    %v5633 = vadd.f32 %v5632, %v5573
    %v5634 = vadd.f32 %v5633, %v5577
    %v5635 = vadd.f32 %v5634, %v5581
    %v5636 = vsel %vm4709, %v5585, 0.0
    %v5637 = vadd.f32 %v5635, %v5636
    %v5638 = vrot.slane %v5637, 4
    %v5639 = vadd.f32 %v5637, %v5638
    %v5640 = vrot.slane %v5639, 2
    %v5641 = vadd.f32 %v5639, %v5640
    %v5642 = vrot.slane %v5641, 1
    %v5643 = vadd.f32 %v5641, %v5642
    %v5644 = vadd.f32 %v5538, %v5542
    %v5645 = vadd.f32 %v5644, %v5546
    %v5646 = vadd.f32 %v5645, %v5550
    %v5647 = vadd.f32 %v5646, %v5554
    %v5648 = vadd.f32 %v5647, %v5558
    %v5649 = vadd.f32 %v5648, %v5562
    %v5650 = vadd.f32 %v5649, %v5566
    %v5651 = vadd.f32 %v5650, %v5570
    %v5652 = vadd.f32 %v5651, %v5574
    %v5653 = vadd.f32 %v5652, %v5578
    %v5654 = vadd.f32 %v5653, %v5582
    %v5655 = vsel %vm4709, %v5586, 0.0
    %v5656 = vadd.f32 %v5654, %v5655
    %v5657 = vrot.slane %v5656, 4
    %v5658 = vadd.f32 %v5656, %v5657
    %v5659 = vrot.slane %v5658, 2
    %v5660 = vadd.f32 %v5658, %v5659
    %v5661 = vrot.slane %v5660, 1
    %v5662 = vadd.f32 %v5660, %v5661
    %v5663 = vld [vmem:[#allocation4] sm:$0x1]
    %5665 = vset.pattern.permute.xlu0 0
    %5666 = vperm.xlu0 %5665, %v5663
    %v5667 = vpop.permute.xlu0 %5666
    %v5669 = vlaneseq
    %v5670 = vshrl.u32 %v5669, 7
    %v5671 = vsub.s32 0, %v5670
    %v5672 = vrot.slane %v5667, %v5671
    %v5673 = vadd.f32 %v5605, %v5672
    %v5674 = vadd.f32 %v5624, %v5672
    %v5675 = vadd.f32 %v5643, %v5672
    %v5676 = vadd.f32 %v5662, %v5672
    %v5677 = vxor.u32 %v5673, 2147483648
    %v5678 = vxor.u32 %v5674, 2147483648
    %v5679 = vxor.u32 %v5675, 2147483648
    %v5680 = vxor.u32 %v5676, 2147483648
    %v5681 = vmul.f32 %v5677, 1.442695
    %v5682 = vpow.pop %v5681
    %v5683 = vmul.f32 %v5678, 1.442695
    %v5684 = vpow.pop %v5683
    %v5685 = vmul.f32 %v5679, 1.442695
    %v5686 = vpow.pop %v5685
    %v5687 = vmul.f32 %v5680, 1.442695
    %v5688 = vpow.pop %v5687
    %v5689 = vadd.f32 %v5682, 1.0
    %v5690 = vadd.f32 %v5684, 1.0
    %v5691 = vadd.f32 %v5686, 1.0
    %v5692 = vadd.f32 %v5688, 1.0
    %v5693 = vrcp.pop %v5689
    %v5694 = vmul.f32 1.0, %v5693
    %v5695 = vrcp.pop %v5690
    %v5696 = vmul.f32 1.0, %v5695
    %v5697 = vrcp.pop %v5691
    %v5698 = vmul.f32 1.0, %v5697
    %v5699 = vrcp.pop %v5692
    %v5700 = vmul.f32 1.0, %v5699
    %v5705 = vcombine.low %v5694, %v5696
    %v5706 = vcombine.low %v5698, %v5700
    %v5708 = vunpack.c.l.s4 1966171168
    %v5709 = vunpack.c.0.s8 %v5708
    %v5710 = vlaneseq
    %v5711 = vshrl.u32 %v5710, 7
    %v5712 = vsub.s32 %v5709, %v5711
    %v5713 = vrot.slane %v5705, %v5712
    %v5715 = vunpack.c.l.s4 1966171168
    %v5716 = vunpack.c.0.s8 %v5715
    %v5717 = vlaneseq
    %v5718 = vshrl.u32 %v5717, 7
    %v5719 = vsub.s32 %v5716, %v5718
    %v5720 = vrot.slane %v5706, %v5719
    %v5721 = vcombine.low %v5713, %v5720
    %v5723 = vunpack.c.l.s4 1966171168
    %v5724 = vunpack.c.0.s8 %v5723
    %v5725 = vlaneseq
    %v5726 = vshrl.u32 %v5725, 7
    %v5727 = vsub.s32 %v5724, %v5726
    %v5728 = vrot.slane %v5721, %v5727
    %5730 = vst.msk [vmem:[#allocation5] sm:$0xf] %vm778, %v5728
    // Predicated region
    $region38: #{tpu_custom_call.1} parent=1 // pred_check
      _
    $region39: #{tpu_custom_call.1} parent=1 // pred_check_branch
      %5732 = sbr.rel (0) target = $region41
    $region40: #{tpu_custom_call.1} parent=1 // pred_region
      %s5734 = ssub.s32 64, 64
      %5735 = vsyncadd [#allocation6], %s5734
      %s5737 = sshll.u32 [#allocation5], 4
      %s5738 = int_to_ptr.vmem [resolvable:$true] %s5737
      %5740 = dma.vmem_to_hbm [thread:$0]  %s5738, 64, %s9, [#allocation6]
    $region41: #{tpu_custom_call.1} parent=1 // pred_fallthru
      _
    // Predicated region
    $region42: #{tpu_custom_call.1} parent=1 // pred_check
      _
    $region43: #{tpu_custom_call.1} parent=1 // pred_check_branch
      %5742 = sbr.rel (0) target = $region45
    $region44: #{tpu_custom_call.1} parent=1 // pred_region
      %5743 = dma.done [#allocation6], 64
    $region45: #{tpu_custom_call.1} parent=1 // pred_fallthru
      _
    %5744 = vsyncpa [#allocation6], 1

</llo_original>
